<compile_context>
chip_gen: v7x
topology: tpu7x:2x2x1
jax: 0.10.0
libtpu: 0.0.40
codegen_flags: <defaults>
</compile_context>

<pallas_src>
import functools
import math

import jax
import jax.numpy as jnp
import numpy as np
from jax.experimental import pallas as pl
from jax.experimental.pallas import tpu as pltpu

LN_EPS = 1e-5  # PyTorch nn.LayerNorm default eps

# 48 MiB scoped VMEM: within v7x's 64 MiB physical with headroom, and enough
# for ~512-row activation blocks at these E/F on v5e/v6e.
_COMPILER_PARAMS = pltpu.CompilerParams(
    dimension_semantics=("parallel",),
    vmem_limit_bytes=48 * 1024 * 1024,
)


def _layernorm(t):
    # LayerNorm over last dim, no affine (elementwise_affine=False), f32 math.
    mu = jnp.mean(t, axis=-1, keepdims=True)
    var = jnp.mean(jnp.square(t - mu), axis=-1, keepdims=True)
    return (t - mu) * jax.lax.rsqrt(var + LN_EPS)


def _gelu(t):
    # exact GELU (PyTorch nn.GELU default, erf-based), f32 math.
    return 0.5 * t * (1.0 + jax.lax.erf(t * (1.0 / math.sqrt(2.0))))


def _largest_divisor_leq(n, cap):
    cap = max(1, min(n, cap))
    for d in range(cap, 0, -1):
        if n % d == 0:
            return d
    return 1


def _pick_block_batch(B, S, *, rows_cap=512):
    """Batch block: as many rows as the cap allows, but keep >=2 grid steps
    when B >= 2 so both TensorCores get work on v7x (megacore)."""
    cap = max(1, rows_cap // S)
    if B >= 2:
        cap = min(cap, B // 2)
    # NOTE: for prime/odd B this can fall back to Bt=1 (correct, small blocks).
    return _largest_divisor_leq(B, max(1, cap))


# --------------------------------------------------------------------------- #
# Kernels
# --------------------------------------------------------------------------- #
def embed_kernel(x_ref, w_ref, b_ref, pos_ref, o_ref):
    """Token embedder: x @ W_emb + b_emb + pos_embedding."""
    Bt, T, D = x_ref.shape
    E = w_ref.shape[1]
    x = x_ref[...].astype(w_ref.dtype).reshape(Bt * T, D)
    y = jnp.dot(x, w_ref[...], preferred_element_type=jnp.float32)
    y = y + b_ref[0].astype(jnp.float32)
    y = y.reshape(Bt, T, E) + pos_ref[...].astype(jnp.float32)
    o_ref[...] = y.astype(o_ref.dtype)


def encoder_layer_kernel(x_ref, wqkv_ref, w1_ref, b1_ref, w2_ref, b2_ref,
                         w3_ref, b3_ref, o_ref, *, num_heads, scale,
                         approx_recip):
    """Fused classic encoder layer for a (Bt, S, E) activation block.

    LN1 -> fused QKV -> per-head attention -> +residual -> LN2 ->
    Linear/GELU/Linear/GELU/Linear -> +residual.  Everything stays in VMEM.
    """
    Bt, S, E = x_ref.shape
    H = num_heads
    dh = E // H
    cdt = wqkv_ref.dtype  # MXU operand dtype (bf16 on the perf path)

    x = x_ref[...].astype(jnp.float32)

    # ---- LayerNorm1 + fused QKV projection (one wide MXU matmul) ----------- #
    xn = _layernorm(x).reshape(Bt * S, E)
    qkv = jnp.dot(xn.astype(cdt), wqkv_ref[...],
                  preferred_element_type=jnp.float32)          # (Bt*S, 3E)
    qkv = qkv.reshape(Bt, S, 3 * E)
    q_all = qkv[:, :, 0:E].astype(cdt)
    k_all = qkv[:, :, E:2 * E].astype(cdt)
    v_all = qkv[:, :, 2 * E:3 * E].astype(cdt)

    # ---- per-head softmax attention (static lane slices, unrolled) --------- #
    ctx_heads = []
    for h in range(H):
        lo, hi = h * dh, (h + 1) * dh
        qh = q_all[:, :, lo:hi]
        kh = k_all[:, :, lo:hi]
        vh = v_all[:, :, lo:hi]
        # leading-batch contraction on the last axes -> no explicit K transpose
        s = jnp.einsum('bqd,bkd->bqk', qh, kh,
                       preferred_element_type=jnp.float32) * scale
        s = s - jnp.max(s, axis=-1, keepdims=True)             # stable softmax
        p = jnp.exp(s)
        denom = jnp.sum(p, axis=-1, keepdims=True)
        if approx_recip:
            p = p * pl.reciprocal(denom, approx=True)          # EUP slot
        else:
            p = p / denom                                      # exact (f32 path)
        ctx_heads.append(
            jnp.einsum('bqk,bkd->bqd', p.astype(cdt), vh,
                       preferred_element_type=jnp.float32))    # (Bt, S, dh)
    ctx = jnp.concatenate(ctx_heads, axis=-1)                  # (Bt, S, E) f32

    # ---- residual1 + LayerNorm2 + merger FFN + residual2 ------------------- #
    res = ctx + x
    n2 = _layernorm(res).reshape(Bt * S, E)
    b1 = b1_ref[0].astype(jnp.float32)
    b2 = b2_ref[0].astype(jnp.float32)
    b3 = b3_ref[0].astype(jnp.float32)
    h0 = _gelu(jnp.dot(n2.astype(cdt), w1_ref[...],
                       preferred_element_type=jnp.float32) + b1)
    h1 = _gelu(jnp.dot(h0.astype(cdt), w2_ref[...],
                       preferred_element_type=jnp.float32) + b2)
    y = jnp.dot(h1.astype(cdt), w3_ref[...],
                preferred_element_type=jnp.float32) + b3
    o_ref[...] = (y.reshape(Bt, S, E) + res).astype(o_ref.dtype)


# --------------------------------------------------------------------------- #
# Wrappers (pallas_call plumbing)
# --------------------------------------------------------------------------- #
def embed(x, emb_w, emb_b, pos, *, compute_dtype, act_dtype):
    B, T, D = x.shape
    E = emb_w.shape[1]
    Bt = _pick_block_batch(B, T)
    return pl.pallas_call(
        embed_kernel,
        out_shape=jax.ShapeDtypeStruct((B, T, E), act_dtype),
        grid_spec=pltpu.PrefetchScalarGridSpec(
            num_scalar_prefetch=0,
            grid=(B // Bt,),
            in_specs=[
                pl.BlockSpec((Bt, T, D), lambda i: (i, 0, 0)),
                pl.BlockSpec((D, E), lambda i: (0, 0)),
                pl.BlockSpec((1, E), lambda i: (0, 0)),
                pl.BlockSpec((1, T, E), lambda i: (0, 0, 0)),
            ],
            out_specs=pl.BlockSpec((Bt, T, E), lambda i: (i, 0, 0)),
        ),
        compiler_params=_COMPILER_PARAMS,
    )(x, emb_w.astype(compute_dtype), emb_b, pos)


def encoder_layer(x, lp, num_heads, *, compute_dtype, approx_recip):
    B, S, E = x.shape
    H = num_heads
    assert E % H == 0, "Embed_Dim must be divisible by head_dimension"
    dh = E // H
    F = lp["w2"].shape[1]
    scale = 1.0 / math.sqrt(dh)

    wqkv = lp["wqkv"].astype(compute_dtype)
    w1 = lp["w1"].astype(compute_dtype)
    w2 = lp["w2"].astype(compute_dtype)
    w3 = lp["w3"].astype(compute_dtype)
    b1, b2, b3 = lp["b1"], lp["b2"], lp["b3"]  # biases stay f32

    Bt = _pick_block_batch(B, S)

    kernel = functools.partial(encoder_layer_kernel, num_heads=H, scale=scale,
                               approx_recip=approx_recip)
    return pl.pallas_call(
        kernel,
        out_shape=jax.ShapeDtypeStruct((B, S, E), x.dtype),
        grid_spec=pltpu.PrefetchScalarGridSpec(
            num_scalar_prefetch=0,
            grid=(B // Bt,),
            in_specs=[
                pl.BlockSpec((Bt, S, E), lambda i: (i, 0, 0)),   # activations
                pl.BlockSpec((E, 3 * E), lambda i: (0, 0)),      # fused Wqkv
                pl.BlockSpec((E, E), lambda i: (0, 0)),          # merger w1
                pl.BlockSpec((1, E), lambda i: (0, 0)),
                pl.BlockSpec((E, F), lambda i: (0, 0)),          # merger w2
                pl.BlockSpec((1, F), lambda i: (0, 0)),
                pl.BlockSpec((F, E), lambda i: (0, 0)),          # merger w3
                pl.BlockSpec((1, E), lambda i: (0, 0)),
            ],
            out_specs=pl.BlockSpec((Bt, S, E), lambda i: (i, 0, 0)),
        ),
        compiler_params=_COMPILER_PARAMS,
    )(x, wqkv, w1, b1, w2, b2, w3, b3)


def transformer_forward(x, params, *, num_heads, compute_dtype=jnp.bfloat16):
    # Residual stream kept in compute_dtype in HBM (bf16 on the perf path);
    # all in-kernel math / accumulation is f32.
    act_dtype = compute_dtype
    approx_recip = (compute_dtype != jnp.float32)
    h = embed(x, params["emb_w"], params["emb_b"], params["pos"],
              compute_dtype=compute_dtype, act_dtype=act_dtype)
    for lp in params["layers"]:
        h = encoder_layer(h, lp, num_heads, compute_dtype=compute_dtype,
                          approx_recip=approx_recip)
    # classifying_type='mean' ('max'/'sum' would be analogous reductions).
    return jnp.mean(h.astype(jnp.float32), axis=1)


# --------------------------------------------------------------------------- #
# Pure-JAX f32 reference (verification)
# --------------------------------------------------------------------------- #
def _encoder_ref(x, lp, H):
    B, S, E = x.shape
    dh = E // H
    xn = _layernorm(x)
    qkv = xn @ lp["wqkv"]
    q, k, v = jnp.split(qkv, 3, axis=-1)
    heads = lambda t: t.reshape(B, S, H, dh).transpose(0, 2, 1, 3)
    q, k, v = heads(q), heads(k), heads(v)
    s = jnp.einsum('bhqd,bhkd->bhqk', q, k) / math.sqrt(dh)
    p = jax.nn.softmax(s, axis=-1)
    ctx = jnp.einsum('bhqk,bhkd->bhqd', p, v).transpose(0, 2, 1, 3).reshape(B, S, E)
    res = ctx + x
    n2 = _layernorm(res)
    h0 = _gelu(n2 @ lp["w1"] + lp["b1"][0])
    h1 = _gelu(h0 @ lp["w2"] + lp["b2"][0])
    return h1 @ lp["w3"] + lp["b3"][0] + res


def transformer_forward_ref(x, params, *, num_heads):
    h = x @ params["emb_w"] + params["emb_b"][0]
    h = h + params["pos"]
    for lp in params["layers"]:
        h = _encoder_ref(h, lp, num_heads)
    return jnp.mean(h, axis=1)


# --------------------------------------------------------------------------- #
# Params + demo
# --------------------------------------------------------------------------- #
def init_params(key, *, token_dim, image_dim, embed_dim, ff_dim, n_layers,
                weight_scale=0.05):
    E, F = embed_dim, ff_dim
    keys = jax.random.split(key, 3 + 7 * n_layers + 1)
    ki = iter(keys)
    w = lambda shape: weight_scale * jax.random.normal(next(ki), shape, jnp.float32)
    params = {
        "emb_w": w((image_dim, E)),
        "emb_b": w((1, E)),
        "pos": jax.random.uniform(next(ki), (1, token_dim, E), jnp.float32, -0.1, 0.1),
        "layers": [],
    }
    for _ in range(n_layers):
        params["layers"].append({
            "wqkv": w((E, 3 * E)),     # fused [Wq | Wk | Wv], bias=False
            "w1": w((E, E)), "b1": w((1, E)),
            "w2": w((E, F)), "b2": w((1, F)),
            "w3": w((F, E)), "b3": w((1, E)),
        })
    return params, next(ki)


if __name__ == "__main__":
    B = 2          # batch
    T = 8          # Token_Dim (sequence length)
    D_IMG = 64     # Image_Dim (per-token input features)
    E = 128        # Embed_Dim (multiple of 128 -> lane-dense stores)
    H = 4          # head_dimension (number of heads), dh = 32
    F = 256        # ff_dim
    N_LAYERS = 2

    key = jax.random.PRNGKey(0)
    params, x_key = init_params(key, token_dim=T, image_dim=D_IMG, embed_dim=E,
                                ff_dim=F, n_layers=N_LAYERS)
    x = jax.random.normal(x_key, (B, T, D_IMG), jnp.float32)

    # f32-operand path: tight check of the kernel math (exact softmax divide).
    fwd_f32 = jax.jit(functools.partial(transformer_forward, num_heads=H,
                                        compute_dtype=jnp.float32))
    out_f32 = jax.block_until_ready(fwd_f32(x, params))

    # bf16 MXU-operand / bf16 residual-stream path (perf configuration).
    fwd_bf16 = jax.jit(functools.partial(transformer_forward, num_heads=H,
                                         compute_dtype=jnp.bfloat16))
    out_bf16 = jax.block_until_ready(fwd_bf16(x, params))

    ref = transformer_forward_ref(x, params, num_heads=H)
    np.testing.assert_allclose(np.asarray(out_f32), np.asarray(ref),
                               rtol=2e-3, atol=2e-3)
    np.testing.assert_allclose(np.asarray(out_bf16), np.asarray(ref),
                               rtol=5e-2, atol=5e-2)

    print("KERNEL_OK")
</pallas_src>

<mosaic_0001>
module attributes {stable_mosaic.version = 11 : i64} {
  func.func @encoder_layer_kernel(%arg0: i32, %arg1: memref<1x8x128xf32, #tpu.memory_space<vmem>>, %arg2: memref<128x384xf32, #tpu.memory_space<vmem>>, %arg3: memref<128x128xf32, #tpu.memory_space<vmem>>, %arg4: memref<1x128xf32, #tpu.memory_space<vmem>>, %arg5: memref<128x256xf32, #tpu.memory_space<vmem>>, %arg6: memref<1x256xf32, #tpu.memory_space<vmem>>, %arg7: memref<256x128xf32, #tpu.memory_space<vmem>>, %arg8: memref<1x128xf32, #tpu.memory_space<vmem>>, %arg9: memref<1x8x128xf32, #tpu.memory_space<vmem>>) attributes {dimension_semantics = [#tpu.dimension_semantics<parallel>], iteration_bounds = array<i64: 2>, scalar_prefetch = 0 : i64, scratch_operands = 0 : i64, tpu.core_type = #tpu.core_type<tc>, window_params = [{transform_indices = @transform_0, window_bounds = array<i64: 1, 8, 128>}, {pipeline_mode = #tpu.pipeline_mode<synchronous>, transform_indices = @transform_1, window_bounds = array<i64: 128, 384>}, {pipeline_mode = #tpu.pipeline_mode<synchronous>, transform_indices = @transform_2, window_bounds = array<i64: 128, 128>}, {pipeline_mode = #tpu.pipeline_mode<synchronous>, transform_indices = @transform_3, window_bounds = array<i64: 1, 128>}, {pipeline_mode = #tpu.pipeline_mode<synchronous>, transform_indices = @transform_4, window_bounds = array<i64: 128, 256>}, {pipeline_mode = #tpu.pipeline_mode<synchronous>, transform_indices = @transform_5, window_bounds = array<i64: 1, 256>}, {pipeline_mode = #tpu.pipeline_mode<synchronous>, transform_indices = @transform_6, window_bounds = array<i64: 256, 128>}, {pipeline_mode = #tpu.pipeline_mode<synchronous>, transform_indices = @transform_7, window_bounds = array<i64: 1, 128>}, {transform_indices = @transform_8, window_bounds = array<i64: 1, 8, 128>}]} {
    %c0 = arith.constant 0 : index
    %c0_0 = arith.constant 0 : index
    %c0_1 = arith.constant 0 : index
    %0 = vector.load %arg1[%c0, %c0_0, %c0_1] : memref<1x8x128xf32, #tpu.memory_space<vmem>>, vector<1x8x128xf32>
    %cst = arith.constant dense<0.000000e+00> : vector<1x8xf32>
    %1 = vector.multi_reduction <add>, %0, %cst [2] : vector<1x8x128xf32> to vector<1x8xf32>
    %2 = vector.shape_cast %1 : vector<1x8xf32> to vector<1x8x1xf32>
    %cst_2 = arith.constant 1.280000e+02 : f32
    %3 = vector.broadcast %cst_2 : f32 to vector<1x8x1xf32>
    %4 = arith.divf %2, %3 : vector<1x8x1xf32>
    %5 = vector.broadcast %4 : vector<1x8x1xf32> to vector<1x8x128xf32>
    %6 = arith.subf %0, %5 : vector<1x8x128xf32>
    %7 = arith.mulf %6, %6 : vector<1x8x128xf32>
    %cst_3 = arith.constant dense<0.000000e+00> : vector<1x8xf32>
    %8 = vector.multi_reduction <add>, %7, %cst_3 [2] : vector<1x8x128xf32> to vector<1x8xf32>
    %9 = vector.shape_cast %8 : vector<1x8xf32> to vector<1x8x1xf32>
    %cst_4 = arith.constant 1.280000e+02 : f32
    %10 = vector.broadcast %cst_4 : f32 to vector<1x8x1xf32>
    %11 = arith.divf %9, %10 : vector<1x8x1xf32>
    %12 = vector.broadcast %4 : vector<1x8x1xf32> to vector<1x8x128xf32>
    %13 = arith.subf %0, %12 : vector<1x8x128xf32>
    %cst_5 = arith.constant 9.99999974E-6 : f32
    %14 = vector.broadcast %cst_5 : f32 to vector<1x8x1xf32>
    %15 = arith.addf %11, %14 : vector<1x8x1xf32>
    %16 = math.rsqrt %15 : vector<1x8x1xf32>
    %17 = vector.broadcast %16 : vector<1x8x1xf32> to vector<1x8x128xf32>
    %18 = arith.mulf %13, %17 : vector<1x8x128xf32>
    %19 = vector.shape_cast %18 : vector<1x8x128xf32> to vector<8x128xf32>
    %c0_6 = arith.constant 0 : index
    %c0_7 = arith.constant 0 : index
    %20 = vector.load %arg2[%c0_6, %c0_7] : memref<128x384xf32, #tpu.memory_space<vmem>>, vector<128x384xf32>
    %cst_8 = arith.constant dense<0.000000e+00> : vector<8x384xf32>
    %21 = tpu.matmul %19, %20, %cst_8 {dimension_numbers = #tpu.dot_dimension_numbers<[1], [0], [0], [1], [0, 0, 1, 1], [], []>} : vector<8x128xf32>, vector<128x384xf32>, vector<8x384xf32> -> vector<8x384xf32>
    %22 = vector.shape_cast %21 : vector<8x384xf32> to vector<1x8x384xf32>
    %23 = vector.extract_strided_slice %22 {offsets = [0, 0, 0], sizes = [1, 8, 128], strides = [1, 1, 1]} : vector<1x8x384xf32> to vector<1x8x128xf32>
    %24 = vector.extract_strided_slice %22 {offsets = [0, 0, 128], sizes = [1, 8, 128], strides = [1, 1, 1]} : vector<1x8x384xf32> to vector<1x8x128xf32>
    %25 = vector.extract_strided_slice %22 {offsets = [0, 0, 256], sizes = [1, 8, 128], strides = [1, 1, 1]} : vector<1x8x384xf32> to vector<1x8x128xf32>
    %26 = vector.extract_strided_slice %23 {offsets = [0, 0, 0], sizes = [1, 8, 32], strides = [1, 1, 1]} : vector<1x8x128xf32> to vector<1x8x32xf32>
    %27 = vector.extract_strided_slice %24 {offsets = [0, 0, 0], sizes = [1, 8, 32], strides = [1, 1, 1]} : vector<1x8x128xf32> to vector<1x8x32xf32>
    %28 = vector.extract_strided_slice %25 {offsets = [0, 0, 0], sizes = [1, 8, 32], strides = [1, 1, 1]} : vector<1x8x128xf32> to vector<1x8x32xf32>
    "tpu.trace_start"() <{level = 10 : i32, message = "bqd,bkd->bqk"}> : () -> ()
    %cst_9 = arith.constant dense<0.000000e+00> : vector<1x8x8xf32>
    %29 = tpu.matmul %26, %27, %cst_9 {dimension_numbers = #tpu.dot_dimension_numbers<[2], [2], [1], [1], [0, 0, 0, 1, 1, 1], [0], [0]>} : vector<1x8x32xf32>, vector<1x8x32xf32>, vector<1x8x8xf32> -> vector<1x8x8xf32>
    "tpu.trace_stop"() : () -> ()
    %cst_10 = arith.constant 0.176776692 : f32
    %30 = vector.broadcast %cst_10 : f32 to vector<1x8x8xf32>
    %31 = arith.mulf %29, %30 : vector<1x8x8xf32>
    %cst_11 = arith.constant dense<0xFF800000> : vector<1x8xf32>
    %32 = vector.multi_reduction <maximumf>, %31, %cst_11 [2] : vector<1x8x8xf32> to vector<1x8xf32>
    %33 = vector.shape_cast %32 : vector<1x8xf32> to vector<1x8x1xf32>
    %34 = vector.broadcast %33 : vector<1x8x1xf32> to vector<1x8x8xf32>
    %35 = arith.subf %31, %34 : vector<1x8x8xf32>
    %36 = math.exp %35 : vector<1x8x8xf32>
    %cst_12 = arith.constant dense<0.000000e+00> : vector<1x8xf32>
    %37 = vector.multi_reduction <add>, %36, %cst_12 [2] : vector<1x8x8xf32> to vector<1x8xf32>
    %38 = vector.shape_cast %37 : vector<1x8xf32> to vector<1x8x1xf32>
    %39 = vector.broadcast %38 : vector<1x8x1xf32> to vector<1x8x8xf32>
    %40 = arith.divf %36, %39 : vector<1x8x8xf32>
    "tpu.trace_start"() <{level = 10 : i32, message = "bqk,bkd->bqd"}> : () -> ()
    %cst_13 = arith.constant dense<0.000000e+00> : vector<1x8x32xf32>
    %41 = tpu.matmul %40, %28, %cst_13 {dimension_numbers = #tpu.dot_dimension_numbers<[2], [1], [1], [2], [0, 0, 0, 1, 1, 2], [0], [0]>} : vector<1x8x8xf32>, vector<1x8x32xf32>, vector<1x8x32xf32> -> vector<1x8x32xf32>
    "tpu.trace_stop"() : () -> ()
    %42 = vector.extract_strided_slice %23 {offsets = [0, 0, 32], sizes = [1, 8, 32], strides = [1, 1, 1]} : vector<1x8x128xf32> to vector<1x8x32xf32>
    %43 = vector.extract_strided_slice %24 {offsets = [0, 0, 32], sizes = [1, 8, 32], strides = [1, 1, 1]} : vector<1x8x128xf32> to vector<1x8x32xf32>
    %44 = vector.extract_strided_slice %25 {offsets = [0, 0, 32], sizes = [1, 8, 32], strides = [1, 1, 1]} : vector<1x8x128xf32> to vector<1x8x32xf32>
    "tpu.trace_start"() <{level = 10 : i32, message = "bqd,bkd->bqk"}> : () -> ()
    %cst_14 = arith.constant dense<0.000000e+00> : vector<1x8x8xf32>
    %45 = tpu.matmul %42, %43, %cst_14 {dimension_numbers = #tpu.dot_dimension_numbers<[2], [2], [1], [1], [0, 0, 0, 1, 1, 1], [0], [0]>} : vector<1x8x32xf32>, vector<1x8x32xf32>, vector<1x8x8xf32> -> vector<1x8x8xf32>
    "tpu.trace_stop"() : () -> ()
    %cst_15 = arith.constant 0.176776692 : f32
    %46 = vector.broadcast %cst_15 : f32 to vector<1x8x8xf32>
    %47 = arith.mulf %45, %46 : vector<1x8x8xf32>
    %cst_16 = arith.constant dense<0xFF800000> : vector<1x8xf32>
    %48 = vector.multi_reduction <maximumf>, %47, %cst_16 [2] : vector<1x8x8xf32> to vector<1x8xf32>
    %49 = vector.shape_cast %48 : vector<1x8xf32> to vector<1x8x1xf32>
    %50 = vector.broadcast %49 : vector<1x8x1xf32> to vector<1x8x8xf32>
    %51 = arith.subf %47, %50 : vector<1x8x8xf32>
    %52 = math.exp %51 : vector<1x8x8xf32>
    %cst_17 = arith.constant dense<0.000000e+00> : vector<1x8xf32>
    %53 = vector.multi_reduction <add>, %52, %cst_17 [2] : vector<1x8x8xf32> to vector<1x8xf32>
    %54 = vector.shape_cast %53 : vector<1x8xf32> to vector<1x8x1xf32>
    %55 = vector.broadcast %54 : vector<1x8x1xf32> to vector<1x8x8xf32>
    %56 = arith.divf %52, %55 : vector<1x8x8xf32>
    "tpu.trace_start"() <{level = 10 : i32, message = "bqk,bkd->bqd"}> : () -> ()
    %cst_18 = arith.constant dense<0.000000e+00> : vector<1x8x32xf32>
    %57 = tpu.matmul %56, %44, %cst_18 {dimension_numbers = #tpu.dot_dimension_numbers<[2], [1], [1], [2], [0, 0, 0, 1, 1, 2], [0], [0]>} : vector<1x8x8xf32>, vector<1x8x32xf32>, vector<1x8x32xf32> -> vector<1x8x32xf32>
    "tpu.trace_stop"() : () -> ()
    %58 = vector.extract_strided_slice %23 {offsets = [0, 0, 64], sizes = [1, 8, 32], strides = [1, 1, 1]} : vector<1x8x128xf32> to vector<1x8x32xf32>
    %59 = vector.extract_strided_slice %24 {offsets = [0, 0, 64], sizes = [1, 8, 32], strides = [1, 1, 1]} : vector<1x8x128xf32> to vector<1x8x32xf32>
    %60 = vector.extract_strided_slice %25 {offsets = [0, 0, 64], sizes = [1, 8, 32], strides = [1, 1, 1]} : vector<1x8x128xf32> to vector<1x8x32xf32>
    "tpu.trace_start"() <{level = 10 : i32, message = "bqd,bkd->bqk"}> : () -> ()
    %cst_19 = arith.constant dense<0.000000e+00> : vector<1x8x8xf32>
    %61 = tpu.matmul %58, %59, %cst_19 {dimension_numbers = #tpu.dot_dimension_numbers<[2], [2], [1], [1], [0, 0, 0, 1, 1, 1], [0], [0]>} : vector<1x8x32xf32>, vector<1x8x32xf32>, vector<1x8x8xf32> -> vector<1x8x8xf32>
    "tpu.trace_stop"() : () -> ()
    %cst_20 = arith.constant 0.176776692 : f32
    %62 = vector.broadcast %cst_20 : f32 to vector<1x8x8xf32>
    %63 = arith.mulf %61, %62 : vector<1x8x8xf32>
    %cst_21 = arith.constant dense<0xFF800000> : vector<1x8xf32>
    %64 = vector.multi_reduction <maximumf>, %63, %cst_21 [2] : vector<1x8x8xf32> to vector<1x8xf32>
    %65 = vector.shape_cast %64 : vector<1x8xf32> to vector<1x8x1xf32>
    %66 = vector.broadcast %65 : vector<1x8x1xf32> to vector<1x8x8xf32>
    %67 = arith.subf %63, %66 : vector<1x8x8xf32>
    %68 = math.exp %67 : vector<1x8x8xf32>
    %cst_22 = arith.constant dense<0.000000e+00> : vector<1x8xf32>
    %69 = vector.multi_reduction <add>, %68, %cst_22 [2] : vector<1x8x8xf32> to vector<1x8xf32>
    %70 = vector.shape_cast %69 : vector<1x8xf32> to vector<1x8x1xf32>
    %71 = vector.broadcast %70 : vector<1x8x1xf32> to vector<1x8x8xf32>
    %72 = arith.divf %68, %71 : vector<1x8x8xf32>
    "tpu.trace_start"() <{level = 10 : i32, message = "bqk,bkd->bqd"}> : () -> ()
    %cst_23 = arith.constant dense<0.000000e+00> : vector<1x8x32xf32>
    %73 = tpu.matmul %72, %60, %cst_23 {dimension_numbers = #tpu.dot_dimension_numbers<[2], [1], [1], [2], [0, 0, 0, 1, 1, 2], [0], [0]>} : vector<1x8x8xf32>, vector<1x8x32xf32>, vector<1x8x32xf32> -> vector<1x8x32xf32>
    "tpu.trace_stop"() : () -> ()
    %74 = vector.extract_strided_slice %23 {offsets = [0, 0, 96], sizes = [1, 8, 32], strides = [1, 1, 1]} : vector<1x8x128xf32> to vector<1x8x32xf32>
    %75 = vector.extract_strided_slice %24 {offsets = [0, 0, 96], sizes = [1, 8, 32], strides = [1, 1, 1]} : vector<1x8x128xf32> to vector<1x8x32xf32>
    %76 = vector.extract_strided_slice %25 {offsets = [0, 0, 96], sizes = [1, 8, 32], strides = [1, 1, 1]} : vector<1x8x128xf32> to vector<1x8x32xf32>
    "tpu.trace_start"() <{level = 10 : i32, message = "bqd,bkd->bqk"}> : () -> ()
    %cst_24 = arith.constant dense<0.000000e+00> : vector<1x8x8xf32>
    %77 = tpu.matmul %74, %75, %cst_24 {dimension_numbers = #tpu.dot_dimension_numbers<[2], [2], [1], [1], [0, 0, 0, 1, 1, 1], [0], [0]>} : vector<1x8x32xf32>, vector<1x8x32xf32>, vector<1x8x8xf32> -> vector<1x8x8xf32>
    "tpu.trace_stop"() : () -> ()
    %cst_25 = arith.constant 0.176776692 : f32
    %78 = vector.broadcast %cst_25 : f32 to vector<1x8x8xf32>
    %79 = arith.mulf %77, %78 : vector<1x8x8xf32>
    %cst_26 = arith.constant dense<0xFF800000> : vector<1x8xf32>
    %80 = vector.multi_reduction <maximumf>, %79, %cst_26 [2] : vector<1x8x8xf32> to vector<1x8xf32>
    %81 = vector.shape_cast %80 : vector<1x8xf32> to vector<1x8x1xf32>
    %82 = vector.broadcast %81 : vector<1x8x1xf32> to vector<1x8x8xf32>
    %83 = arith.subf %79, %82 : vector<1x8x8xf32>
    %84 = math.exp %83 : vector<1x8x8xf32>
    %cst_27 = arith.constant dense<0.000000e+00> : vector<1x8xf32>
    %85 = vector.multi_reduction <add>, %84, %cst_27 [2] : vector<1x8x8xf32> to vector<1x8xf32>
    %86 = vector.shape_cast %85 : vector<1x8xf32> to vector<1x8x1xf32>
    %87 = vector.broadcast %86 : vector<1x8x1xf32> to vector<1x8x8xf32>
    %88 = arith.divf %84, %87 : vector<1x8x8xf32>
    "tpu.trace_start"() <{level = 10 : i32, message = "bqk,bkd->bqd"}> : () -> ()
    %cst_28 = arith.constant dense<0.000000e+00> : vector<1x8x32xf32>
    %89 = tpu.matmul %88, %76, %cst_28 {dimension_numbers = #tpu.dot_dimension_numbers<[2], [1], [1], [2], [0, 0, 0, 1, 1, 2], [0], [0]>} : vector<1x8x8xf32>, vector<1x8x32xf32>, vector<1x8x32xf32> -> vector<1x8x32xf32>
    "tpu.trace_stop"() : () -> ()
    %90 = tpu.concatenate %41, %57, %73, %89 in 2 : vector<1x8x32xf32>, vector<1x8x32xf32>, vector<1x8x32xf32>, vector<1x8x32xf32> -> vector<1x8x128xf32>
    %91 = arith.addf %90, %0 : vector<1x8x128xf32>
    %cst_29 = arith.constant dense<0.000000e+00> : vector<1x8xf32>
    %92 = vector.multi_reduction <add>, %91, %cst_29 [2] : vector<1x8x128xf32> to vector<1x8xf32>
    %93 = vector.shape_cast %92 : vector<1x8xf32> to vector<1x8x1xf32>
    %cst_30 = arith.constant 1.280000e+02 : f32
    %94 = vector.broadcast %cst_30 : f32 to vector<1x8x1xf32>
    %95 = arith.divf %93, %94 : vector<1x8x1xf32>
    %96 = vector.broadcast %95 : vector<1x8x1xf32> to vector<1x8x128xf32>
    %97 = arith.subf %91, %96 : vector<1x8x128xf32>
    %98 = arith.mulf %97, %97 : vector<1x8x128xf32>
    %cst_31 = arith.constant dense<0.000000e+00> : vector<1x8xf32>
    %99 = vector.multi_reduction <add>, %98, %cst_31 [2] : vector<1x8x128xf32> to vector<1x8xf32>
    %100 = vector.shape_cast %99 : vector<1x8xf32> to vector<1x8x1xf32>
    %cst_32 = arith.constant 1.280000e+02 : f32
    %101 = vector.broadcast %cst_32 : f32 to vector<1x8x1xf32>
    %102 = arith.divf %100, %101 : vector<1x8x1xf32>
    %103 = vector.broadcast %95 : vector<1x8x1xf32> to vector<1x8x128xf32>
    %104 = arith.subf %91, %103 : vector<1x8x128xf32>
    %cst_33 = arith.constant 9.99999974E-6 : f32
    %105 = vector.broadcast %cst_33 : f32 to vector<1x8x1xf32>
    %106 = arith.addf %102, %105 : vector<1x8x1xf32>
    %107 = math.rsqrt %106 : vector<1x8x1xf32>
    %108 = vector.broadcast %107 : vector<1x8x1xf32> to vector<1x8x128xf32>
    %109 = arith.mulf %104, %108 : vector<1x8x128xf32>
    %110 = vector.shape_cast %109 : vector<1x8x128xf32> to vector<8x128xf32>
    %c0_34 = arith.constant 0 : index
    %c0_35 = arith.constant 0 : index
    %111 = vector.load %arg4[%c0_34, %c0_35] : memref<1x128xf32, #tpu.memory_space<vmem>>, vector<1x128xf32>
    %112 = vector.shape_cast %111 : vector<1x128xf32> to vector<128xf32>
    %c0_36 = arith.constant 0 : index
    %c0_37 = arith.constant 0 : index
    %113 = vector.load %arg6[%c0_36, %c0_37] : memref<1x256xf32, #tpu.memory_space<vmem>>, vector<1x256xf32>
    %114 = vector.shape_cast %113 : vector<1x256xf32> to vector<256xf32>
    %c0_38 = arith.constant 0 : index
    %c0_39 = arith.constant 0 : index
    %115 = vector.load %arg8[%c0_38, %c0_39] : memref<1x128xf32, #tpu.memory_space<vmem>>, vector<1x128xf32>
    %116 = vector.shape_cast %115 : vector<1x128xf32> to vector<128xf32>
    %c0_40 = arith.constant 0 : index
    %c0_41 = arith.constant 0 : index
    %117 = vector.load %arg3[%c0_40, %c0_41] : memref<128x128xf32, #tpu.memory_space<vmem>>, vector<128x128xf32>
    %cst_42 = arith.constant dense<0.000000e+00> : vector<8x128xf32>
    %118 = tpu.matmul %110, %117, %cst_42 {dimension_numbers = #tpu.dot_dimension_numbers<[1], [0], [0], [1], [0, 0, 1, 1], [], []>} : vector<8x128xf32>, vector<128x128xf32>, vector<8x128xf32> -> vector<8x128xf32>
    %119 = vector.shape_cast %112 : vector<128xf32> to vector<1x128xf32>
    %120 = vector.broadcast %119 : vector<1x128xf32> to vector<8x128xf32>
    %121 = arith.addf %118, %120 : vector<8x128xf32>
    %cst_43 = arith.constant 5.000000e-01 : f32
    %122 = vector.broadcast %cst_43 : f32 to vector<8x128xf32>
    %123 = arith.mulf %122, %121 : vector<8x128xf32>
    %cst_44 = arith.constant 0.707106769 : f32
    %124 = vector.broadcast %cst_44 : f32 to vector<8x128xf32>
    %125 = arith.mulf %121, %124 : vector<8x128xf32>
    %126 = math.erf %125 : vector<8x128xf32>
    %cst_45 = arith.constant 1.000000e+00 : f32
    %127 = vector.broadcast %cst_45 : f32 to vector<8x128xf32>
    %128 = arith.addf %127, %126 : vector<8x128xf32>
    %129 = arith.mulf %123, %128 : vector<8x128xf32>
    %c0_46 = arith.constant 0 : index
    %c0_47 = arith.constant 0 : index
    %130 = vector.load %arg5[%c0_46, %c0_47] : memref<128x256xf32, #tpu.memory_space<vmem>>, vector<128x256xf32>
    %cst_48 = arith.constant dense<0.000000e+00> : vector<8x256xf32>
    %131 = tpu.matmul %129, %130, %cst_48 {dimension_numbers = #tpu.dot_dimension_numbers<[1], [0], [0], [1], [0, 0, 1, 1], [], []>} : vector<8x128xf32>, vector<128x256xf32>, vector<8x256xf32> -> vector<8x256xf32>
    %132 = vector.shape_cast %114 : vector<256xf32> to vector<1x256xf32>
    %133 = vector.broadcast %132 : vector<1x256xf32> to vector<8x256xf32>
    %134 = arith.addf %131, %133 : vector<8x256xf32>
    %cst_49 = arith.constant 5.000000e-01 : f32
    %135 = vector.broadcast %cst_49 : f32 to vector<8x256xf32>
    %136 = arith.mulf %135, %134 : vector<8x256xf32>
    %cst_50 = arith.constant 0.707106769 : f32
    %137 = vector.broadcast %cst_50 : f32 to vector<8x256xf32>
    %138 = arith.mulf %134, %137 : vector<8x256xf32>
    %139 = math.erf %138 : vector<8x256xf32>
    %cst_51 = arith.constant 1.000000e+00 : f32
    %140 = vector.broadcast %cst_51 : f32 to vector<8x256xf32>
    %141 = arith.addf %140, %139 : vector<8x256xf32>
    %142 = arith.mulf %136, %141 : vector<8x256xf32>
    %c0_52 = arith.constant 0 : index
    %c0_53 = arith.constant 0 : index
    %143 = vector.load %arg7[%c0_52, %c0_53] : memref<256x128xf32, #tpu.memory_space<vmem>>, vector<256x128xf32>
    %cst_54 = arith.constant dense<0.000000e+00> : vector<8x128xf32>
    %144 = tpu.matmul %142, %143, %cst_54 {dimension_numbers = #tpu.dot_dimension_numbers<[1], [0], [0], [1], [0, 0, 1, 1], [], []>} : vector<8x256xf32>, vector<256x128xf32>, vector<8x128xf32> -> vector<8x128xf32>
    %145 = vector.shape_cast %116 : vector<128xf32> to vector<1x128xf32>
    %146 = vector.broadcast %145 : vector<1x128xf32> to vector<8x128xf32>
    %147 = arith.addf %144, %146 : vector<8x128xf32>
    %148 = vector.shape_cast %147 : vector<8x128xf32> to vector<1x8x128xf32>
    %149 = arith.addf %148, %91 : vector<1x8x128xf32>
    %c0_55 = arith.constant 0 : index
    %c0_56 = arith.constant 0 : index
    %c0_57 = arith.constant 0 : index
    %150 = vector.load %arg9[%c0_55, %c0_56, %c0_57] : memref<1x8x128xf32, #tpu.memory_space<vmem>>, vector<1x8x128xf32>
    tpu.vector_store %arg9[%c0_55, %c0_56, %c0_57], %149 {strides = array<i32>} : memref<1x8x128xf32, #tpu.memory_space<vmem>>, vector<1x8x128xf32>,
    return
  }
  func.func @transform_0(%arg0: i32) -> (i32, i32, i32) {
    %c0_i32 = arith.constant 0 : i32
    %c0_i32_0 = arith.constant 0 : i32
    %c0_i32_1 = arith.constant 0 : i32
    return %arg0, %c0_i32, %c0_i32_0 : i32, i32, i32
  }
  func.func @transform_1(%arg0: i32) -> (i32, i32) {
    %c0_i32 = arith.constant 0 : i32
    %c0_i32_0 = arith.constant 0 : i32
    %c0_i32_1 = arith.constant 0 : i32
    return %c0_i32, %c0_i32_0 : i32, i32
  }
  func.func @transform_2(%arg0: i32) -> (i32, i32) {
    %c0_i32 = arith.constant 0 : i32
    %c0_i32_0 = arith.constant 0 : i32
    %c0_i32_1 = arith.constant 0 : i32
    return %c0_i32, %c0_i32_0 : i32, i32
  }
  func.func @transform_3(%arg0: i32) -> (i32, i32) {
    %c0_i32 = arith.constant 0 : i32
    %c0_i32_0 = arith.constant 0 : i32
    %c0_i32_1 = arith.constant 0 : i32
    return %c0_i32, %c0_i32_0 : i32, i32
  }
  func.func @transform_4(%arg0: i32) -> (i32, i32) {
    %c0_i32 = arith.constant 0 : i32
    %c0_i32_0 = arith.constant 0 : i32
    %c0_i32_1 = arith.constant 0 : i32
    return %c0_i32, %c0_i32_0 : i32, i32
  }
  func.func @transform_5(%arg0: i32) -> (i32, i32) {
    %c0_i32 = arith.constant 0 : i32
    %c0_i32_0 = arith.constant 0 : i32
    %c0_i32_1 = arith.constant 0 : i32
    return %c0_i32, %c0_i32_0 : i32, i32
  }
  func.func @transform_6(%arg0: i32) -> (i32, i32) {
    %c0_i32 = arith.constant 0 : i32
    %c0_i32_0 = arith.constant 0 : i32
    %c0_i32_1 = arith.constant 0 : i32
    return %c0_i32, %c0_i32_0 : i32, i32
  }
  func.func @transform_7(%arg0: i32) -> (i32, i32) {
    %c0_i32 = arith.constant 0 : i32
    %c0_i32_0 = arith.constant 0 : i32
    %c0_i32_1 = arith.constant 0 : i32
    return %c0_i32, %c0_i32_0 : i32, i32
  }
  func.func @transform_8(%arg0: i32) -> (i32, i32, i32) {
    %c0_i32 = arith.constant 0 : i32
    %c0_i32_0 = arith.constant 0 : i32
    %c0_i32_1 = arith.constant 0 : i32
    return %arg0, %c0_i32, %c0_i32_0 : i32, i32, i32
  }
}

module attributes {stable_mosaic.version = 11 : i64} {
  func.func @encoder_layer_kernel(%arg0: i32, %arg1: memref<1x8x128xf32, #tpu.memory_space<vmem>>, %arg2: memref<128x384xf32, #tpu.memory_space<vmem>>, %arg3: memref<128x128xf32, #tpu.memory_space<vmem>>, %arg4: memref<1x128xf32, #tpu.memory_space<vmem>>, %arg5: memref<128x256xf32, #tpu.memory_space<vmem>>, %arg6: memref<1x256xf32, #tpu.memory_space<vmem>>, %arg7: memref<256x128xf32, #tpu.memory_space<vmem>>, %arg8: memref<1x128xf32, #tpu.memory_space<vmem>>, %arg9: memref<1x8x128xf32, #tpu.memory_space<vmem>>) attributes {dimension_semantics = [#tpu.dimension_semantics<parallel>], iteration_bounds = array<i64: 2>, scalar_prefetch = 0 : i64, scratch_operands = 0 : i64, tpu.core_type = #tpu.core_type<tc>, window_params = [{transform_indices = @transform_0, window_bounds = array<i64: 1, 8, 128>}, {pipeline_mode = #tpu.pipeline_mode<synchronous>, transform_indices = @transform_1, window_bounds = array<i64: 128, 384>}, {pipeline_mode = #tpu.pipeline_mode<synchronous>, transform_indices = @transform_2, window_bounds = array<i64: 128, 128>}, {pipeline_mode = #tpu.pipeline_mode<synchronous>, transform_indices = @transform_3, window_bounds = array<i64: 1, 128>}, {pipeline_mode = #tpu.pipeline_mode<synchronous>, transform_indices = @transform_4, window_bounds = array<i64: 128, 256>}, {pipeline_mode = #tpu.pipeline_mode<synchronous>, transform_indices = @transform_5, window_bounds = array<i64: 1, 256>}, {pipeline_mode = #tpu.pipeline_mode<synchronous>, transform_indices = @transform_6, window_bounds = array<i64: 256, 128>}, {pipeline_mode = #tpu.pipeline_mode<synchronous>, transform_indices = @transform_7, window_bounds = array<i64: 1, 128>}, {transform_indices = @transform_8, window_bounds = array<i64: 1, 8, 128>}]} {
    %c0 = arith.constant 0 : index
    %c0_0 = arith.constant 0 : index
    %c0_1 = arith.constant 0 : index
    %0 = vector.load %arg1[%c0, %c0_0, %c0_1] : memref<1x8x128xf32, #tpu.memory_space<vmem>>, vector<1x8x128xf32>
    %cst = arith.constant dense<0.000000e+00> : vector<1x8xf32>
    %1 = vector.multi_reduction <add>, %0, %cst [2] : vector<1x8x128xf32> to vector<1x8xf32>
    %2 = vector.shape_cast %1 : vector<1x8xf32> to vector<1x8x1xf32>
    %cst_2 = arith.constant 1.280000e+02 : f32
    %3 = vector.broadcast %cst_2 : f32 to vector<1x8x1xf32>
    %4 = arith.divf %2, %3 : vector<1x8x1xf32>
    %5 = vector.broadcast %4 : vector<1x8x1xf32> to vector<1x8x128xf32>
    %6 = arith.subf %0, %5 : vector<1x8x128xf32>
    %7 = arith.mulf %6, %6 : vector<1x8x128xf32>
    %cst_3 = arith.constant dense<0.000000e+00> : vector<1x8xf32>
    %8 = vector.multi_reduction <add>, %7, %cst_3 [2] : vector<1x8x128xf32> to vector<1x8xf32>
    %9 = vector.shape_cast %8 : vector<1x8xf32> to vector<1x8x1xf32>
    %cst_4 = arith.constant 1.280000e+02 : f32
    %10 = vector.broadcast %cst_4 : f32 to vector<1x8x1xf32>
    %11 = arith.divf %9, %10 : vector<1x8x1xf32>
    %12 = vector.broadcast %4 : vector<1x8x1xf32> to vector<1x8x128xf32>
    %13 = arith.subf %0, %12 : vector<1x8x128xf32>
    %cst_5 = arith.constant 9.99999974E-6 : f32
    %14 = vector.broadcast %cst_5 : f32 to vector<1x8x1xf32>
    %15 = arith.addf %11, %14 : vector<1x8x1xf32>
    %16 = math.rsqrt %15 : vector<1x8x1xf32>
    %17 = vector.broadcast %16 : vector<1x8x1xf32> to vector<1x8x128xf32>
    %18 = arith.mulf %13, %17 : vector<1x8x128xf32>
    %19 = vector.shape_cast %18 : vector<1x8x128xf32> to vector<8x128xf32>
    %c0_6 = arith.constant 0 : index
    %c0_7 = arith.constant 0 : index
    %20 = vector.load %arg2[%c0_6, %c0_7] : memref<128x384xf32, #tpu.memory_space<vmem>>, vector<128x384xf32>
    %cst_8 = arith.constant dense<0.000000e+00> : vector<8x384xf32>
    %21 = tpu.matmul %19, %20, %cst_8 {dimension_numbers = #tpu.dot_dimension_numbers<[1], [0], [0], [1], [0, 0, 1, 1], [], []>} : vector<8x128xf32>, vector<128x384xf32>, vector<8x384xf32> -> vector<8x384xf32>
    %22 = vector.shape_cast %21 : vector<8x384xf32> to vector<1x8x384xf32>
    %23 = vector.extract_strided_slice %22 {offsets = [0, 0, 0], sizes = [1, 8, 128], strides = [1, 1, 1]} : vector<1x8x384xf32> to vector<1x8x128xf32>
    %24 = vector.extract_strided_slice %22 {offsets = [0, 0, 128], sizes = [1, 8, 128], strides = [1, 1, 1]} : vector<1x8x384xf32> to vector<1x8x128xf32>
    %25 = vector.extract_strided_slice %22 {offsets = [0, 0, 256], sizes = [1, 8, 128], strides = [1, 1, 1]} : vector<1x8x384xf32> to vector<1x8x128xf32>
    %26 = vector.extract_strided_slice %23 {offsets = [0, 0, 0], sizes = [1, 8, 32], strides = [1, 1, 1]} : vector<1x8x128xf32> to vector<1x8x32xf32>
    %27 = vector.extract_strided_slice %24 {offsets = [0, 0, 0], sizes = [1, 8, 32], strides = [1, 1, 1]} : vector<1x8x128xf32> to vector<1x8x32xf32>
    %28 = vector.extract_strided_slice %25 {offsets = [0, 0, 0], sizes = [1, 8, 32], strides = [1, 1, 1]} : vector<1x8x128xf32> to vector<1x8x32xf32>
    "tpu.trace_start"() <{level = 10 : i32, message = "bqd,bkd->bqk"}> : () -> ()
    %cst_9 = arith.constant dense<0.000000e+00> : vector<1x8x8xf32>
    %29 = tpu.matmul %26, %27, %cst_9 {dimension_numbers = #tpu.dot_dimension_numbers<[2], [2], [1], [1], [0, 0, 0, 1, 1, 1], [0], [0]>} : vector<1x8x32xf32>, vector<1x8x32xf32>, vector<1x8x8xf32> -> vector<1x8x8xf32>
    "tpu.trace_stop"() : () -> ()
    %cst_10 = arith.constant 0.176776692 : f32
    %30 = vector.broadcast %cst_10 : f32 to vector<1x8x8xf32>
    %31 = arith.mulf %29, %30 : vector<1x8x8xf32>
    %cst_11 = arith.constant dense<0xFF800000> : vector<1x8xf32>
    %32 = vector.multi_reduction <maximumf>, %31, %cst_11 [2] : vector<1x8x8xf32> to vector<1x8xf32>
    %33 = vector.shape_cast %32 : vector<1x8xf32> to vector<1x8x1xf32>
    %34 = vector.broadcast %33 : vector<1x8x1xf32> to vector<1x8x8xf32>
    %35 = arith.subf %31, %34 : vector<1x8x8xf32>
    %36 = math.exp %35 : vector<1x8x8xf32>
    %cst_12 = arith.constant dense<0.000000e+00> : vector<1x8xf32>
    %37 = vector.multi_reduction <add>, %36, %cst_12 [2] : vector<1x8x8xf32> to vector<1x8xf32>
    %38 = vector.shape_cast %37 : vector<1x8xf32> to vector<1x8x1xf32>
    %39 = vector.broadcast %38 : vector<1x8x1xf32> to vector<1x8x8xf32>
    %40 = arith.divf %36, %39 : vector<1x8x8xf32>
    "tpu.trace_start"() <{level = 10 : i32, message = "bqk,bkd->bqd"}> : () -> ()
    %cst_13 = arith.constant dense<0.000000e+00> : vector<1x8x32xf32>
    %41 = tpu.matmul %40, %28, %cst_13 {dimension_numbers = #tpu.dot_dimension_numbers<[2], [1], [1], [2], [0, 0, 0, 1, 1, 2], [0], [0]>} : vector<1x8x8xf32>, vector<1x8x32xf32>, vector<1x8x32xf32> -> vector<1x8x32xf32>
    "tpu.trace_stop"() : () -> ()
    %42 = vector.extract_strided_slice %23 {offsets = [0, 0, 32], sizes = [1, 8, 32], strides = [1, 1, 1]} : vector<1x8x128xf32> to vector<1x8x32xf32>
    %43 = vector.extract_strided_slice %24 {offsets = [0, 0, 32], sizes = [1, 8, 32], strides = [1, 1, 1]} : vector<1x8x128xf32> to vector<1x8x32xf32>
    %44 = vector.extract_strided_slice %25 {offsets = [0, 0, 32], sizes = [1, 8, 32], strides = [1, 1, 1]} : vector<1x8x128xf32> to vector<1x8x32xf32>
    "tpu.trace_start"() <{level = 10 : i32, message = "bqd,bkd->bqk"}> : () -> ()
    %cst_14 = arith.constant dense<0.000000e+00> : vector<1x8x8xf32>
    %45 = tpu.matmul %42, %43, %cst_14 {dimension_numbers = #tpu.dot_dimension_numbers<[2], [2], [1], [1], [0, 0, 0, 1, 1, 1], [0], [0]>} : vector<1x8x32xf32>, vector<1x8x32xf32>, vector<1x8x8xf32> -> vector<1x8x8xf32>
    "tpu.trace_stop"() : () -> ()
    %cst_15 = arith.constant 0.176776692 : f32
    %46 = vector.broadcast %cst_15 : f32 to vector<1x8x8xf32>
    %47 = arith.mulf %45, %46 : vector<1x8x8xf32>
    %cst_16 = arith.constant dense<0xFF800000> : vector<1x8xf32>
    %48 = vector.multi_reduction <maximumf>, %47, %cst_16 [2] : vector<1x8x8xf32> to vector<1x8xf32>
    %49 = vector.shape_cast %48 : vector<1x8xf32> to vector<1x8x1xf32>
    %50 = vector.broadcast %49 : vector<1x8x1xf32> to vector<1x8x8xf32>
    %51 = arith.subf %47, %50 : vector<1x8x8xf32>
    %52 = math.exp %51 : vector<1x8x8xf32>
    %cst_17 = arith.constant dense<0.000000e+00> : vector<1x8xf32>
    %53 = vector.multi_reduction <add>, %52, %cst_17 [2] : vector<1x8x8xf32> to vector<1x8xf32>
    %54 = vector.shape_cast %53 : vector<1x8xf32> to vector<1x8x1xf32>
    %55 = vector.broadcast %54 : vector<1x8x1xf32> to vector<1x8x8xf32>
    %56 = arith.divf %52, %55 : vector<1x8x8xf32>
    "tpu.trace_start"() <{level = 10 : i32, message = "bqk,bkd->bqd"}> : () -> ()
    %cst_18 = arith.constant dense<0.000000e+00> : vector<1x8x32xf32>
    %57 = tpu.matmul %56, %44, %cst_18 {dimension_numbers = #tpu.dot_dimension_numbers<[2], [1], [1], [2], [0, 0, 0, 1, 1, 2], [0], [0]>} : vector<1x8x8xf32>, vector<1x8x32xf32>, vector<1x8x32xf32> -> vector<1x8x32xf32>
    "tpu.trace_stop"() : () -> ()
    %58 = vector.extract_strided_slice %23 {offsets = [0, 0, 64], sizes = [1, 8, 32], strides = [1, 1, 1]} : vector<1x8x128xf32> to vector<1x8x32xf32>
    %59 = vector.extract_strided_slice %24 {offsets = [0, 0, 64], sizes = [1, 8, 32], strides = [1, 1, 1]} : vector<1x8x128xf32> to vector<1x8x32xf32>
    %60 = vector.extract_strided_slice %25 {offsets = [0, 0, 64], sizes = [1, 8, 32], strides = [1, 1, 1]} : vector<1x8x128xf32> to vector<1x8x32xf32>
    "tpu.trace_start"() <{level = 10 : i32, message = "bqd,bkd->bqk"}> : () -> ()
    %cst_19 = arith.constant dense<0.000000e+00> : vector<1x8x8xf32>
    %61 = tpu.matmul %58, %59, %cst_19 {dimension_numbers = #tpu.dot_dimension_numbers<[2], [2], [1], [1], [0, 0, 0, 1, 1, 1], [0], [0]>} : vector<1x8x32xf32>, vector<1x8x32xf32>, vector<1x8x8xf32> -> vector<1x8x8xf32>
    "tpu.trace_stop"() : () -> ()
    %cst_20 = arith.constant 0.176776692 : f32
    %62 = vector.broadcast %cst_20 : f32 to vector<1x8x8xf32>
    %63 = arith.mulf %61, %62 : vector<1x8x8xf32>
    %cst_21 = arith.constant dense<0xFF800000> : vector<1x8xf32>
    %64 = vector.multi_reduction <maximumf>, %63, %cst_21 [2] : vector<1x8x8xf32> to vector<1x8xf32>
    %65 = vector.shape_cast %64 : vector<1x8xf32> to vector<1x8x1xf32>
    %66 = vector.broadcast %65 : vector<1x8x1xf32> to vector<1x8x8xf32>
    %67 = arith.subf %63, %66 : vector<1x8x8xf32>
    %68 = math.exp %67 : vector<1x8x8xf32>
    %cst_22 = arith.constant dense<0.000000e+00> : vector<1x8xf32>
    %69 = vector.multi_reduction <add>, %68, %cst_22 [2] : vector<1x8x8xf32> to vector<1x8xf32>
    %70 = vector.shape_cast %69 : vector<1x8xf32> to vector<1x8x1xf32>
    %71 = vector.broadcast %70 : vector<1x8x1xf32> to vector<1x8x8xf32>
    %72 = arith.divf %68, %71 : vector<1x8x8xf32>
    "tpu.trace_start"() <{level = 10 : i32, message = "bqk,bkd->bqd"}> : () -> ()
    %cst_23 = arith.constant dense<0.000000e+00> : vector<1x8x32xf32>
    %73 = tpu.matmul %72, %60, %cst_23 {dimension_numbers = #tpu.dot_dimension_numbers<[2], [1], [1], [2], [0, 0, 0, 1, 1, 2], [0], [0]>} : vector<1x8x8xf32>, vector<1x8x32xf32>, vector<1x8x32xf32> -> vector<1x8x32xf32>
    "tpu.trace_stop"() : () -> ()
    %74 = vector.extract_strided_slice %23 {offsets = [0, 0, 96], sizes = [1, 8, 32], strides = [1, 1, 1]} : vector<1x8x128xf32> to vector<1x8x32xf32>
    %75 = vector.extract_strided_slice %24 {offsets = [0, 0, 96], sizes = [1, 8, 32], strides = [1, 1, 1]} : vector<1x8x128xf32> to vector<1x8x32xf32>
    %76 = vector.extract_strided_slice %25 {offsets = [0, 0, 96], sizes = [1, 8, 32], strides = [1, 1, 1]} : vector<1x8x128xf32> to vector<1x8x32xf32>
    "tpu.trace_start"() <{level = 10 : i32, message = "bqd,bkd->bqk"}> : () -> ()
    %cst_24 = arith.constant dense<0.000000e+00> : vector<1x8x8xf32>
    %77 = tpu.matmul %74, %75, %cst_24 {dimension_numbers = #tpu.dot_dimension_numbers<[2], [2], [1], [1], [0, 0, 0, 1, 1, 1], [0], [0]>} : vector<1x8x32xf32>, vector<1x8x32xf32>, vector<1x8x8xf32> -> vector<1x8x8xf32>
    "tpu.trace_stop"() : () -> ()
    %cst_25 = arith.constant 0.176776692 : f32
    %78 = vector.broadcast %cst_25 : f32 to vector<1x8x8xf32>
    %79 = arith.mulf %77, %78 : vector<1x8x8xf32>
    %cst_26 = arith.constant dense<0xFF800000> : vector<1x8xf32>
    %80 = vector.multi_reduction <maximumf>, %79, %cst_26 [2] : vector<1x8x8xf32> to vector<1x8xf32>
    %81 = vector.shape_cast %80 : vector<1x8xf32> to vector<1x8x1xf32>
    %82 = vector.broadcast %81 : vector<1x8x1xf32> to vector<1x8x8xf32>
    %83 = arith.subf %79, %82 : vector<1x8x8xf32>
    %84 = math.exp %83 : vector<1x8x8xf32>
    %cst_27 = arith.constant dense<0.000000e+00> : vector<1x8xf32>
    %85 = vector.multi_reduction <add>, %84, %cst_27 [2] : vector<1x8x8xf32> to vector<1x8xf32>
    %86 = vector.shape_cast %85 : vector<1x8xf32> to vector<1x8x1xf32>
    %87 = vector.broadcast %86 : vector<1x8x1xf32> to vector<1x8x8xf32>
    %88 = arith.divf %84, %87 : vector<1x8x8xf32>
    "tpu.trace_start"() <{level = 10 : i32, message = "bqk,bkd->bqd"}> : () -> ()
    %cst_28 = arith.constant dense<0.000000e+00> : vector<1x8x32xf32>
    %89 = tpu.matmul %88, %76, %cst_28 {dimension_numbers = #tpu.dot_dimension_numbers<[2], [1], [1], [2], [0, 0, 0, 1, 1, 2], [0], [0]>} : vector<1x8x8xf32>, vector<1x8x32xf32>, vector<1x8x32xf32> -> vector<1x8x32xf32>
    "tpu.trace_stop"() : () -> ()
    %90 = tpu.concatenate %41, %57, %73, %89 in 2 : vector<1x8x32xf32>, vector<1x8x32xf32>, vector<1x8x32xf32>, vector<1x8x32xf32> -> vector<1x8x128xf32>
    %91 = arith.addf %90, %0 : vector<1x8x128xf32>
    %cst_29 = arith.constant dense<0.000000e+00> : vector<1x8xf32>
    %92 = vector.multi_reduction <add>, %91, %cst_29 [2] : vector<1x8x128xf32> to vector<1x8xf32>
    %93 = vector.shape_cast %92 : vector<1x8xf32> to vector<1x8x1xf32>
    %cst_30 = arith.constant 1.280000e+02 : f32
    %94 = vector.broadcast %cst_30 : f32 to vector<1x8x1xf32>
    %95 = arith.divf %93, %94 : vector<1x8x1xf32>
    %96 = vector.broadcast %95 : vector<1x8x1xf32> to vector<1x8x128xf32>
    %97 = arith.subf %91, %96 : vector<1x8x128xf32>
    %98 = arith.mulf %97, %97 : vector<1x8x128xf32>
    %cst_31 = arith.constant dense<0.000000e+00> : vector<1x8xf32>
    %99 = vector.multi_reduction <add>, %98, %cst_31 [2] : vector<1x8x128xf32> to vector<1x8xf32>
    %100 = vector.shape_cast %99 : vector<1x8xf32> to vector<1x8x1xf32>
    %cst_32 = arith.constant 1.280000e+02 : f32
    %101 = vector.broadcast %cst_32 : f32 to vector<1x8x1xf32>
    %102 = arith.divf %100, %101 : vector<1x8x1xf32>
    %103 = vector.broadcast %95 : vector<1x8x1xf32> to vector<1x8x128xf32>
    %104 = arith.subf %91, %103 : vector<1x8x128xf32>
    %cst_33 = arith.constant 9.99999974E-6 : f32
    %105 = vector.broadcast %cst_33 : f32 to vector<1x8x1xf32>
    %106 = arith.addf %102, %105 : vector<1x8x1xf32>
    %107 = math.rsqrt %106 : vector<1x8x1xf32>
    %108 = vector.broadcast %107 : vector<1x8x1xf32> to vector<1x8x128xf32>
    %109 = arith.mulf %104, %108 : vector<1x8x128xf32>
    %110 = vector.shape_cast %109 : vector<1x8x128xf32> to vector<8x128xf32>
    %c0_34 = arith.constant 0 : index
    %c0_35 = arith.constant 0 : index
    %111 = vector.load %arg4[%c0_34, %c0_35] : memref<1x128xf32, #tpu.memory_space<vmem>>, vector<1x128xf32>
    %112 = vector.shape_cast %111 : vector<1x128xf32> to vector<128xf32>
    %c0_36 = arith.constant 0 : index
    %c0_37 = arith.constant 0 : index
    %113 = vector.load %arg6[%c0_36, %c0_37] : memref<1x256xf32, #tpu.memory_space<vmem>>, vector<1x256xf32>
    %114 = vector.shape_cast %113 : vector<1x256xf32> to vector<256xf32>
    %c0_38 = arith.constant 0 : index
    %c0_39 = arith.constant 0 : index
    %115 = vector.load %arg8[%c0_38, %c0_39] : memref<1x128xf32, #tpu.memory_space<vmem>>, vector<1x128xf32>
    %116 = vector.shape_cast %115 : vector<1x128xf32> to vector<128xf32>
    %c0_40 = arith.constant 0 : index
    %c0_41 = arith.constant 0 : index
    %117 = vector.load %arg3[%c0_40, %c0_41] : memref<128x128xf32, #tpu.memory_space<vmem>>, vector<128x128xf32>
    %cst_42 = arith.constant dense<0.000000e+00> : vector<8x128xf32>
    %118 = tpu.matmul %110, %117, %cst_42 {dimension_numbers = #tpu.dot_dimension_numbers<[1], [0], [0], [1], [0, 0, 1, 1], [], []>} : vector<8x128xf32>, vector<128x128xf32>, vector<8x128xf32> -> vector<8x128xf32>
    %119 = vector.shape_cast %112 : vector<128xf32> to vector<1x128xf32>
    %120 = vector.broadcast %119 : vector<1x128xf32> to vector<8x128xf32>
    %121 = arith.addf %118, %120 : vector<8x128xf32>
    %cst_43 = arith.constant 5.000000e-01 : f32
    %122 = vector.broadcast %cst_43 : f32 to vector<8x128xf32>
    %123 = arith.mulf %122, %121 : vector<8x128xf32>
    %cst_44 = arith.constant 0.707106769 : f32
    %124 = vector.broadcast %cst_44 : f32 to vector<8x128xf32>
    %125 = arith.mulf %121, %124 : vector<8x128xf32>
    %126 = math.erf %125 : vector<8x128xf32>
    %cst_45 = arith.constant 1.000000e+00 : f32
    %127 = vector.broadcast %cst_45 : f32 to vector<8x128xf32>
    %128 = arith.addf %127, %126 : vector<8x128xf32>
    %129 = arith.mulf %123, %128 : vector<8x128xf32>
    %c0_46 = arith.constant 0 : index
    %c0_47 = arith.constant 0 : index
    %130 = vector.load %arg5[%c0_46, %c0_47] : memref<128x256xf32, #tpu.memory_space<vmem>>, vector<128x256xf32>
    %cst_48 = arith.constant dense<0.000000e+00> : vector<8x256xf32>
    %131 = tpu.matmul %129, %130, %cst_48 {dimension_numbers = #tpu.dot_dimension_numbers<[1], [0], [0], [1], [0, 0, 1, 1], [], []>} : vector<8x128xf32>, vector<128x256xf32>, vector<8x256xf32> -> vector<8x256xf32>
    %132 = vector.shape_cast %114 : vector<256xf32> to vector<1x256xf32>
    %133 = vector.broadcast %132 : vector<1x256xf32> to vector<8x256xf32>
    %134 = arith.addf %131, %133 : vector<8x256xf32>
    %cst_49 = arith.constant 5.000000e-01 : f32
    %135 = vector.broadcast %cst_49 : f32 to vector<8x256xf32>
    %136 = arith.mulf %135, %134 : vector<8x256xf32>
    %cst_50 = arith.constant 0.707106769 : f32
    %137 = vector.broadcast %cst_50 : f32 to vector<8x256xf32>
    %138 = arith.mulf %134, %137 : vector<8x256xf32>
    %139 = math.erf %138 : vector<8x256xf32>
    %cst_51 = arith.constant 1.000000e+00 : f32
    %140 = vector.broadcast %cst_51 : f32 to vector<8x256xf32>
    %141 = arith.addf %140, %139 : vector<8x256xf32>
    %142 = arith.mulf %136, %141 : vector<8x256xf32>
    %c0_52 = arith.constant 0 : index
    %c0_53 = arith.constant 0 : index
    %143 = vector.load %arg7[%c0_52, %c0_53] : memref<256x128xf32, #tpu.memory_space<vmem>>, vector<256x128xf32>
    %cst_54 = arith.constant dense<0.000000e+00> : vector<8x128xf32>
    %144 = tpu.matmul %142, %143, %cst_54 {dimension_numbers = #tpu.dot_dimension_numbers<[1], [0], [0], [1], [0, 0, 1, 1], [], []>} : vector<8x256xf32>, vector<256x128xf32>, vector<8x128xf32> -> vector<8x128xf32>
    %145 = vector.shape_cast %116 : vector<128xf32> to vector<1x128xf32>
    %146 = vector.broadcast %145 : vector<1x128xf32> to vector<8x128xf32>
    %147 = arith.addf %144, %146 : vector<8x128xf32>
    %148 = vector.shape_cast %147 : vector<8x128xf32> to vector<1x8x128xf32>
    %149 = arith.addf %148, %91 : vector<1x8x128xf32>
    %c0_55 = arith.constant 0 : index
    %c0_56 = arith.constant 0 : index
    %c0_57 = arith.constant 0 : index
    %150 = vector.load %arg9[%c0_55, %c0_56, %c0_57] : memref<1x8x128xf32, #tpu.memory_space<vmem>>, vector<1x8x128xf32>
    tpu.vector_store %arg9[%c0_55, %c0_56, %c0_57], %149 {strides = array<i32>} : memref<1x8x128xf32, #tpu.memory_space<vmem>>, vector<1x8x128xf32>,
    return
  }
  func.func @transform_0(%arg0: i32) -> (i32, i32, i32) {
    %c0_i32 = arith.constant 0 : i32
    %c0_i32_0 = arith.constant 0 : i32
    %c0_i32_1 = arith.constant 0 : i32
    return %arg0, %c0_i32, %c0_i32_0 : i32, i32, i32
  }
  func.func @transform_1(%arg0: i32) -> (i32, i32) {
    %c0_i32 = arith.constant 0 : i32
    %c0_i32_0 = arith.constant 0 : i32
    %c0_i32_1 = arith.constant 0 : i32
    return %c0_i32, %c0_i32_0 : i32, i32
  }
  func.func @transform_2(%arg0: i32) -> (i32, i32) {
    %c0_i32 = arith.constant 0 : i32
    %c0_i32_0 = arith.constant 0 : i32
    %c0_i32_1 = arith.constant 0 : i32
    return %c0_i32, %c0_i32_0 : i32, i32
  }
  func.func @transform_3(%arg0: i32) -> (i32, i32) {
    %c0_i32 = arith.constant 0 : i32
    %c0_i32_0 = arith.constant 0 : i32
    %c0_i32_1 = arith.constant 0 : i32
    return %c0_i32, %c0_i32_0 : i32, i32
  }
  func.func @transform_4(%arg0: i32) -> (i32, i32) {
    %c0_i32 = arith.constant 0 : i32
    %c0_i32_0 = arith.constant 0 : i32
    %c0_i32_1 = arith.constant 0 : i32
    return %c0_i32, %c0_i32_0 : i32, i32
  }
  func.func @transform_5(%arg0: i32) -> (i32, i32) {
    %c0_i32 = arith.constant 0 : i32
    %c0_i32_0 = arith.constant 0 : i32
    %c0_i32_1 = arith.constant 0 : i32
    return %c0_i32, %c0_i32_0 : i32, i32
  }
  func.func @transform_6(%arg0: i32) -> (i32, i32) {
    %c0_i32 = arith.constant 0 : i32
    %c0_i32_0 = arith.constant 0 : i32
    %c0_i32_1 = arith.constant 0 : i32
    return %c0_i32, %c0_i32_0 : i32, i32
  }
  func.func @transform_7(%arg0: i32) -> (i32, i32) {
    %c0_i32 = arith.constant 0 : i32
    %c0_i32_0 = arith.constant 0 : i32
    %c0_i32_1 = arith.constant 0 : i32
    return %c0_i32, %c0_i32_0 : i32, i32
  }
  func.func @transform_8(%arg0: i32) -> (i32, i32, i32) {
    %c0_i32 = arith.constant 0 : i32
    %c0_i32_0 = arith.constant 0 : i32
    %c0_i32_1 = arith.constant 0 : i32
    return %arg0, %c0_i32, %c0_i32_0 : i32, i32, i32
  }
}

module attributes {stable_mosaic.version = 11 : i64} {
  func.func @embed_kernel(%arg0: i32, %arg1: memref<1x8x64xf32, #tpu.memory_space<vmem>>, %arg2: memref<64x128xf32, #tpu.memory_space<vmem>>, %arg3: memref<1x128xf32, #tpu.memory_space<vmem>>, %arg4: memref<1x8x128xf32, #tpu.memory_space<vmem>>, %arg5: memref<1x8x128xf32, #tpu.memory_space<vmem>>) attributes {dimension_semantics = [#tpu.dimension_semantics<parallel>], iteration_bounds = array<i64: 2>, scalar_prefetch = 0 : i64, scratch_operands = 0 : i64, tpu.core_type = #tpu.core_type<tc>, window_params = [{transform_indices = @transform_0, window_bounds = array<i64: 1, 8, 64>}, {pipeline_mode = #tpu.pipeline_mode<synchronous>, transform_indices = @transform_1, window_bounds = array<i64: 64, 128>}, {pipeline_mode = #tpu.pipeline_mode<synchronous>, transform_indices = @transform_2, window_bounds = array<i64: 1, 128>}, {pipeline_mode = #tpu.pipeline_mode<synchronous>, transform_indices = @transform_3, window_bounds = array<i64: 1, 8, 128>}, {transform_indices = @transform_4, window_bounds = array<i64: 1, 8, 128>}]} {
    %c0 = arith.constant 0 : index
    %c0_0 = arith.constant 0 : index
    %c0_1 = arith.constant 0 : index
    %0 = vector.load %arg1[%c0, %c0_0, %c0_1] : memref<1x8x64xf32, #tpu.memory_space<vmem>>, vector<1x8x64xf32>
    %1 = vector.shape_cast %0 : vector<1x8x64xf32> to vector<8x64xf32>
    %c0_2 = arith.constant 0 : index
    %c0_3 = arith.constant 0 : index
    %2 = vector.load %arg2[%c0_2, %c0_3] : memref<64x128xf32, #tpu.memory_space<vmem>>, vector<64x128xf32>
    %cst = arith.constant dense<0.000000e+00> : vector<8x128xf32>
    %3 = tpu.matmul %1, %2, %cst {dimension_numbers = #tpu.dot_dimension_numbers<[1], [0], [0], [1], [0, 0, 1, 1], [], []>} : vector<8x64xf32>, vector<64x128xf32>, vector<8x128xf32> -> vector<8x128xf32>
    %c0_4 = arith.constant 0 : index
    %c0_5 = arith.constant 0 : index
    %4 = vector.load %arg3[%c0_4, %c0_5] : memref<1x128xf32, #tpu.memory_space<vmem>>, vector<1x128xf32>
    %5 = vector.shape_cast %4 : vector<1x128xf32> to vector<128xf32>
    %6 = vector.shape_cast %5 : vector<128xf32> to vector<1x128xf32>
    %7 = vector.broadcast %6 : vector<1x128xf32> to vector<8x128xf32>
    %8 = arith.addf %3, %7 : vector<8x128xf32>
    %9 = vector.shape_cast %8 : vector<8x128xf32> to vector<1x8x128xf32>
    %c0_6 = arith.constant 0 : index
    %c0_7 = arith.constant 0 : index
    %c0_8 = arith.constant 0 : index
    %10 = vector.load %arg4[%c0_6, %c0_7, %c0_8] : memref<1x8x128xf32, #tpu.memory_space<vmem>>, vector<1x8x128xf32>
    %11 = arith.addf %9, %10 : vector<1x8x128xf32>
    %c0_9 = arith.constant 0 : index
    %c0_10 = arith.constant 0 : index
    %c0_11 = arith.constant 0 : index
    %12 = vector.load %arg5[%c0_9, %c0_10, %c0_11] : memref<1x8x128xf32, #tpu.memory_space<vmem>>, vector<1x8x128xf32>
    tpu.vector_store %arg5[%c0_9, %c0_10, %c0_11], %11 {strides = array<i32>} : memref<1x8x128xf32, #tpu.memory_space<vmem>>, vector<1x8x128xf32>,
    return
  }
  func.func @transform_0(%arg0: i32) -> (i32, i32, i32) {
    %c0_i32 = arith.constant 0 : i32
    %c0_i32_0 = arith.constant 0 : i32
    %c0_i32_1 = arith.constant 0 : i32
    return %arg0, %c0_i32, %c0_i32_0 : i32, i32, i32
  }
  func.func @transform_1(%arg0: i32) -> (i32, i32) {
    %c0_i32 = arith.constant 0 : i32
    %c0_i32_0 = arith.constant 0 : i32
    %c0_i32_1 = arith.constant 0 : i32
    return %c0_i32, %c0_i32_0 : i32, i32
  }
  func.func @transform_2(%arg0: i32) -> (i32, i32) {
    %c0_i32 = arith.constant 0 : i32
    %c0_i32_0 = arith.constant 0 : i32
    %c0_i32_1 = arith.constant 0 : i32
    return %c0_i32, %c0_i32_0 : i32, i32
  }
  func.func @transform_3(%arg0: i32) -> (i32, i32, i32) {
    %c0_i32 = arith.constant 0 : i32
    %c0_i32_0 = arith.constant 0 : i32
    %c0_i32_1 = arith.constant 0 : i32
    %c0_i32_2 = arith.constant 0 : i32
    return %c0_i32, %c0_i32_0, %c0_i32_1 : i32, i32, i32
  }
  func.func @transform_4(%arg0: i32) -> (i32, i32, i32) {
    %c0_i32 = arith.constant 0 : i32
    %c0_i32_0 = arith.constant 0 : i32
    %c0_i32_1 = arith.constant 0 : i32
    return %arg0, %c0_i32, %c0_i32_0 : i32, i32, i32
  }
}

</mosaic_0001>

<llo_original>
// kernel: transformer_forward.3
$region0: #{transformer_forward.3}
  #allocation0 [shape = 'u32[]', space=smem, size = 0x4, offset = 0x4, fixed_abs, tag = 'smem constant byte address 0x4 - core index']
  #allocation1 [shape = 'u32[144,128]{1,0:T(1,128)}', space=vmem, size = 0x12000, scoped, tag = 'internal scratch']
  %s0 = inlined_call_operand.hbm [shape: f32[2,8,64], index: 0, kind: input, shape index: {}]
  %s1 = inlined_call_operand.hbm [shape: f32[64,128], index: 1, kind: input, shape index: {}]
  %s2 = inlined_call_operand.vmem [shape: f32[1,128], index: 2, kind: input, shape index: {}]
  %s3 = inlined_call_operand.vmem [shape: f32[1,8,128], index: 3, kind: input, shape index: {}]
  %s4 = inlined_call_operand.vmem [shape: f32[2,8,128], index: 4, kind: output, shape index: {}]
  %s5 = sld [smem:[#allocation0]]
  $region57: #{transformer_forward.3} parent=0
    _
  %s7 = ssub.s32 1, %s5
  %s8 = scalar_select 0, %s7, %s5
  $region1: #{transformer_forward.3} parent=0
    #allocation2 [shape = 'u8[8192]{0}', space=vmem, size = 0x2000, scoped, tag = 'input window, operand 0']
    #allocation3 [shape = 's32[2]{0}', space=sflag, size = 0x8, scoped, tag = 'scoped memory for transformer_forward.3']
    #allocation4 [shape = 'u8[32768]{0}', space=vmem, size = 0x8000, scoped, tag = 'input window, operand 1, single buffered']
    #allocation5 [shape = 's32[1]{0}', space=sflag, size = 0x4, scoped, tag = 'scoped memory for transformer_forward.3']
    %9 = vsyncpa [#allocation3], 0
    %s10 = scalar_lea.sflag [#allocation3], 1
    %11 = vsyncpa %s10, 0
    %12 = vsyncpa [#allocation5], 0
    loop: start=0, step=1, limit=4
    $region2: #{transformer_forward.3} parent=1 // loop_pre_header
      _
    $region3: #{transformer_forward.3} parent=1 // loop_header
      %s14 = sphi 0, %s18
      %p15 = scmp.ge.s32.totalorder %s14, 4
      %s24 = sphi 0, %s26
      %s27 = sphi 0, %s24
      %s28 = sphi 0, %s27
      %s44 = sphi 0, %s28
      %s48 = sphi 0, %s48
      %s50 = sphi 0, %s48
      %s51 = sphi 0, %s50
      %s65 = sphi 0, %s51
      %s69 = sphi 0, %s69
      %s71 = sphi 0, %s69
      %s72 = sphi 0, %s71
      %s86 = sphi 0, %s72
      %s90 = sphi 0, %s90
      %s92 = sphi 0, %s90
      %s93 = sphi 0, %s92
      %s107 = sphi 0, %s93
      %s113 = sphi 0, %s115
      %s116 = sphi 0, %s113
      %s117 = sphi 0, %s116
      %s133 = sphi 0, %s117
    $region4: #{transformer_forward.3} parent=1 // loop_header_branch
      %17 = sbr.rel (%p15) target = $region8
    $region5: #{transformer_forward.3} parent=1 // loop_body
      %s19 = ssub.s32 %s14, 1
      %s20 = ssub.s32 %s14, 2
      %s21 = sadd.s32 %s14, 1
      %s22 = ssub.s32 %s14, %s21
      %p23 = scmp.eq.s32.totalorder %s22, 0
      %s25 = sadd.s32 %s24, 1
      %s26 = scalar_select %p23, %s24, %s25
      %p29 = pneg %p23
      %p30 = scmp.eq.s32.totalorder %s14, 1
      %p31 = por %p29, %p30
      %p32 = scmp.ne.s32.totalorder %s24, %s27
      %p33 = scmp.eq.s32.totalorder %s14, 0
      %p34 = por %p32, %p33
      %p35 = scmp.ne.s32.totalorder %s24, %s27
      %p36 = scmp.eq.s32.totalorder %s19, 1
      %p37 = por %p35, %p36
      %p38 = scmp.ne.s32.totalorder %s27, %s28
      %p39 = scmp.eq.s32.totalorder %s19, 0
      %p40 = por %p38, %p39
      %p41 = scmp.ne.s32.totalorder %s27, %s28
      %p42 = scmp.eq.s32.totalorder %s20, 1
      %p43 = por %p41, %p42
      %p45 = scmp.ne.s32.totalorder %s28, %s44
      %p46 = scmp.eq.s32.totalorder %s20, 0
      %p47 = por %p45, %p46
      %s49 = sadd.s32 %s48, 1
      %p52 = scmp.eq.s32.totalorder %s14, 1
      %p53 = scmp.ne.s32.totalorder %s48, %s50
      %p54 = scmp.eq.s32.totalorder %s14, 0
      %p55 = por %p53, %p54
      %p56 = scmp.ne.s32.totalorder %s48, %s50
      %p57 = scmp.eq.s32.totalorder %s19, 1
      %p58 = por %p56, %p57
      %p59 = scmp.ne.s32.totalorder %s50, %s51
      %p60 = scmp.eq.s32.totalorder %s19, 0
      %p61 = por %p59, %p60
      %p62 = scmp.ne.s32.totalorder %s50, %s51
      %p63 = scmp.eq.s32.totalorder %s20, 1
      %p64 = por %p62, %p63
      %p66 = scmp.ne.s32.totalorder %s51, %s65
      %p67 = scmp.eq.s32.totalorder %s20, 0
      %p68 = por %p66, %p67
      %s70 = sadd.s32 %s69, 1
      %p73 = scmp.eq.s32.totalorder %s14, 1
      %p74 = scmp.ne.s32.totalorder %s69, %s71
      %p75 = scmp.eq.s32.totalorder %s14, 0
      %p76 = por %p74, %p75
      %p77 = scmp.ne.s32.totalorder %s69, %s71
      %p78 = scmp.eq.s32.totalorder %s19, 1
      %p79 = por %p77, %p78
      %p80 = scmp.ne.s32.totalorder %s71, %s72
      %p81 = scmp.eq.s32.totalorder %s19, 0
      %p82 = por %p80, %p81
      %p83 = scmp.ne.s32.totalorder %s71, %s72
      %p84 = scmp.eq.s32.totalorder %s20, 1
      %p85 = por %p83, %p84
      %p87 = scmp.ne.s32.totalorder %s72, %s86
      %p88 = scmp.eq.s32.totalorder %s20, 0
      %p89 = por %p87, %p88
      %s91 = sadd.s32 %s90, 1
      %p94 = scmp.eq.s32.totalorder %s14, 1
      %p95 = scmp.ne.s32.totalorder %s90, %s92
      %p96 = scmp.eq.s32.totalorder %s14, 0
      %p97 = por %p95, %p96
      %p98 = scmp.ne.s32.totalorder %s90, %s92
      %p99 = scmp.eq.s32.totalorder %s19, 1
      %p100 = por %p98, %p99
      %p101 = scmp.ne.s32.totalorder %s92, %s93
      %p102 = scmp.eq.s32.totalorder %s19, 0
      %p103 = por %p101, %p102
      %p104 = scmp.ne.s32.totalorder %s92, %s93
      %p105 = scmp.eq.s32.totalorder %s20, 1
      %p106 = por %p104, %p105
      %p108 = scmp.ne.s32.totalorder %s93, %s107
      %p109 = scmp.eq.s32.totalorder %s20, 0
      %p110 = por %p108, %p109
      %s111 = ssub.s32 %s14, %s21
      %p112 = scmp.eq.s32.totalorder %s111, 0
      %s114 = sadd.s32 %s113, 1
      %s115 = scalar_select %p112, %s113, %s114
      %p118 = pneg %p112
      %p119 = scmp.eq.s32.totalorder %s14, 1
      %p120 = por %p118, %p119
      %p121 = scmp.ne.s32.totalorder %s113, %s116
      %p122 = scmp.eq.s32.totalorder %s14, 0
      %p123 = por %p121, %p122
      %p124 = scmp.ne.s32.totalorder %s113, %s116
      %p125 = scmp.eq.s32.totalorder %s19, 1
      %p126 = por %p124, %p125
      %p127 = scmp.ne.s32.totalorder %s116, %s117
      %p128 = scmp.eq.s32.totalorder %s19, 0
      %p129 = por %p127, %p128
      %p130 = scmp.ne.s32.totalorder %s116, %s117
      %p131 = scmp.eq.s32.totalorder %s20, 1
      %p132 = por %p130, %p131
      %p134 = scmp.ne.s32.totalorder %s117, %s133
      %p135 = scmp.eq.s32.totalorder %s20, 0
      %p136 = por %p134, %p135
      %p137 = scmp.le.s32.totalorder 1, %s14
      %p138 = scmp.lt.s32.totalorder %s14, 3
      %p139 = pnand %p137, %p138
      %p140 = pneg %p139
      // Predicated region
      $region9: #{transformer_forward.3} parent=5 // pred_check
        _
      $region10: #{transformer_forward.3} parent=5 // pred_check_branch
        %142 = sbr.rel (%p139) target = $region12
      $region11: #{transformer_forward.3} parent=5 // pred_region
        %s143 = ssub.s32 %s14, 1
        // Predicated region
        $region13: #{transformer_forward.3} parent=11 // pred_check
          %p144 = pneg %p61
        $region14: #{transformer_forward.3} parent=11 // pred_check_branch
          %146 = sbr.rel (%p144) target = $region16
        $region15: #{transformer_forward.3} parent=11 // pred_region
          %s148 = ssub.s32 1024, 1024
          %149 = vsyncadd [#allocation5], %s148
          %s150 = sshll.u32 [#allocation4], 4
          %s151 = int_to_ptr.vmem [resolvable:$true] %s150
          %156 = dma.hbm_to_vmem [thread:$0]  %s1, 1024, %s151, [#allocation5], 128, 128, 8
        $region16: #{transformer_forward.3} parent=11 // pred_fallthru
          _
        // Predicated region
        $region17: #{transformer_forward.3} parent=11 // pred_check
          %p157 = pneg %p82
        $region18: #{transformer_forward.3} parent=11 // pred_check_branch
          %159 = sbr.rel (%p157) target = $region20
        $region19: #{transformer_forward.3} parent=11 // pred_region
          _
        $region20: #{transformer_forward.3} parent=11 // pred_fallthru
          _
        // Predicated region
        $region21: #{transformer_forward.3} parent=11 // pred_check
          %p160 = pneg %p103
        $region22: #{transformer_forward.3} parent=11 // pred_check_branch
          %162 = sbr.rel (%p160) target = $region24
        $region23: #{transformer_forward.3} parent=11 // pred_region
          _
        $region24: #{transformer_forward.3} parent=11 // pred_fallthru
          _
      $region12: #{transformer_forward.3} parent=5 // pred_fallthru
        _
      %p163 = scmp.lt.s32.totalorder %s14, 2
      // Predicated region
      $region25: #{transformer_forward.3} parent=5 // pred_check
        %p164 = pneg %p163
      $region26: #{transformer_forward.3} parent=5 // pred_check_branch
        %166 = sbr.rel (%p164) target = $region28
      $region27: #{transformer_forward.3} parent=5 // pred_region
        // Predicated region
        $region29: #{transformer_forward.3} parent=27 // pred_check
          %p167 = pneg %p34
        $region30: #{transformer_forward.3} parent=27 // pred_check_branch
          %169 = sbr.rel (%p167) target = $region32
        $region31: #{transformer_forward.3} parent=27 // pred_region
          %s170 = sand.u32 %s24, 1
          %s171 = scalar_lea.sflag [#allocation3], %s170
          %s172 = sand.u32 %s24, 1
          %s173 = smul.addr %s172, 8
          %s174 = scalar_lea.vmem [#allocation2], %s173
          %s176 = ssub.s32 128, 128
          %177 = vsyncadd %s171, %s176
          %s178 = smul.addr %s14, 128
          %s179 = scalar_lea.hbm %s0, %s178
          %s181 = sshll.u32 %s174, 4
          %s182 = int_to_ptr.vmem [resolvable:$true] %s181
          %184 = dma.hbm_to_vmem [thread:$0]  %s179, 128, %s182, %s171
        $region32: #{transformer_forward.3} parent=27 // pred_fallthru
          _
      $region28: #{transformer_forward.3} parent=5 // pred_fallthru
        _
      %p185 = scmp.le.s32.totalorder 1, %s14
      %p186 = scmp.lt.s32.totalorder %s14, 3
      %p187 = pnand %p185, %p186
      %p188 = pneg %p187
      // Predicated region
      $region33: #{transformer_forward.3} parent=5 // pred_check
        _
      $region34: #{transformer_forward.3} parent=5 // pred_check_branch
        %190 = sbr.rel (%p187) target = $region36
      $region35: #{transformer_forward.3} parent=5 // pred_region
        %s191 = ssub.s32 %s14, 1
        %s192 = sand.u32 %s27, 1
        %s193 = scalar_lea.sflag [#allocation3], %s192
        %s194 = sand.u32 %s27, 1
        %s195 = smul.addr %s194, 8
        %s196 = scalar_lea.vmem [#allocation2], %s195
        // Predicated region
        $region37: #{transformer_forward.3} parent=35 // pred_check
          %p197 = pneg %p40
        $region38: #{transformer_forward.3} parent=35 // pred_check_branch
          %199 = sbr.rel (%p197) target = $region40
        $region39: #{transformer_forward.3} parent=35 // pred_region
          %200 = dma.done %s193, 128
        $region40: #{transformer_forward.3} parent=35 // pred_fallthru
          _
        // Predicated region
        $region41: #{transformer_forward.3} parent=35 // pred_check
          %p201 = pneg %p61
        $region42: #{transformer_forward.3} parent=35 // pred_check_branch
          %203 = sbr.rel (%p201) target = $region44
        $region43: #{transformer_forward.3} parent=35 // pred_region
          %204 = dma.done [#allocation5], 1024
        $region44: #{transformer_forward.3} parent=35 // pred_fallthru
          _
        %s205 = sand.u32 %s27, 1
        %s206 = scalar_lea.sflag [#allocation3], %s205
        %s207 = sand.u32 %s27, 1
        %s208 = smul.addr %s207, 8
        %s209 = scalar_lea.vmem [#allocation2], %s208
        %p210 = pneg %p40
        %p211 = pneg %p37
        %p212 = pneg %p61
        %p213 = pneg %p58
        %p214 = pneg %p82
        %p215 = pneg %p79
        %p216 = pneg %p103
        %p217 = pneg %p100
        %p218 = pneg %p129
        %p219 = pneg %p126
        %p220 = scmp.lt.s32.totalorder %s19, 1
        %s221 = scalar_select %p220, %s19, 1
        %s222 = smul.addr %s221, 8
        %s223 = scalar_lea.vmem %s4, %s222
        %p224 = scmp.lt.s32.totalorder %s19, 1
        %s225 = scalar_select %p224, %s19, 1
        %s226 = smul.addr %s225, 8
        %s227 = scalar_lea.vmem %s4, %s226
        %v228 = vld [vmem:[%s196] sm:$0xff]
        %v229 = vld [vmem:[#allocation4] sm:$0xff]
        %v230 = vld [vmem:[#allocation4 + $0x8] sm:$0xff]
        %v231 = vld [vmem:[#allocation4 + $0x10] sm:$0xff]
        %v232 = vld [vmem:[#allocation4 + $0x18] sm:$0xff]
        %v233 = vld [vmem:[#allocation4 + $0x20] sm:$0xff]
        %v234 = vld [vmem:[#allocation4 + $0x28] sm:$0xff]
        %v235 = vld [vmem:[#allocation4 + $0x30] sm:$0xff]
        %v236 = vld [vmem:[#allocation4 + $0x38] sm:$0xff]
        %v237 = vld [vmem:[%s2] sm:$0x1]
        %v239 = vlaneseq
        %v240 = vshrl.u32 %v239, 7
        %v241 = vsub.s32 0, %v240
        %v242 = vrot.slane %v237, %v241
        %vm244 = vcmask 523264
        %v246 = vsel %vm244, %v228, 0
        %248 = vmatprep.subr.mxu0 0.0
        %249 = vmatpush1.msra.mxu0 %v229
        %250 = vmatprep.subr.mxu0 0.0
        %251 = vmatpush1.msra.mxu0 %v230
        %252 = vmatprep.subr.mxu0 0.0
        %253 = vmatpush1.msra.mxu0 %v231
        %254 = vmatprep.subr.mxu0 0.0
        %255 = vmatpush1.msra.mxu0 %v232
        %256 = vmatprep.subr.mxu0 0.0
        %257 = vmatpush1.msra.mxu0 %v233
        %258 = vmatprep.subr.mxu0 0.0
        %259 = vmatpush1.msra.mxu0 %v234
        %260 = vmatprep.subr.mxu0 0.0
        %261 = vmatpush1.msra.mxu0 %v235
        %262 = vmatprep.subr.mxu0 0.0
        %263 = vmatpush1.msra.mxu0 %v236
        %264 = vmatprep.subr.mxu0 0.0
        %265 = vmatpush1.msra.mxu0 0.0
        %266 = vmatprep.subr.mxu0 0.0
        %267 = vmatpush1.msra.mxu0 0.0
        %268 = vmatprep.subr.mxu0 0.0
        %269 = vmatpush1.msra.mxu0 0.0
        %270 = vmatprep.subr.mxu0 0.0
        %271 = vmatpush1.msra.mxu0 0.0
        %272 = vmatprep.subr.mxu0 0.0
        %273 = vmatpush1.msra.mxu0 0.0
        %274 = vmatprep.subr.mxu0 0.0
        %275 = vmatpush1.msra.mxu0 0.0
        %276 = vmatprep.subr.mxu0 0.0
        %277 = vmatpush1.msra.mxu0 0.0
        %278 = vmatprep.subr.mxu0 0.0
        %279 = vmatpush1.msra.mxu0 0.0
        %280 = vmatprep.subr.mxu0 0.0
        %281 = vmatpush1.msra.mxu0 0.0
        %282 = vmatprep.subr.mxu0 0.0
        %283 = vmatpush1.msra.mxu0 0.0
        %284 = vmatprep.subr.mxu0 0.0
        %285 = vmatpush1.msra.mxu0 0.0
        %286 = vmatprep.subr.mxu0 0.0
        %287 = vmatpush1.msra.mxu0 0.0
        %288 = vmatprep.subr.mxu0 0.0
        %289 = vmatpush1.msra.mxu0 0.0
        %290 = vmatprep.subr.mxu0 0.0
        %291 = vmatpush1.msra.mxu0 0.0
        %292 = vmatprep.subr.mxu0 0.0
        %293 = vmatpush1.msra.mxu0 0.0
        %294 = vmatprep.subr.mxu0 0.0
        %295 = vmatpush1.msra.mxu0 0.0
        %296 = vmatprep.subr.mxu0 0.0
        %297 = vmatpush1.msra.mxu0 0.0
        %298 = vmatprep.subr.mxu0 0.0
        %299 = vmatpush1.msra.mxu0 0.0
        %300 = vmatprep.subr.mxu0 0.0
        %301 = vmatpush1.msra.mxu0 0.0
        %302 = vmatprep.subr.mxu0 0.0
        %303 = vmatpush1.msra.mxu0 0.0
        %304 = vmatprep.subr.mxu0 0.0
        %305 = vmatpush1.msra.mxu0 0.0
        %306 = vmatprep.subr.mxu0 0.0
        %307 = vmatpush1.msra.mxu0 0.0
        %308 = vmatprep.subr.mxu0 0.0
        %309 = vmatpush1.msra.mxu0 0.0
        %310 = vmatprep.subr.mxu0 0.0
        %311 = vmatpush1.msra.mxu0 0.0
        %312 = vmatprep.mubr.f32.mxu0 0.0
        %313 = vmatmul.mubr.f32.gmra.mrb[0].mxu0 %v246
        %v314 = vpop.f32.mrb[0].mxu0
        %v315 = vadd.f32 %v242, %v314
        %v316 = vpop.f32.mrb[0].mxu0
        %317 = vdwg.mxu0
        %v318 = vld [vmem:[%s3] sm:$0xff]
        %v319 = vadd.f32 %v315, %v318
        %320 = vst [vmem:[%s227] sm:$0xff] %v319
        %p321 = scmp.lt.s32.totalorder %s19, 1
        %s322 = scalar_select %p321, %s19, 1
        %s323 = smul.addr %s322, 8
        %s324 = scalar_lea.vmem %s4, %s323
        // Predicated region
        $region45: #{transformer_forward.3} parent=35 // pred_check
          %p325 = pneg %p126
        $region46: #{transformer_forward.3} parent=35 // pred_check_branch
          %327 = sbr.rel (%p325) target = $region48
        $region47: #{transformer_forward.3} parent=35 // pred_region
          _
        $region48: #{transformer_forward.3} parent=35 // pred_fallthru
          _
      $region36: #{transformer_forward.3} parent=5 // pred_fallthru
        _
      %p328 = scmp.le.s32.totalorder 2, %s14
      // Predicated region
      $region49: #{transformer_forward.3} parent=5 // pred_check
        %p329 = pneg %p328
      $region50: #{transformer_forward.3} parent=5 // pred_check_branch
        %331 = sbr.rel (%p329) target = $region52
      $region51: #{transformer_forward.3} parent=5 // pred_region
        %s332 = ssub.s32 %s14, 2
        // Predicated region
        $region53: #{transformer_forward.3} parent=51 // pred_check
          %p333 = pneg %p132
        $region54: #{transformer_forward.3} parent=51 // pred_check_branch
          %335 = sbr.rel (%p333) target = $region56
        $region55: #{transformer_forward.3} parent=51 // pred_region
          %p336 = scmp.lt.s32.totalorder %s20, 1
          %s337 = scalar_select %p336, %s20, 1
          %s338 = smul.addr %s337, 8
          %s339 = scalar_lea.vmem %s4, %s338
        $region56: #{transformer_forward.3} parent=51 // pred_fallthru
          _
      $region52: #{transformer_forward.3} parent=5 // pred_fallthru
        _
    $region6: #{transformer_forward.3} parent=1 // loop_footer
      %s18 = sadd.s32 1, %s14
    $region7: #{transformer_forward.3} parent=1 // loop_footer_branch
      %13 = sbr.rel target = $region3
    $region8: #{transformer_forward.3} parent=1 // loop_exit
      _
    %340 = vsyncpa [#allocation3], 1
    %s341 = scalar_lea.sflag [#allocation3], 1
    %342 = vsyncpa %s341, 1
    %343 = vsyncpa [#allocation5], 1

// kernel: transformer_forward.5
$region0: #{transformer_forward.5}
  #allocation0 [shape = 'u32[]', space=smem, size = 0x4, offset = 0x4, fixed_abs, tag = 'smem constant byte address 0x4 - core index']
  #allocation1 [shape = 'u32[144,128]{1,0:T(1,128)}', space=vmem, size = 0x12000, scoped, tag = 'internal scratch']
  %s0 = inlined_call_operand.vmem [shape: f32[2,8,128], index: 0, kind: input, shape index: {}]
  %s1 = inlined_call_operand.vmem [shape: f32[128,384], index: 1, kind: input, shape index: {}]
  %s2 = inlined_call_operand.vmem [shape: f32[128,128], index: 2, kind: input, shape index: {}]
  %s3 = inlined_call_operand.vmem [shape: f32[1,128], index: 3, kind: input, shape index: {}]
  %s4 = inlined_call_operand.vmem [shape: f32[128,256], index: 4, kind: input, shape index: {}]
  %s5 = inlined_call_operand.vmem [shape: f32[1,256], index: 5, kind: input, shape index: {}]
  %s6 = inlined_call_operand.vmem [shape: f32[256,128], index: 6, kind: input, shape index: {}]
  %s7 = inlined_call_operand.vmem [shape: f32[1,128], index: 7, kind: input, shape index: {}]
  %s8 = inlined_call_operand.vmem [shape: f32[2,8,128], index: 8, kind: output, shape index: {}]
  %s9 = sld [smem:[#allocation0]]
  $region65: #{transformer_forward.5} parent=0
    _
  %s11 = ssub.s32 1, %s9
  %s12 = scalar_select 0, %s11, %s9
  loop: start=0, step=1, limit=4
  $region2: #{transformer_forward.5} parent=0 // loop_pre_header
    _
  $region3: #{transformer_forward.5} parent=0 // loop_header
    %s14 = sphi 0, %s18
    %p15 = scmp.ge.s32.totalorder %s14, 4
    %s24 = sphi 0, %s26
    %s27 = sphi 0, %s24
    %s28 = sphi 0, %s27
    %s44 = sphi 0, %s28
    %s48 = sphi 0, %s48
    %s50 = sphi 0, %s48
    %s51 = sphi 0, %s50
    %s65 = sphi 0, %s51
    %s69 = sphi 0, %s69
    %s71 = sphi 0, %s69
    %s72 = sphi 0, %s71
    %s86 = sphi 0, %s72
    %s90 = sphi 0, %s90
    %s92 = sphi 0, %s90
    %s93 = sphi 0, %s92
    %s107 = sphi 0, %s93
    %s111 = sphi 0, %s111
    %s113 = sphi 0, %s111
    %s114 = sphi 0, %s113
    %s128 = sphi 0, %s114
    %s132 = sphi 0, %s132
    %s134 = sphi 0, %s132
    %s135 = sphi 0, %s134
    %s149 = sphi 0, %s135
    %s153 = sphi 0, %s153
    %s155 = sphi 0, %s153
    %s156 = sphi 0, %s155
    %s170 = sphi 0, %s156
    %s174 = sphi 0, %s174
    %s176 = sphi 0, %s174
    %s177 = sphi 0, %s176
    %s191 = sphi 0, %s177
    %s197 = sphi 0, %s199
    %s200 = sphi 0, %s197
    %s201 = sphi 0, %s200
    %s217 = sphi 0, %s201
  $region4: #{transformer_forward.5} parent=0 // loop_header_branch
    %17 = sbr.rel (%p15) target = $region8
  $region5: #{transformer_forward.5} parent=0 // loop_body
    %s19 = ssub.s32 %s14, 1
    %s20 = ssub.s32 %s14, 2
    %s21 = sadd.s32 %s14, 1
    %s22 = ssub.s32 %s14, %s21
    %p23 = scmp.eq.s32.totalorder %s22, 0
    %s25 = sadd.s32 %s24, 1
    %s26 = scalar_select %p23, %s24, %s25
    %p29 = pneg %p23
    %p30 = scmp.eq.s32.totalorder %s14, 1
    %p31 = por %p29, %p30
    %p32 = scmp.ne.s32.totalorder %s24, %s27
    %p33 = scmp.eq.s32.totalorder %s14, 0
    %p34 = por %p32, %p33
    %p35 = scmp.ne.s32.totalorder %s24, %s27
    %p36 = scmp.eq.s32.totalorder %s19, 1
    %p37 = por %p35, %p36
    %p38 = scmp.ne.s32.totalorder %s27, %s28
    %p39 = scmp.eq.s32.totalorder %s19, 0
    %p40 = por %p38, %p39
    %p41 = scmp.ne.s32.totalorder %s27, %s28
    %p42 = scmp.eq.s32.totalorder %s20, 1
    %p43 = por %p41, %p42
    %p45 = scmp.ne.s32.totalorder %s28, %s44
    %p46 = scmp.eq.s32.totalorder %s20, 0
    %p47 = por %p45, %p46
    %s49 = sadd.s32 %s48, 1
    %p52 = scmp.eq.s32.totalorder %s14, 1
    %p53 = scmp.ne.s32.totalorder %s48, %s50
    %p54 = scmp.eq.s32.totalorder %s14, 0
    %p55 = por %p53, %p54
    %p56 = scmp.ne.s32.totalorder %s48, %s50
    %p57 = scmp.eq.s32.totalorder %s19, 1
    %p58 = por %p56, %p57
    %p59 = scmp.ne.s32.totalorder %s50, %s51
    %p60 = scmp.eq.s32.totalorder %s19, 0
    %p61 = por %p59, %p60
    %p62 = scmp.ne.s32.totalorder %s50, %s51
    %p63 = scmp.eq.s32.totalorder %s20, 1
    %p64 = por %p62, %p63
    %p66 = scmp.ne.s32.totalorder %s51, %s65
    %p67 = scmp.eq.s32.totalorder %s20, 0
    %p68 = por %p66, %p67
    %s70 = sadd.s32 %s69, 1
    %p73 = scmp.eq.s32.totalorder %s14, 1
    %p74 = scmp.ne.s32.totalorder %s69, %s71
    %p75 = scmp.eq.s32.totalorder %s14, 0
    %p76 = por %p74, %p75
    %p77 = scmp.ne.s32.totalorder %s69, %s71
    %p78 = scmp.eq.s32.totalorder %s19, 1
    %p79 = por %p77, %p78
    %p80 = scmp.ne.s32.totalorder %s71, %s72
    %p81 = scmp.eq.s32.totalorder %s19, 0
    %p82 = por %p80, %p81
    %p83 = scmp.ne.s32.totalorder %s71, %s72
    %p84 = scmp.eq.s32.totalorder %s20, 1
    %p85 = por %p83, %p84
    %p87 = scmp.ne.s32.totalorder %s72, %s86
    %p88 = scmp.eq.s32.totalorder %s20, 0
    %p89 = por %p87, %p88
    %s91 = sadd.s32 %s90, 1
    %p94 = scmp.eq.s32.totalorder %s14, 1
    %p95 = scmp.ne.s32.totalorder %s90, %s92
    %p96 = scmp.eq.s32.totalorder %s14, 0
    %p97 = por %p95, %p96
    %p98 = scmp.ne.s32.totalorder %s90, %s92
    %p99 = scmp.eq.s32.totalorder %s19, 1
    %p100 = por %p98, %p99
    %p101 = scmp.ne.s32.totalorder %s92, %s93
    %p102 = scmp.eq.s32.totalorder %s19, 0
    %p103 = por %p101, %p102
    %p104 = scmp.ne.s32.totalorder %s92, %s93
    %p105 = scmp.eq.s32.totalorder %s20, 1
    %p106 = por %p104, %p105
    %p108 = scmp.ne.s32.totalorder %s93, %s107
    %p109 = scmp.eq.s32.totalorder %s20, 0
    %p110 = por %p108, %p109
    %s112 = sadd.s32 %s111, 1
    %p115 = scmp.eq.s32.totalorder %s14, 1
    %p116 = scmp.ne.s32.totalorder %s111, %s113
    %p117 = scmp.eq.s32.totalorder %s14, 0
    %p118 = por %p116, %p117
    %p119 = scmp.ne.s32.totalorder %s111, %s113
    %p120 = scmp.eq.s32.totalorder %s19, 1
    %p121 = por %p119, %p120
    %p122 = scmp.ne.s32.totalorder %s113, %s114
    %p123 = scmp.eq.s32.totalorder %s19, 0
    %p124 = por %p122, %p123
    %p125 = scmp.ne.s32.totalorder %s113, %s114
    %p126 = scmp.eq.s32.totalorder %s20, 1
    %p127 = por %p125, %p126
    %p129 = scmp.ne.s32.totalorder %s114, %s128
    %p130 = scmp.eq.s32.totalorder %s20, 0
    %p131 = por %p129, %p130
    %s133 = sadd.s32 %s132, 1
    %p136 = scmp.eq.s32.totalorder %s14, 1
    %p137 = scmp.ne.s32.totalorder %s132, %s134
    %p138 = scmp.eq.s32.totalorder %s14, 0
    %p139 = por %p137, %p138
    %p140 = scmp.ne.s32.totalorder %s132, %s134
    %p141 = scmp.eq.s32.totalorder %s19, 1
    %p142 = por %p140, %p141
    %p143 = scmp.ne.s32.totalorder %s134, %s135
    %p144 = scmp.eq.s32.totalorder %s19, 0
    %p145 = por %p143, %p144
    %p146 = scmp.ne.s32.totalorder %s134, %s135
    %p147 = scmp.eq.s32.totalorder %s20, 1
    %p148 = por %p146, %p147
    %p150 = scmp.ne.s32.totalorder %s135, %s149
    %p151 = scmp.eq.s32.totalorder %s20, 0
    %p152 = por %p150, %p151
    %s154 = sadd.s32 %s153, 1
    %p157 = scmp.eq.s32.totalorder %s14, 1
    %p158 = scmp.ne.s32.totalorder %s153, %s155
    %p159 = scmp.eq.s32.totalorder %s14, 0
    %p160 = por %p158, %p159
    %p161 = scmp.ne.s32.totalorder %s153, %s155
    %p162 = scmp.eq.s32.totalorder %s19, 1
    %p163 = por %p161, %p162
    %p164 = scmp.ne.s32.totalorder %s155, %s156
    %p165 = scmp.eq.s32.totalorder %s19, 0
    %p166 = por %p164, %p165
    %p167 = scmp.ne.s32.totalorder %s155, %s156
    %p168 = scmp.eq.s32.totalorder %s20, 1
    %p169 = por %p167, %p168
    %p171 = scmp.ne.s32.totalorder %s156, %s170
    %p172 = scmp.eq.s32.totalorder %s20, 0
    %p173 = por %p171, %p172
    %s175 = sadd.s32 %s174, 1
    %p178 = scmp.eq.s32.totalorder %s14, 1
    %p179 = scmp.ne.s32.totalorder %s174, %s176
    %p180 = scmp.eq.s32.totalorder %s14, 0
    %p181 = por %p179, %p180
    %p182 = scmp.ne.s32.totalorder %s174, %s176
    %p183 = scmp.eq.s32.totalorder %s19, 1
    %p184 = por %p182, %p183
    %p185 = scmp.ne.s32.totalorder %s176, %s177
    %p186 = scmp.eq.s32.totalorder %s19, 0
    %p187 = por %p185, %p186
    %p188 = scmp.ne.s32.totalorder %s176, %s177
    %p189 = scmp.eq.s32.totalorder %s20, 1
    %p190 = por %p188, %p189
    %p192 = scmp.ne.s32.totalorder %s177, %s191
    %p193 = scmp.eq.s32.totalorder %s20, 0
    %p194 = por %p192, %p193
    %s195 = ssub.s32 %s14, %s21
    %p196 = scmp.eq.s32.totalorder %s195, 0
    %s198 = sadd.s32 %s197, 1
    %s199 = scalar_select %p196, %s197, %s198
    %p202 = pneg %p196
    %p203 = scmp.eq.s32.totalorder %s14, 1
    %p204 = por %p202, %p203
    %p205 = scmp.ne.s32.totalorder %s197, %s200
    %p206 = scmp.eq.s32.totalorder %s14, 0
    %p207 = por %p205, %p206
    %p208 = scmp.ne.s32.totalorder %s197, %s200
    %p209 = scmp.eq.s32.totalorder %s19, 1
    %p210 = por %p208, %p209
    %p211 = scmp.ne.s32.totalorder %s200, %s201
    %p212 = scmp.eq.s32.totalorder %s19, 0
    %p213 = por %p211, %p212
    %p214 = scmp.ne.s32.totalorder %s200, %s201
    %p215 = scmp.eq.s32.totalorder %s20, 1
    %p216 = por %p214, %p215
    %p218 = scmp.ne.s32.totalorder %s201, %s217
    %p219 = scmp.eq.s32.totalorder %s20, 0
    %p220 = por %p218, %p219
    %p221 = scmp.le.s32.totalorder 1, %s14
    %p222 = scmp.lt.s32.totalorder %s14, 3
    %p223 = pnand %p221, %p222
    %p224 = pneg %p223
    // Predicated region
    $region9: #{transformer_forward.5} parent=5 // pred_check
      _
    $region10: #{transformer_forward.5} parent=5 // pred_check_branch
      %226 = sbr.rel (%p223) target = $region12
    $region11: #{transformer_forward.5} parent=5 // pred_region
      %s227 = ssub.s32 %s14, 1
      // Predicated region
      $region13: #{transformer_forward.5} parent=11 // pred_check
        %p228 = pneg %p61
      $region14: #{transformer_forward.5} parent=11 // pred_check_branch
        %230 = sbr.rel (%p228) target = $region16
      $region15: #{transformer_forward.5} parent=11 // pred_region
        _
      $region16: #{transformer_forward.5} parent=11 // pred_fallthru
        _
      // Predicated region
      $region17: #{transformer_forward.5} parent=11 // pred_check
        %p231 = pneg %p82
      $region18: #{transformer_forward.5} parent=11 // pred_check_branch
        %233 = sbr.rel (%p231) target = $region20
      $region19: #{transformer_forward.5} parent=11 // pred_region
        _
      $region20: #{transformer_forward.5} parent=11 // pred_fallthru
        _
      // Predicated region
      $region21: #{transformer_forward.5} parent=11 // pred_check
        %p234 = pneg %p103
      $region22: #{transformer_forward.5} parent=11 // pred_check_branch
        %236 = sbr.rel (%p234) target = $region24
      $region23: #{transformer_forward.5} parent=11 // pred_region
        _
      $region24: #{transformer_forward.5} parent=11 // pred_fallthru
        _
      // Predicated region
      $region25: #{transformer_forward.5} parent=11 // pred_check
        %p237 = pneg %p124
      $region26: #{transformer_forward.5} parent=11 // pred_check_branch
        %239 = sbr.rel (%p237) target = $region28
      $region27: #{transformer_forward.5} parent=11 // pred_region
        _
      $region28: #{transformer_forward.5} parent=11 // pred_fallthru
        _
      // Predicated region
      $region29: #{transformer_forward.5} parent=11 // pred_check
        %p240 = pneg %p145
      $region30: #{transformer_forward.5} parent=11 // pred_check_branch
        %242 = sbr.rel (%p240) target = $region32
      $region31: #{transformer_forward.5} parent=11 // pred_region
        _
      $region32: #{transformer_forward.5} parent=11 // pred_fallthru
        _
      // Predicated region
      $region33: #{transformer_forward.5} parent=11 // pred_check
        %p243 = pneg %p166
      $region34: #{transformer_forward.5} parent=11 // pred_check_branch
        %245 = sbr.rel (%p243) target = $region36
      $region35: #{transformer_forward.5} parent=11 // pred_region
        _
      $region36: #{transformer_forward.5} parent=11 // pred_fallthru
        _
      // Predicated region
      $region37: #{transformer_forward.5} parent=11 // pred_check
        %p246 = pneg %p187
      $region38: #{transformer_forward.5} parent=11 // pred_check_branch
        %248 = sbr.rel (%p246) target = $region40
      $region39: #{transformer_forward.5} parent=11 // pred_region
        _
      $region40: #{transformer_forward.5} parent=11 // pred_fallthru
        _
    $region12: #{transformer_forward.5} parent=5 // pred_fallthru
      _
    %p249 = scmp.lt.s32.totalorder %s14, 2
    // Predicated region
    $region41: #{transformer_forward.5} parent=5 // pred_check
      %p250 = pneg %p249
    $region42: #{transformer_forward.5} parent=5 // pred_check_branch
      %252 = sbr.rel (%p250) target = $region44
    $region43: #{transformer_forward.5} parent=5 // pred_region
      // Predicated region
      $region45: #{transformer_forward.5} parent=43 // pred_check
        %p253 = pneg %p34
      $region46: #{transformer_forward.5} parent=43 // pred_check_branch
        %255 = sbr.rel (%p253) target = $region48
      $region47: #{transformer_forward.5} parent=43 // pred_region
        %p256 = scmp.lt.s32.totalorder %s14, 1
        %s257 = scalar_select %p256, %s14, 1
        %s258 = smul.addr %s257, 8
        %s259 = scalar_lea.vmem %s0, %s258
      $region48: #{transformer_forward.5} parent=43 // pred_fallthru
        _
    $region44: #{transformer_forward.5} parent=5 // pred_fallthru
      _
    %p260 = scmp.le.s32.totalorder 1, %s14
    %p261 = scmp.lt.s32.totalorder %s14, 3
    %p262 = pnand %p260, %p261
    %p263 = pneg %p262
    // Predicated region
    $region49: #{transformer_forward.5} parent=5 // pred_check
      _
    $region50: #{transformer_forward.5} parent=5 // pred_check_branch
      %265 = sbr.rel (%p262) target = $region52
    $region51: #{transformer_forward.5} parent=5 // pred_region
      %s266 = ssub.s32 %s14, 1
      %p267 = scmp.lt.s32.totalorder %s19, 1
      %s268 = scalar_select %p267, %s19, 1
      %s269 = smul.addr %s268, 8
      %s270 = scalar_lea.vmem %s0, %s269
      %p271 = pneg %p40
      %p272 = pneg %p37
      %p273 = pneg %p61
      %p274 = pneg %p58
      %p275 = pneg %p82
      %p276 = pneg %p79
      %p277 = pneg %p103
      %p278 = pneg %p100
      %p279 = pneg %p124
      %p280 = pneg %p121
      %p281 = pneg %p145
      %p282 = pneg %p142
      %p283 = pneg %p166
      %p284 = pneg %p163
      %p285 = pneg %p187
      %p286 = pneg %p184
      %p287 = pneg %p213
      %p288 = pneg %p210
      %p289 = scmp.lt.s32.totalorder %s19, 1
      %s290 = scalar_select %p289, %s19, 1
      %s291 = smul.addr %s290, 8
      %s292 = scalar_lea.vmem %s8, %s291
      %p293 = scmp.lt.s32.totalorder %s19, 1
      %s294 = scalar_select %p293, %s19, 1
      %s295 = smul.addr %s294, 8
      %s296 = scalar_lea.vmem %s0, %s295
      %p297 = scmp.lt.s32.totalorder %s19, 1
      %s298 = scalar_select %p297, %s19, 1
      %s299 = smul.addr %s298, 8
      %s300 = scalar_lea.vmem %s8, %s299
      %v301 = vld [vmem:[%s296] sm:$0xff]
      %302 = vadd.xlane.f32.xlu0 %v301
      %v303 = vpop.xlane.xlu0 %302
      %v304 = vrcp.pop 128.0
      %v305 = vmul.f32 %v303, %v304
      %v306 = vsub.f32 %v301, %v305
      %v307 = vmul.f32 %v306, %v306
      %308 = vadd.xlane.f32.xlu0 %v307
      %v309 = vpop.xlane.xlu0 %308
      %v310 = vmul.f32 %v309, %v304
      %v311 = vadd.f32 %v310, 1e-05
      %v312 = vrsqrt.pop %v311
      %v313 = vmul.f32 %v306, %v312
      %v314 = vld [vmem:[%s1] sm:$0xff]
      %v315 = vld [vmem:[%s1 + $0x8] sm:$0xff]
      %v316 = vld [vmem:[%s1 + $0x10] sm:$0xff]
      %v317 = vld [vmem:[%s1 + $0x18] sm:$0xff]
      %v318 = vld [vmem:[%s1 + $0x20] sm:$0xff]
      %v319 = vld [vmem:[%s1 + $0x28] sm:$0xff]
      %v320 = vld [vmem:[%s1 + $0x30] sm:$0xff]
      %v321 = vld [vmem:[%s1 + $0x38] sm:$0xff]
      %v322 = vld [vmem:[%s1 + $0x40] sm:$0xff]
      %v323 = vld [vmem:[%s1 + $0x48] sm:$0xff]
      %v324 = vld [vmem:[%s1 + $0x50] sm:$0xff]
      %v325 = vld [vmem:[%s1 + $0x58] sm:$0xff]
      %v326 = vld [vmem:[%s1 + $0x60] sm:$0xff]
      %v327 = vld [vmem:[%s1 + $0x68] sm:$0xff]
      %v328 = vld [vmem:[%s1 + $0x70] sm:$0xff]
      %v329 = vld [vmem:[%s1 + $0x78] sm:$0xff]
      %v330 = vld [vmem:[%s1 + $0x80] sm:$0xff]
      %v331 = vld [vmem:[%s1 + $0x88] sm:$0xff]
      %v332 = vld [vmem:[%s1 + $0x90] sm:$0xff]
      %v333 = vld [vmem:[%s1 + $0x98] sm:$0xff]
      %v334 = vld [vmem:[%s1 + $0xa0] sm:$0xff]
      %v335 = vld [vmem:[%s1 + $0xa8] sm:$0xff]
      %v336 = vld [vmem:[%s1 + $0xb0] sm:$0xff]
      %v337 = vld [vmem:[%s1 + $0xb8] sm:$0xff]
      %v338 = vld [vmem:[%s1 + $0xc0] sm:$0xff]
      %v339 = vld [vmem:[%s1 + $0xc8] sm:$0xff]
      %v340 = vld [vmem:[%s1 + $0xd0] sm:$0xff]
      %v341 = vld [vmem:[%s1 + $0xd8] sm:$0xff]
      %v342 = vld [vmem:[%s1 + $0xe0] sm:$0xff]
      %v343 = vld [vmem:[%s1 + $0xe8] sm:$0xff]
      %v344 = vld [vmem:[%s1 + $0xf0] sm:$0xff]
      %v345 = vld [vmem:[%s1 + $0xf8] sm:$0xff]
      %v346 = vld [vmem:[%s1 + $0x100] sm:$0xff]
      %v347 = vld [vmem:[%s1 + $0x108] sm:$0xff]
      %v348 = vld [vmem:[%s1 + $0x110] sm:$0xff]
      %v349 = vld [vmem:[%s1 + $0x118] sm:$0xff]
      %v350 = vld [vmem:[%s1 + $0x120] sm:$0xff]
      %v351 = vld [vmem:[%s1 + $0x128] sm:$0xff]
      %v352 = vld [vmem:[%s1 + $0x130] sm:$0xff]
      %v353 = vld [vmem:[%s1 + $0x138] sm:$0xff]
      %v354 = vld [vmem:[%s1 + $0x140] sm:$0xff]
      %v355 = vld [vmem:[%s1 + $0x148] sm:$0xff]
      %v356 = vld [vmem:[%s1 + $0x150] sm:$0xff]
      %v357 = vld [vmem:[%s1 + $0x158] sm:$0xff]
      %v358 = vld [vmem:[%s1 + $0x160] sm:$0xff]
      %v359 = vld [vmem:[%s1 + $0x168] sm:$0xff]
      %v360 = vld [vmem:[%s1 + $0x170] sm:$0xff]
      %v361 = vld [vmem:[%s1 + $0x178] sm:$0xff]
      %362 = vmatprep.subr.mxu0 %v315
      %363 = vmatpush1.msra.mxu0 %v314
      %364 = vmatprep.subr.mxu0 %v318
      %365 = vmatpush1.msra.mxu0 %v317
      %366 = vmatprep.subr.mxu0 %v321
      %367 = vmatpush1.msra.mxu0 %v320
      %368 = vmatprep.subr.mxu0 %v324
      %369 = vmatpush1.msra.mxu0 %v323
      %370 = vmatprep.subr.mxu0 %v327
      %371 = vmatpush1.msra.mxu0 %v326
      %372 = vmatprep.subr.mxu0 %v330
      %373 = vmatpush1.msra.mxu0 %v329
      %374 = vmatprep.subr.mxu0 %v333
      %375 = vmatpush1.msra.mxu0 %v332
      %376 = vmatprep.subr.mxu0 %v336
      %377 = vmatpush1.msra.mxu0 %v335
      %378 = vmatprep.subr.mxu0 %v339
      %379 = vmatpush1.msra.mxu0 %v338
      %380 = vmatprep.subr.mxu0 %v342
      %381 = vmatpush1.msra.mxu0 %v341
      %382 = vmatprep.subr.mxu0 %v345
      %383 = vmatpush1.msra.mxu0 %v344
      %384 = vmatprep.subr.mxu0 %v348
      %385 = vmatpush1.msra.mxu0 %v347
      %386 = vmatprep.subr.mxu0 %v351
      %387 = vmatpush1.msra.mxu0 %v350
      %388 = vmatprep.subr.mxu0 %v354
      %389 = vmatpush1.msra.mxu0 %v353
      %390 = vmatprep.subr.mxu0 %v357
      %391 = vmatpush1.msra.mxu0 %v356
      %392 = vmatprep.subr.mxu0 %v360
      %393 = vmatpush1.msra.mxu0 %v359
      %394 = vmatprep.subr.mxu0 0.0
      %395 = vmatpush1.msra.mxu0 0.0
      %396 = vmatprep.subr.mxu0 0.0
      %397 = vmatpush1.msra.mxu0 0.0
      %398 = vmatprep.subr.mxu0 0.0
      %399 = vmatpush1.msra.mxu0 0.0
      %400 = vmatprep.subr.mxu0 0.0
      %401 = vmatpush1.msra.mxu0 0.0
      %402 = vmatprep.subr.mxu0 0.0
      %403 = vmatpush1.msra.mxu0 0.0
      %404 = vmatprep.subr.mxu0 0.0
      %405 = vmatpush1.msra.mxu0 0.0
      %406 = vmatprep.subr.mxu0 0.0
      %407 = vmatpush1.msra.mxu0 0.0
      %408 = vmatprep.subr.mxu0 0.0
      %409 = vmatpush1.msra.mxu0 0.0
      %410 = vmatprep.subr.mxu0 0.0
      %411 = vmatpush1.msra.mxu0 0.0
      %412 = vmatprep.subr.mxu0 0.0
      %413 = vmatpush1.msra.mxu0 0.0
      %414 = vmatprep.subr.mxu0 0.0
      %415 = vmatpush1.msra.mxu0 0.0
      %416 = vmatprep.subr.mxu0 0.0
      %417 = vmatpush1.msra.mxu0 0.0
      %418 = vmatprep.subr.mxu0 0.0
      %419 = vmatpush1.msra.mxu0 0.0
      %420 = vmatprep.subr.mxu0 0.0
      %421 = vmatpush1.msra.mxu0 0.0
      %422 = vmatprep.subr.mxu0 0.0
      %423 = vmatpush1.msra.mxu0 0.0
      %424 = vmatprep.subr.mxu0 0.0
      %425 = vmatpush1.msra.mxu0 0.0
      %426 = vmatprep.mubr.f32.mxu0 0.0
      %427 = vmatmul.mubr.f32.gmra.mrb[0].mxu0 %v313
      %v428 = vpop.f32.mrb[0].mxu0
      %v429 = vadd.f32 0.0, %v428
      %v430 = vpop.f32.mrb[0].mxu0
      %v431 = vadd.f32 0.0, %v430
      %432 = vdwg.mxu0
      %433 = vmatprep.subr.mxu0 0.0
      %434 = vmatpush1.msra.mxu0 %v316
      %435 = vmatprep.subr.mxu0 0.0
      %436 = vmatpush1.msra.mxu0 %v319
      %437 = vmatprep.subr.mxu0 0.0
      %438 = vmatpush1.msra.mxu0 %v322
      %439 = vmatprep.subr.mxu0 0.0
      %440 = vmatpush1.msra.mxu0 %v325
      %441 = vmatprep.subr.mxu0 0.0
      %442 = vmatpush1.msra.mxu0 %v328
      %443 = vmatprep.subr.mxu0 0.0
      %444 = vmatpush1.msra.mxu0 %v331
      %445 = vmatprep.subr.mxu0 0.0
      %446 = vmatpush1.msra.mxu0 %v334
      %447 = vmatprep.subr.mxu0 0.0
      %448 = vmatpush1.msra.mxu0 %v337
      %449 = vmatprep.subr.mxu0 0.0
      %450 = vmatpush1.msra.mxu0 %v340
      %451 = vmatprep.subr.mxu0 0.0
      %452 = vmatpush1.msra.mxu0 %v343
      %453 = vmatprep.subr.mxu0 0.0
      %454 = vmatpush1.msra.mxu0 %v346
      %455 = vmatprep.subr.mxu0 0.0
      %456 = vmatpush1.msra.mxu0 %v349
      %457 = vmatprep.subr.mxu0 0.0
      %458 = vmatpush1.msra.mxu0 %v352
      %459 = vmatprep.subr.mxu0 0.0
      %460 = vmatpush1.msra.mxu0 %v355
      %461 = vmatprep.subr.mxu0 0.0
      %462 = vmatpush1.msra.mxu0 %v358
      %463 = vmatprep.subr.mxu0 0.0
      %464 = vmatpush1.msra.mxu0 %v361
      %465 = vmatprep.subr.mxu0 0.0
      %466 = vmatpush1.msra.mxu0 0.0
      %467 = vmatprep.subr.mxu0 0.0
      %468 = vmatpush1.msra.mxu0 0.0
      %469 = vmatprep.subr.mxu0 0.0
      %470 = vmatpush1.msra.mxu0 0.0
      %471 = vmatprep.subr.mxu0 0.0
      %472 = vmatpush1.msra.mxu0 0.0
      %473 = vmatprep.subr.mxu0 0.0
      %474 = vmatpush1.msra.mxu0 0.0
      %475 = vmatprep.subr.mxu0 0.0
      %476 = vmatpush1.msra.mxu0 0.0
      %477 = vmatprep.subr.mxu0 0.0
      %478 = vmatpush1.msra.mxu0 0.0
      %479 = vmatprep.subr.mxu0 0.0
      %480 = vmatpush1.msra.mxu0 0.0
      %481 = vmatprep.subr.mxu0 0.0
      %482 = vmatpush1.msra.mxu0 0.0
      %483 = vmatprep.subr.mxu0 0.0
      %484 = vmatpush1.msra.mxu0 0.0
      %485 = vmatprep.subr.mxu0 0.0
      %486 = vmatpush1.msra.mxu0 0.0
      %487 = vmatprep.subr.mxu0 0.0
      %488 = vmatpush1.msra.mxu0 0.0
      %489 = vmatprep.subr.mxu0 0.0
      %490 = vmatpush1.msra.mxu0 0.0
      %491 = vmatprep.subr.mxu0 0.0
      %492 = vmatpush1.msra.mxu0 0.0
      %493 = vmatprep.subr.mxu0 0.0
      %494 = vmatpush1.msra.mxu0 0.0
      %495 = vmatprep.subr.mxu0 0.0
      %496 = vmatpush1.msra.mxu0 0.0
      %497 = vmatprep.mubr.f32.mxu0 0.0
      %498 = vmatmul.mubr.f32.gmra.mrb[0].mxu0 %v313
      %v499 = vpop.f32.mrb[0].mxu0
      %v500 = vadd.f32 0.0, %v499
      %v501 = vpop.f32.mrb[0].mxu0
      %502 = vdwg.mxu0
      %vm503 = vcmask 261120
      %v505 = vsel %vm503, %v429, 0
      %v508 = vsel %vm503, %v431, 0
      %510 = vmatprep.subr.mxu0 0.0
      %511 = vmatpush1.xpose.msra.mxu0 %v508
      %512 = vmatprep.subr.mxu0 0.0
      %513 = vmatpush1.xpose.msra.mxu0 0.0
      %514 = vmatprep.subr.mxu0 0.0
      %515 = vmatpush1.xpose.msra.mxu0 0.0
      %516 = vmatprep.subr.mxu0 0.0
      %517 = vmatpush1.xpose.msra.mxu0 0.0
      %518 = vmatprep.subr.mxu0 0.0
      %519 = vmatpush1.xpose.msra.mxu0 0.0
      %520 = vmatprep.subr.mxu0 0.0
      %521 = vmatpush1.xpose.msra.mxu0 0.0
      %522 = vmatprep.subr.mxu0 0.0
      %523 = vmatpush1.xpose.msra.mxu0 0.0
      %524 = vmatprep.subr.mxu0 0.0
      %525 = vmatpush1.xpose.msra.mxu0 0.0
      %526 = vmatprep.subr.mxu0 0.0
      %527 = vmatpush1.xpose.msra.mxu0 0.0
      %528 = vmatprep.subr.mxu0 0.0
      %529 = vmatpush1.xpose.msra.mxu0 0.0
      %530 = vmatprep.subr.mxu0 0.0
      %531 = vmatpush1.xpose.msra.mxu0 0.0
      %532 = vmatprep.subr.mxu0 0.0
      %533 = vmatpush1.xpose.msra.mxu0 0.0
      %534 = vmatprep.subr.mxu0 0.0
      %535 = vmatpush1.xpose.msra.mxu0 0.0
      %536 = vmatprep.subr.mxu0 0.0
      %537 = vmatpush1.xpose.msra.mxu0 0.0
      %538 = vmatprep.subr.mxu0 0.0
      %539 = vmatpush1.xpose.msra.mxu0 0.0
      %540 = vmatprep.subr.mxu0 0.0
      %541 = vmatpush1.xpose.msra.mxu0 0.0
      %542 = vmatprep.subr.mxu0 0.0
      %543 = vmatpush1.xpose.msra.mxu0 0.0
      %544 = vmatprep.subr.mxu0 0.0
      %545 = vmatpush1.xpose.msra.mxu0 0.0
      %546 = vmatprep.subr.mxu0 0.0
      %547 = vmatpush1.xpose.msra.mxu0 0.0
      %548 = vmatprep.subr.mxu0 0.0
      %549 = vmatpush1.xpose.msra.mxu0 0.0
      %550 = vmatprep.subr.mxu0 0.0
      %551 = vmatpush1.xpose.msra.mxu0 0.0
      %552 = vmatprep.subr.mxu0 0.0
      %553 = vmatpush1.xpose.msra.mxu0 0.0
      %554 = vmatprep.subr.mxu0 0.0
      %555 = vmatpush1.xpose.msra.mxu0 0.0
      %556 = vmatprep.subr.mxu0 0.0
      %557 = vmatpush1.xpose.msra.mxu0 0.0
      %558 = vmatprep.subr.mxu0 0.0
      %559 = vmatpush1.xpose.msra.mxu0 0.0
      %560 = vmatprep.subr.mxu0 0.0
      %561 = vmatpush1.xpose.msra.mxu0 0.0
      %562 = vmatprep.subr.mxu0 0.0
      %563 = vmatpush1.xpose.msra.mxu0 0.0
      %564 = vmatprep.subr.mxu0 0.0
      %565 = vmatpush1.xpose.msra.mxu0 0.0
      %566 = vmatprep.subr.mxu0 0.0
      %567 = vmatpush1.xpose.msra.mxu0 0.0
      %568 = vmatprep.subr.mxu0 0.0
      %569 = vmatpush1.xpose.msra.mxu0 0.0
      %570 = vmatprep.subr.mxu0 0.0
      %571 = vmatpush1.xpose.msra.mxu0 0.0
      %572 = vmatprep.subr.mxu0 0.0
      %573 = vmatpush1.xpose.msra.mxu0 0.0
      %574 = vmatprep.mubr.f32.mxu0 0.0
      %575 = vmatmul.mubr.f32.gmra.mrb[0].mxu0 %v505
      %v576 = vpop.f32.mrb[0].mxu0
      %v577 = vadd.f32 0.0, %v576
      %v578 = vpop.f32.mrb[0].mxu0
      %579 = vdwg.mxu0
      %v580 = vmul.f32 %v577, 0.17677669
      %vm581 = vcmask 64512
      %v582 = vsel %vm581, %v580, -inf
      %583 = vmax.xlane.f32.xlu0 %v582
      %v584 = vpop.xlane.xlu0 %583
      %v585 = vsub.f32 %v580, %v584
      %v586 = vmul.f32 %v585, 1.442695
      %v587 = vpow.pop %v586
      %v588 = vsel %vm581, %v587, 0.0
      %589 = vadd.xlane.f32.xlu0 %v588
      %v590 = vpop.xlane.xlu0 %589
      %v591 = vrcp.pop %v590
      %v592 = vmul.f32 %v587, %v591
      %v594 = vsel %vm581, %v592, 0
      %596 = vmatprep.subr.mxu0 0.0
      %597 = vmatpush1.msra.mxu0 %v500
      %598 = vmatprep.subr.mxu0 0.0
      %599 = vmatpush1.msra.mxu0 0.0
      %600 = vmatprep.subr.mxu0 0.0
      %601 = vmatpush1.msra.mxu0 0.0
      %602 = vmatprep.subr.mxu0 0.0
      %603 = vmatpush1.msra.mxu0 0.0
      %604 = vmatprep.subr.mxu0 0.0
      %605 = vmatpush1.msra.mxu0 0.0
      %606 = vmatprep.subr.mxu0 0.0
      %607 = vmatpush1.msra.mxu0 0.0
      %608 = vmatprep.subr.mxu0 0.0
      %609 = vmatpush1.msra.mxu0 0.0
      %610 = vmatprep.subr.mxu0 0.0
      %611 = vmatpush1.msra.mxu0 0.0
      %612 = vmatprep.subr.mxu0 0.0
      %613 = vmatpush1.msra.mxu0 0.0
      %614 = vmatprep.subr.mxu0 0.0
      %615 = vmatpush1.msra.mxu0 0.0
      %616 = vmatprep.subr.mxu0 0.0
      %617 = vmatpush1.msra.mxu0 0.0
      %618 = vmatprep.subr.mxu0 0.0
      %619 = vmatpush1.msra.mxu0 0.0
      %620 = vmatprep.subr.mxu0 0.0
      %621 = vmatpush1.msra.mxu0 0.0
      %622 = vmatprep.subr.mxu0 0.0
      %623 = vmatpush1.msra.mxu0 0.0
      %624 = vmatprep.subr.mxu0 0.0
      %625 = vmatpush1.msra.mxu0 0.0
      %626 = vmatprep.subr.mxu0 0.0
      %627 = vmatpush1.msra.mxu0 0.0
      %628 = vmatprep.subr.mxu0 0.0
      %629 = vmatpush1.msra.mxu0 0.0
      %630 = vmatprep.subr.mxu0 0.0
      %631 = vmatpush1.msra.mxu0 0.0
      %632 = vmatprep.subr.mxu0 0.0
      %633 = vmatpush1.msra.mxu0 0.0
      %634 = vmatprep.subr.mxu0 0.0
      %635 = vmatpush1.msra.mxu0 0.0
      %636 = vmatprep.subr.mxu0 0.0
      %637 = vmatpush1.msra.mxu0 0.0
      %638 = vmatprep.subr.mxu0 0.0
      %639 = vmatpush1.msra.mxu0 0.0
      %640 = vmatprep.subr.mxu0 0.0
      %641 = vmatpush1.msra.mxu0 0.0
      %642 = vmatprep.subr.mxu0 0.0
      %643 = vmatpush1.msra.mxu0 0.0
      %644 = vmatprep.subr.mxu0 0.0
      %645 = vmatpush1.msra.mxu0 0.0
      %646 = vmatprep.subr.mxu0 0.0
      %647 = vmatpush1.msra.mxu0 0.0
      %648 = vmatprep.subr.mxu0 0.0
      %649 = vmatpush1.msra.mxu0 0.0
      %650 = vmatprep.subr.mxu0 0.0
      %651 = vmatpush1.msra.mxu0 0.0
      %652 = vmatprep.subr.mxu0 0.0
      %653 = vmatpush1.msra.mxu0 0.0
      %654 = vmatprep.subr.mxu0 0.0
      %655 = vmatpush1.msra.mxu0 0.0
      %656 = vmatprep.subr.mxu0 0.0
      %657 = vmatpush1.msra.mxu0 0.0
      %658 = vmatprep.subr.mxu0 0.0
      %659 = vmatpush1.msra.mxu0 0.0
      %660 = vmatprep.mubr.f32.mxu0 0.0
      %661 = vmatmul.mubr.f32.gmra.mrb[0].mxu0 %v594
      %v662 = vpop.f32.mrb[0].mxu0
      %v663 = vadd.f32 0.0, %v662
      %v664 = vpop.f32.mrb[0].mxu0
      %665 = vdwg.mxu0
      %666 = vrot.lane.b32.xlu0 %v429, 96
      %v667 = vpop.permute.xlu0 %666
      %668 = vrot.lane.b32.xlu0 %v431, 96
      %v669 = vpop.permute.xlu0 %668
      %v670 = vsel %vm503, %v667, 0
      %v672 = vsel %vm503, %v669, 0
      %674 = vmatprep.subr.mxu0 0.0
      %675 = vmatpush1.xpose.msra.mxu0 %v672
      %676 = vmatprep.subr.mxu0 0.0
      %677 = vmatpush1.xpose.msra.mxu0 0.0
      %678 = vmatprep.subr.mxu0 0.0
      %679 = vmatpush1.xpose.msra.mxu0 0.0
      %680 = vmatprep.subr.mxu0 0.0
      %681 = vmatpush1.xpose.msra.mxu0 0.0
      %682 = vmatprep.subr.mxu0 0.0
      %683 = vmatpush1.xpose.msra.mxu0 0.0
      %684 = vmatprep.subr.mxu0 0.0
      %685 = vmatpush1.xpose.msra.mxu0 0.0
      %686 = vmatprep.subr.mxu0 0.0
      %687 = vmatpush1.xpose.msra.mxu0 0.0
      %688 = vmatprep.subr.mxu0 0.0
      %689 = vmatpush1.xpose.msra.mxu0 0.0
      %690 = vmatprep.subr.mxu0 0.0
      %691 = vmatpush1.xpose.msra.mxu0 0.0
      %692 = vmatprep.subr.mxu0 0.0
      %693 = vmatpush1.xpose.msra.mxu0 0.0
      %694 = vmatprep.subr.mxu0 0.0
      %695 = vmatpush1.xpose.msra.mxu0 0.0
      %696 = vmatprep.subr.mxu0 0.0
      %697 = vmatpush1.xpose.msra.mxu0 0.0
      %698 = vmatprep.subr.mxu0 0.0
      %699 = vmatpush1.xpose.msra.mxu0 0.0
      %700 = vmatprep.subr.mxu0 0.0
      %701 = vmatpush1.xpose.msra.mxu0 0.0
      %702 = vmatprep.subr.mxu0 0.0
      %703 = vmatpush1.xpose.msra.mxu0 0.0
      %704 = vmatprep.subr.mxu0 0.0
      %705 = vmatpush1.xpose.msra.mxu0 0.0
      %706 = vmatprep.subr.mxu0 0.0
      %707 = vmatpush1.xpose.msra.mxu0 0.0
      %708 = vmatprep.subr.mxu0 0.0
      %709 = vmatpush1.xpose.msra.mxu0 0.0
      %710 = vmatprep.subr.mxu0 0.0
      %711 = vmatpush1.xpose.msra.mxu0 0.0
      %712 = vmatprep.subr.mxu0 0.0
      %713 = vmatpush1.xpose.msra.mxu0 0.0
      %714 = vmatprep.subr.mxu0 0.0
      %715 = vmatpush1.xpose.msra.mxu0 0.0
      %716 = vmatprep.subr.mxu0 0.0
      %717 = vmatpush1.xpose.msra.mxu0 0.0
      %718 = vmatprep.subr.mxu0 0.0
      %719 = vmatpush1.xpose.msra.mxu0 0.0
      %720 = vmatprep.subr.mxu0 0.0
      %721 = vmatpush1.xpose.msra.mxu0 0.0
      %722 = vmatprep.subr.mxu0 0.0
      %723 = vmatpush1.xpose.msra.mxu0 0.0
      %724 = vmatprep.subr.mxu0 0.0
      %725 = vmatpush1.xpose.msra.mxu0 0.0
      %726 = vmatprep.subr.mxu0 0.0
      %727 = vmatpush1.xpose.msra.mxu0 0.0
      %728 = vmatprep.subr.mxu0 0.0
      %729 = vmatpush1.xpose.msra.mxu0 0.0
      %730 = vmatprep.subr.mxu0 0.0
      %731 = vmatpush1.xpose.msra.mxu0 0.0
      %732 = vmatprep.subr.mxu0 0.0
      %733 = vmatpush1.xpose.msra.mxu0 0.0
      %734 = vmatprep.subr.mxu0 0.0
      %735 = vmatpush1.xpose.msra.mxu0 0.0
      %736 = vmatprep.subr.mxu0 0.0
      %737 = vmatpush1.xpose.msra.mxu0 0.0
      %738 = vmatprep.mubr.f32.mxu0 0.0
      %739 = vmatmul.mubr.f32.gmra.mrb[0].mxu0 %v670
      %v740 = vpop.f32.mrb[0].mxu0
      %v741 = vadd.f32 0.0, %v740
      %v742 = vpop.f32.mrb[0].mxu0
      %743 = vdwg.mxu0
      %v744 = vmul.f32 %v741, 0.17677669
      %v745 = vsel %vm581, %v744, -inf
      %746 = vmax.xlane.f32.xlu0 %v745
      %v747 = vpop.xlane.xlu0 %746
      %v748 = vsub.f32 %v744, %v747
      %v749 = vmul.f32 %v748, 1.442695
      %v750 = vpow.pop %v749
      %v751 = vsel %vm581, %v750, 0.0
      %752 = vadd.xlane.f32.xlu0 %v751
      %v753 = vpop.xlane.xlu0 %752
      %v754 = vrcp.pop %v753
      %v755 = vmul.f32 %v750, %v754
      %757 = vrot.lane.b32.xlu0 %v500, 96
      %v758 = vpop.permute.xlu0 %757
      %v761 = vsel %vm581, %v755, 0
      %763 = vmatprep.subr.mxu0 0.0
      %764 = vmatpush1.msra.mxu0 %v758
      %765 = vmatprep.subr.mxu0 0.0
      %766 = vmatpush1.msra.mxu0 0.0
      %767 = vmatprep.subr.mxu0 0.0
      %768 = vmatpush1.msra.mxu0 0.0
      %769 = vmatprep.subr.mxu0 0.0
      %770 = vmatpush1.msra.mxu0 0.0
      %771 = vmatprep.subr.mxu0 0.0
      %772 = vmatpush1.msra.mxu0 0.0
      %773 = vmatprep.subr.mxu0 0.0
      %774 = vmatpush1.msra.mxu0 0.0
      %775 = vmatprep.subr.mxu0 0.0
      %776 = vmatpush1.msra.mxu0 0.0
      %777 = vmatprep.subr.mxu0 0.0
      %778 = vmatpush1.msra.mxu0 0.0
      %779 = vmatprep.subr.mxu0 0.0
      %780 = vmatpush1.msra.mxu0 0.0
      %781 = vmatprep.subr.mxu0 0.0
      %782 = vmatpush1.msra.mxu0 0.0
      %783 = vmatprep.subr.mxu0 0.0
      %784 = vmatpush1.msra.mxu0 0.0
      %785 = vmatprep.subr.mxu0 0.0
      %786 = vmatpush1.msra.mxu0 0.0
      %787 = vmatprep.subr.mxu0 0.0
      %788 = vmatpush1.msra.mxu0 0.0
      %789 = vmatprep.subr.mxu0 0.0
      %790 = vmatpush1.msra.mxu0 0.0
      %791 = vmatprep.subr.mxu0 0.0
      %792 = vmatpush1.msra.mxu0 0.0
      %793 = vmatprep.subr.mxu0 0.0
      %794 = vmatpush1.msra.mxu0 0.0
      %795 = vmatprep.subr.mxu0 0.0
      %796 = vmatpush1.msra.mxu0 0.0
      %797 = vmatprep.subr.mxu0 0.0
      %798 = vmatpush1.msra.mxu0 0.0
      %799 = vmatprep.subr.mxu0 0.0
      %800 = vmatpush1.msra.mxu0 0.0
      %801 = vmatprep.subr.mxu0 0.0
      %802 = vmatpush1.msra.mxu0 0.0
      %803 = vmatprep.subr.mxu0 0.0
      %804 = vmatpush1.msra.mxu0 0.0
      %805 = vmatprep.subr.mxu0 0.0
      %806 = vmatpush1.msra.mxu0 0.0
      %807 = vmatprep.subr.mxu0 0.0
      %808 = vmatpush1.msra.mxu0 0.0
      %809 = vmatprep.subr.mxu0 0.0
      %810 = vmatpush1.msra.mxu0 0.0
      %811 = vmatprep.subr.mxu0 0.0
      %812 = vmatpush1.msra.mxu0 0.0
      %813 = vmatprep.subr.mxu0 0.0
      %814 = vmatpush1.msra.mxu0 0.0
      %815 = vmatprep.subr.mxu0 0.0
      %816 = vmatpush1.msra.mxu0 0.0
      %817 = vmatprep.subr.mxu0 0.0
      %818 = vmatpush1.msra.mxu0 0.0
      %819 = vmatprep.subr.mxu0 0.0
      %820 = vmatpush1.msra.mxu0 0.0
      %821 = vmatprep.subr.mxu0 0.0
      %822 = vmatpush1.msra.mxu0 0.0
      %823 = vmatprep.subr.mxu0 0.0
      %824 = vmatpush1.msra.mxu0 0.0
      %825 = vmatprep.subr.mxu0 0.0
      %826 = vmatpush1.msra.mxu0 0.0
      %827 = vmatprep.mubr.f32.mxu0 0.0
      %828 = vmatmul.mubr.f32.gmra.mrb[0].mxu0 %v761
      %v829 = vpop.f32.mrb[0].mxu0
      %v830 = vadd.f32 0.0, %v829
      %v831 = vpop.f32.mrb[0].mxu0
      %832 = vdwg.mxu0
      %833 = vrot.lane.b32.xlu0 %v429, 64
      %v834 = vpop.permute.xlu0 %833
      %835 = vrot.lane.b32.xlu0 %v431, 64
      %v836 = vpop.permute.xlu0 %835
      %v837 = vsel %vm503, %v834, 0
      %v839 = vsel %vm503, %v836, 0
      %841 = vmatprep.subr.mxu0 0.0
      %842 = vmatpush1.xpose.msra.mxu0 %v839
      %843 = vmatprep.subr.mxu0 0.0
      %844 = vmatpush1.xpose.msra.mxu0 0.0
      %845 = vmatprep.subr.mxu0 0.0
      %846 = vmatpush1.xpose.msra.mxu0 0.0
      %847 = vmatprep.subr.mxu0 0.0
      %848 = vmatpush1.xpose.msra.mxu0 0.0
      %849 = vmatprep.subr.mxu0 0.0
      %850 = vmatpush1.xpose.msra.mxu0 0.0
      %851 = vmatprep.subr.mxu0 0.0
      %852 = vmatpush1.xpose.msra.mxu0 0.0
      %853 = vmatprep.subr.mxu0 0.0
      %854 = vmatpush1.xpose.msra.mxu0 0.0
      %855 = vmatprep.subr.mxu0 0.0
      %856 = vmatpush1.xpose.msra.mxu0 0.0
      %857 = vmatprep.subr.mxu0 0.0
      %858 = vmatpush1.xpose.msra.mxu0 0.0
      %859 = vmatprep.subr.mxu0 0.0
      %860 = vmatpush1.xpose.msra.mxu0 0.0
      %861 = vmatprep.subr.mxu0 0.0
      %862 = vmatpush1.xpose.msra.mxu0 0.0
      %863 = vmatprep.subr.mxu0 0.0
      %864 = vmatpush1.xpose.msra.mxu0 0.0
      %865 = vmatprep.subr.mxu0 0.0
      %866 = vmatpush1.xpose.msra.mxu0 0.0
      %867 = vmatprep.subr.mxu0 0.0
      %868 = vmatpush1.xpose.msra.mxu0 0.0
      %869 = vmatprep.subr.mxu0 0.0
      %870 = vmatpush1.xpose.msra.mxu0 0.0
      %871 = vmatprep.subr.mxu0 0.0
      %872 = vmatpush1.xpose.msra.mxu0 0.0
      %873 = vmatprep.subr.mxu0 0.0
      %874 = vmatpush1.xpose.msra.mxu0 0.0
      %875 = vmatprep.subr.mxu0 0.0
      %876 = vmatpush1.xpose.msra.mxu0 0.0
      %877 = vmatprep.subr.mxu0 0.0
      %878 = vmatpush1.xpose.msra.mxu0 0.0
      %879 = vmatprep.subr.mxu0 0.0
      %880 = vmatpush1.xpose.msra.mxu0 0.0
      %881 = vmatprep.subr.mxu0 0.0
      %882 = vmatpush1.xpose.msra.mxu0 0.0
      %883 = vmatprep.subr.mxu0 0.0
      %884 = vmatpush1.xpose.msra.mxu0 0.0
      %885 = vmatprep.subr.mxu0 0.0
      %886 = vmatpush1.xpose.msra.mxu0 0.0
      %887 = vmatprep.subr.mxu0 0.0
      %888 = vmatpush1.xpose.msra.mxu0 0.0
      %889 = vmatprep.subr.mxu0 0.0
      %890 = vmatpush1.xpose.msra.mxu0 0.0
      %891 = vmatprep.subr.mxu0 0.0
      %892 = vmatpush1.xpose.msra.mxu0 0.0
      %893 = vmatprep.subr.mxu0 0.0
      %894 = vmatpush1.xpose.msra.mxu0 0.0
      %895 = vmatprep.subr.mxu0 0.0
      %896 = vmatpush1.xpose.msra.mxu0 0.0
      %897 = vmatprep.subr.mxu0 0.0
      %898 = vmatpush1.xpose.msra.mxu0 0.0
      %899 = vmatprep.subr.mxu0 0.0
      %900 = vmatpush1.xpose.msra.mxu0 0.0
      %901 = vmatprep.subr.mxu0 0.0
      %902 = vmatpush1.xpose.msra.mxu0 0.0
      %903 = vmatprep.subr.mxu0 0.0
      %904 = vmatpush1.xpose.msra.mxu0 0.0
      %905 = vmatprep.mubr.f32.mxu0 0.0
      %906 = vmatmul.mubr.f32.gmra.mrb[0].mxu0 %v837
      %v907 = vpop.f32.mrb[0].mxu0
      %v908 = vadd.f32 0.0, %v907
      %v909 = vpop.f32.mrb[0].mxu0
      %910 = vdwg.mxu0
      %v911 = vmul.f32 %v908, 0.17677669
      %v912 = vsel %vm581, %v911, -inf
      %913 = vmax.xlane.f32.xlu0 %v912
      %v914 = vpop.xlane.xlu0 %913
      %v915 = vsub.f32 %v911, %v914
      %v916 = vmul.f32 %v915, 1.442695
      %v917 = vpow.pop %v916
      %v918 = vsel %vm581, %v917, 0.0
      %919 = vadd.xlane.f32.xlu0 %v918
      %v920 = vpop.xlane.xlu0 %919
      %v921 = vrcp.pop %v920
      %v922 = vmul.f32 %v917, %v921
      %923 = vrot.lane.b32.xlu0 %v500, 64
      %v924 = vpop.permute.xlu0 %923
      %v927 = vsel %vm581, %v922, 0
      %929 = vmatprep.subr.mxu0 0.0
      %930 = vmatpush1.msra.mxu0 %v924
      %931 = vmatprep.subr.mxu0 0.0
      %932 = vmatpush1.msra.mxu0 0.0
      %933 = vmatprep.subr.mxu0 0.0
      %934 = vmatpush1.msra.mxu0 0.0
      %935 = vmatprep.subr.mxu0 0.0
      %936 = vmatpush1.msra.mxu0 0.0
      %937 = vmatprep.subr.mxu0 0.0
      %938 = vmatpush1.msra.mxu0 0.0
      %939 = vmatprep.subr.mxu0 0.0
      %940 = vmatpush1.msra.mxu0 0.0
      %941 = vmatprep.subr.mxu0 0.0
      %942 = vmatpush1.msra.mxu0 0.0
      %943 = vmatprep.subr.mxu0 0.0
      %944 = vmatpush1.msra.mxu0 0.0
      %945 = vmatprep.subr.mxu0 0.0
      %946 = vmatpush1.msra.mxu0 0.0
      %947 = vmatprep.subr.mxu0 0.0
      %948 = vmatpush1.msra.mxu0 0.0
      %949 = vmatprep.subr.mxu0 0.0
      %950 = vmatpush1.msra.mxu0 0.0
      %951 = vmatprep.subr.mxu0 0.0
      %952 = vmatpush1.msra.mxu0 0.0
      %953 = vmatprep.subr.mxu0 0.0
      %954 = vmatpush1.msra.mxu0 0.0
      %955 = vmatprep.subr.mxu0 0.0
      %956 = vmatpush1.msra.mxu0 0.0
      %957 = vmatprep.subr.mxu0 0.0
      %958 = vmatpush1.msra.mxu0 0.0
      %959 = vmatprep.subr.mxu0 0.0
      %960 = vmatpush1.msra.mxu0 0.0
      %961 = vmatprep.subr.mxu0 0.0
      %962 = vmatpush1.msra.mxu0 0.0
      %963 = vmatprep.subr.mxu0 0.0
      %964 = vmatpush1.msra.mxu0 0.0
      %965 = vmatprep.subr.mxu0 0.0
      %966 = vmatpush1.msra.mxu0 0.0
      %967 = vmatprep.subr.mxu0 0.0
      %968 = vmatpush1.msra.mxu0 0.0
      %969 = vmatprep.subr.mxu0 0.0
      %970 = vmatpush1.msra.mxu0 0.0
      %971 = vmatprep.subr.mxu0 0.0
      %972 = vmatpush1.msra.mxu0 0.0
      %973 = vmatprep.subr.mxu0 0.0
      %974 = vmatpush1.msra.mxu0 0.0
      %975 = vmatprep.subr.mxu0 0.0
      %976 = vmatpush1.msra.mxu0 0.0
      %977 = vmatprep.subr.mxu0 0.0
      %978 = vmatpush1.msra.mxu0 0.0
      %979 = vmatprep.subr.mxu0 0.0
      %980 = vmatpush1.msra.mxu0 0.0
      %981 = vmatprep.subr.mxu0 0.0
      %982 = vmatpush1.msra.mxu0 0.0
      %983 = vmatprep.subr.mxu0 0.0
      %984 = vmatpush1.msra.mxu0 0.0
      %985 = vmatprep.subr.mxu0 0.0
      %986 = vmatpush1.msra.mxu0 0.0
      %987 = vmatprep.subr.mxu0 0.0
      %988 = vmatpush1.msra.mxu0 0.0
      %989 = vmatprep.subr.mxu0 0.0
      %990 = vmatpush1.msra.mxu0 0.0
      %991 = vmatprep.subr.mxu0 0.0
      %992 = vmatpush1.msra.mxu0 0.0
      %993 = vmatprep.mubr.f32.mxu0 0.0
      %994 = vmatmul.mubr.f32.gmra.mrb[0].mxu0 %v927
      %v995 = vpop.f32.mrb[0].mxu0
      %v996 = vadd.f32 0.0, %v995
      %v997 = vpop.f32.mrb[0].mxu0
      %998 = vdwg.mxu0
      %999 = vrot.lane.b32.xlu0 %v429, 32
      %v1000 = vpop.permute.xlu0 %999
      %1001 = vrot.lane.b32.xlu0 %v431, 32
      %v1002 = vpop.permute.xlu0 %1001
      %v1003 = vsel %vm503, %v1000, 0
      %v1005 = vsel %vm503, %v1002, 0
      %1007 = vmatprep.subr.mxu0 0.0
      %1008 = vmatpush1.xpose.msra.mxu0 %v1005
      %1009 = vmatprep.subr.mxu0 0.0
      %1010 = vmatpush1.xpose.msra.mxu0 0.0
      %1011 = vmatprep.subr.mxu0 0.0
      %1012 = vmatpush1.xpose.msra.mxu0 0.0
      %1013 = vmatprep.subr.mxu0 0.0
      %1014 = vmatpush1.xpose.msra.mxu0 0.0
      %1015 = vmatprep.subr.mxu0 0.0
      %1016 = vmatpush1.xpose.msra.mxu0 0.0
      %1017 = vmatprep.subr.mxu0 0.0
      %1018 = vmatpush1.xpose.msra.mxu0 0.0
      %1019 = vmatprep.subr.mxu0 0.0
      %1020 = vmatpush1.xpose.msra.mxu0 0.0
      %1021 = vmatprep.subr.mxu0 0.0
      %1022 = vmatpush1.xpose.msra.mxu0 0.0
      %1023 = vmatprep.subr.mxu0 0.0
      %1024 = vmatpush1.xpose.msra.mxu0 0.0
      %1025 = vmatprep.subr.mxu0 0.0
      %1026 = vmatpush1.xpose.msra.mxu0 0.0
      %1027 = vmatprep.subr.mxu0 0.0
      %1028 = vmatpush1.xpose.msra.mxu0 0.0
      %1029 = vmatprep.subr.mxu0 0.0
      %1030 = vmatpush1.xpose.msra.mxu0 0.0
      %1031 = vmatprep.subr.mxu0 0.0
      %1032 = vmatpush1.xpose.msra.mxu0 0.0
      %1033 = vmatprep.subr.mxu0 0.0
      %1034 = vmatpush1.xpose.msra.mxu0 0.0
      %1035 = vmatprep.subr.mxu0 0.0
      %1036 = vmatpush1.xpose.msra.mxu0 0.0
      %1037 = vmatprep.subr.mxu0 0.0
      %1038 = vmatpush1.xpose.msra.mxu0 0.0
      %1039 = vmatprep.subr.mxu0 0.0
      %1040 = vmatpush1.xpose.msra.mxu0 0.0
      %1041 = vmatprep.subr.mxu0 0.0
      %1042 = vmatpush1.xpose.msra.mxu0 0.0
      %1043 = vmatprep.subr.mxu0 0.0
      %1044 = vmatpush1.xpose.msra.mxu0 0.0
      %1045 = vmatprep.subr.mxu0 0.0
      %1046 = vmatpush1.xpose.msra.mxu0 0.0
      %1047 = vmatprep.subr.mxu0 0.0
      %1048 = vmatpush1.xpose.msra.mxu0 0.0
      %1049 = vmatprep.subr.mxu0 0.0
      %1050 = vmatpush1.xpose.msra.mxu0 0.0
      %1051 = vmatprep.subr.mxu0 0.0
      %1052 = vmatpush1.xpose.msra.mxu0 0.0
      %1053 = vmatprep.subr.mxu0 0.0
      %1054 = vmatpush1.xpose.msra.mxu0 0.0
      %1055 = vmatprep.subr.mxu0 0.0
      %1056 = vmatpush1.xpose.msra.mxu0 0.0
      %1057 = vmatprep.subr.mxu0 0.0
      %1058 = vmatpush1.xpose.msra.mxu0 0.0
      %1059 = vmatprep.subr.mxu0 0.0
      %1060 = vmatpush1.xpose.msra.mxu0 0.0
      %1061 = vmatprep.subr.mxu0 0.0
      %1062 = vmatpush1.xpose.msra.mxu0 0.0
      %1063 = vmatprep.subr.mxu0 0.0
      %1064 = vmatpush1.xpose.msra.mxu0 0.0
      %1065 = vmatprep.subr.mxu0 0.0
      %1066 = vmatpush1.xpose.msra.mxu0 0.0
      %1067 = vmatprep.subr.mxu0 0.0
      %1068 = vmatpush1.xpose.msra.mxu0 0.0
      %1069 = vmatprep.subr.mxu0 0.0
      %1070 = vmatpush1.xpose.msra.mxu0 0.0
      %1071 = vmatprep.mubr.f32.mxu0 0.0
      %1072 = vmatmul.mubr.f32.gmra.mrb[0].mxu0 %v1003
      %v1073 = vpop.f32.mrb[0].mxu0
      %v1074 = vadd.f32 0.0, %v1073
      %v1075 = vpop.f32.mrb[0].mxu0
      %1076 = vdwg.mxu0
      %v1077 = vmul.f32 %v1074, 0.17677669
      %v1078 = vsel %vm581, %v1077, -inf
      %1079 = vmax.xlane.f32.xlu0 %v1078
      %v1080 = vpop.xlane.xlu0 %1079
      %v1081 = vsub.f32 %v1077, %v1080
      %v1082 = vmul.f32 %v1081, 1.442695
      %v1083 = vpow.pop %v1082
      %v1084 = vsel %vm581, %v1083, 0.0
      %1085 = vadd.xlane.f32.xlu0 %v1084
      %v1086 = vpop.xlane.xlu0 %1085
      %v1087 = vrcp.pop %v1086
      %v1088 = vmul.f32 %v1083, %v1087
      %1089 = vrot.lane.b32.xlu0 %v500, 32
      %v1090 = vpop.permute.xlu0 %1089
      %v1093 = vsel %vm581, %v1088, 0
      %1095 = vmatprep.subr.mxu0 0.0
      %1096 = vmatpush1.msra.mxu0 %v1090
      %1097 = vmatprep.subr.mxu0 0.0
      %1098 = vmatpush1.msra.mxu0 0.0
      %1099 = vmatprep.subr.mxu0 0.0
      %1100 = vmatpush1.msra.mxu0 0.0
      %1101 = vmatprep.subr.mxu0 0.0
      %1102 = vmatpush1.msra.mxu0 0.0
      %1103 = vmatprep.subr.mxu0 0.0
      %1104 = vmatpush1.msra.mxu0 0.0
      %1105 = vmatprep.subr.mxu0 0.0
      %1106 = vmatpush1.msra.mxu0 0.0
      %1107 = vmatprep.subr.mxu0 0.0
      %1108 = vmatpush1.msra.mxu0 0.0
      %1109 = vmatprep.subr.mxu0 0.0
      %1110 = vmatpush1.msra.mxu0 0.0
      %1111 = vmatprep.subr.mxu0 0.0
      %1112 = vmatpush1.msra.mxu0 0.0
      %1113 = vmatprep.subr.mxu0 0.0
      %1114 = vmatpush1.msra.mxu0 0.0
      %1115 = vmatprep.subr.mxu0 0.0
      %1116 = vmatpush1.msra.mxu0 0.0
      %1117 = vmatprep.subr.mxu0 0.0
      %1118 = vmatpush1.msra.mxu0 0.0
      %1119 = vmatprep.subr.mxu0 0.0
      %1120 = vmatpush1.msra.mxu0 0.0
      %1121 = vmatprep.subr.mxu0 0.0
      %1122 = vmatpush1.msra.mxu0 0.0
      %1123 = vmatprep.subr.mxu0 0.0
      %1124 = vmatpush1.msra.mxu0 0.0
      %1125 = vmatprep.subr.mxu0 0.0
      %1126 = vmatpush1.msra.mxu0 0.0
      %1127 = vmatprep.subr.mxu0 0.0
      %1128 = vmatpush1.msra.mxu0 0.0
      %1129 = vmatprep.subr.mxu0 0.0
      %1130 = vmatpush1.msra.mxu0 0.0
      %1131 = vmatprep.subr.mxu0 0.0
      %1132 = vmatpush1.msra.mxu0 0.0
      %1133 = vmatprep.subr.mxu0 0.0
      %1134 = vmatpush1.msra.mxu0 0.0
      %1135 = vmatprep.subr.mxu0 0.0
      %1136 = vmatpush1.msra.mxu0 0.0
      %1137 = vmatprep.subr.mxu0 0.0
      %1138 = vmatpush1.msra.mxu0 0.0
      %1139 = vmatprep.subr.mxu0 0.0
      %1140 = vmatpush1.msra.mxu0 0.0
      %1141 = vmatprep.subr.mxu0 0.0
      %1142 = vmatpush1.msra.mxu0 0.0
      %1143 = vmatprep.subr.mxu0 0.0
      %1144 = vmatpush1.msra.mxu0 0.0
      %1145 = vmatprep.subr.mxu0 0.0
      %1146 = vmatpush1.msra.mxu0 0.0
      %1147 = vmatprep.subr.mxu0 0.0
      %1148 = vmatpush1.msra.mxu0 0.0
      %1149 = vmatprep.subr.mxu0 0.0
      %1150 = vmatpush1.msra.mxu0 0.0
      %1151 = vmatprep.subr.mxu0 0.0
      %1152 = vmatpush1.msra.mxu0 0.0
      %1153 = vmatprep.subr.mxu0 0.0
      %1154 = vmatpush1.msra.mxu0 0.0
      %1155 = vmatprep.subr.mxu0 0.0
      %1156 = vmatpush1.msra.mxu0 0.0
      %1157 = vmatprep.subr.mxu0 0.0
      %1158 = vmatpush1.msra.mxu0 0.0
      %1159 = vmatprep.mubr.f32.mxu0 0.0
      %1160 = vmatmul.mubr.f32.gmra.mrb[0].mxu0 %v1093
      %v1161 = vpop.f32.mrb[0].mxu0
      %v1162 = vadd.f32 0.0, %v1161
      %v1163 = vpop.f32.mrb[0].mxu0
      %1164 = vdwg.mxu0
      %1166 = vrot.lane.b32.xlu0 %v830, 32
      %v1167 = vpop.permute.xlu0 %1166
      %1170 = vrot.lane.b32.xlu0 %v996, 64
      %v1171 = vpop.permute.xlu0 %1170
      %1174 = vrot.lane.b32.xlu0 %v1162, 96
      %v1175 = vpop.permute.xlu0 %1174
      %v1177 = vsel %vm503, %v663, %v1167
      %vm1178 = vcmask 523264
      %v1179 = vsel %vm1178, %v1177, %v1171
      %vm1180 = vcmask 785408
      %v1181 = vsel %vm1180, %v1179, %v1175
      %v1182 = vadd.f32 %v1181, %v301
      %1183 = vadd.xlane.f32.xlu0 %v1182
      %v1184 = vpop.xlane.xlu0 %1183
      %v1185 = vmul.f32 %v1184, %v304
      %v1186 = vsub.f32 %v1182, %v1185
      %v1187 = vmul.f32 %v1186, %v1186
      %1188 = vadd.xlane.f32.xlu0 %v1187
      %v1189 = vpop.xlane.xlu0 %1188
      %v1190 = vmul.f32 %v1189, %v304
      %v1191 = vadd.f32 %v1190, 1e-05
      %v1192 = vrsqrt.pop %v1191
      %v1193 = vmul.f32 %v1186, %v1192
      %v1194 = vld [vmem:[%s3] sm:$0x1]
      %v1195 = vld [vmem:[%s5] sm:$0x3]
      %v1196 = vld [vmem:[%s7] sm:$0x1]
      %v1197 = vld [vmem:[%s2] sm:$0xff]
      %v1198 = vld [vmem:[%s2 + $0x8] sm:$0xff]
      %v1199 = vld [vmem:[%s2 + $0x10] sm:$0xff]
      %v1200 = vld [vmem:[%s2 + $0x18] sm:$0xff]
      %v1201 = vld [vmem:[%s2 + $0x20] sm:$0xff]
      %v1202 = vld [vmem:[%s2 + $0x28] sm:$0xff]
      %v1203 = vld [vmem:[%s2 + $0x30] sm:$0xff]
      %v1204 = vld [vmem:[%s2 + $0x38] sm:$0xff]
      %v1205 = vld [vmem:[%s2 + $0x40] sm:$0xff]
      %v1206 = vld [vmem:[%s2 + $0x48] sm:$0xff]
      %v1207 = vld [vmem:[%s2 + $0x50] sm:$0xff]
      %v1208 = vld [vmem:[%s2 + $0x58] sm:$0xff]
      %v1209 = vld [vmem:[%s2 + $0x60] sm:$0xff]
      %v1210 = vld [vmem:[%s2 + $0x68] sm:$0xff]
      %v1211 = vld [vmem:[%s2 + $0x70] sm:$0xff]
      %v1212 = vld [vmem:[%s2 + $0x78] sm:$0xff]
      %v1214 = vlaneseq
      %v1215 = vshrl.u32 %v1214, 7
      %v1216 = vsub.s32 0, %v1215
      %v1217 = vrot.slane %v1194, %v1216
      %1219 = vmatprep.subr.mxu0 0.0
      %1220 = vmatpush1.msra.mxu0 %v1197
      %1221 = vmatprep.subr.mxu0 0.0
      %1222 = vmatpush1.msra.mxu0 %v1198
      %1223 = vmatprep.subr.mxu0 0.0
      %1224 = vmatpush1.msra.mxu0 %v1199
      %1225 = vmatprep.subr.mxu0 0.0
      %1226 = vmatpush1.msra.mxu0 %v1200
      %1227 = vmatprep.subr.mxu0 0.0
      %1228 = vmatpush1.msra.mxu0 %v1201
      %1229 = vmatprep.subr.mxu0 0.0
      %1230 = vmatpush1.msra.mxu0 %v1202
      %1231 = vmatprep.subr.mxu0 0.0
      %1232 = vmatpush1.msra.mxu0 %v1203
      %1233 = vmatprep.subr.mxu0 0.0
      %1234 = vmatpush1.msra.mxu0 %v1204
      %1235 = vmatprep.subr.mxu0 0.0
      %1236 = vmatpush1.msra.mxu0 %v1205
      %1237 = vmatprep.subr.mxu0 0.0
      %1238 = vmatpush1.msra.mxu0 %v1206
      %1239 = vmatprep.subr.mxu0 0.0
      %1240 = vmatpush1.msra.mxu0 %v1207
      %1241 = vmatprep.subr.mxu0 0.0
      %1242 = vmatpush1.msra.mxu0 %v1208
      %1243 = vmatprep.subr.mxu0 0.0
      %1244 = vmatpush1.msra.mxu0 %v1209
      %1245 = vmatprep.subr.mxu0 0.0
      %1246 = vmatpush1.msra.mxu0 %v1210
      %1247 = vmatprep.subr.mxu0 0.0
      %1248 = vmatpush1.msra.mxu0 %v1211
      %1249 = vmatprep.subr.mxu0 0.0
      %1250 = vmatpush1.msra.mxu0 %v1212
      %1251 = vmatprep.subr.mxu0 0.0
      %1252 = vmatpush1.msra.mxu0 0.0
      %1253 = vmatprep.subr.mxu0 0.0
      %1254 = vmatpush1.msra.mxu0 0.0
      %1255 = vmatprep.subr.mxu0 0.0
      %1256 = vmatpush1.msra.mxu0 0.0
      %1257 = vmatprep.subr.mxu0 0.0
      %1258 = vmatpush1.msra.mxu0 0.0
      %1259 = vmatprep.subr.mxu0 0.0
      %1260 = vmatpush1.msra.mxu0 0.0
      %1261 = vmatprep.subr.mxu0 0.0
      %1262 = vmatpush1.msra.mxu0 0.0
      %1263 = vmatprep.subr.mxu0 0.0
      %1264 = vmatpush1.msra.mxu0 0.0
      %1265 = vmatprep.subr.mxu0 0.0
      %1266 = vmatpush1.msra.mxu0 0.0
      %1267 = vmatprep.subr.mxu0 0.0
      %1268 = vmatpush1.msra.mxu0 0.0
      %1269 = vmatprep.subr.mxu0 0.0
      %1270 = vmatpush1.msra.mxu0 0.0
      %1271 = vmatprep.subr.mxu0 0.0
      %1272 = vmatpush1.msra.mxu0 0.0
      %1273 = vmatprep.subr.mxu0 0.0
      %1274 = vmatpush1.msra.mxu0 0.0
      %1275 = vmatprep.subr.mxu0 0.0
      %1276 = vmatpush1.msra.mxu0 0.0
      %1277 = vmatprep.subr.mxu0 0.0
      %1278 = vmatpush1.msra.mxu0 0.0
      %1279 = vmatprep.subr.mxu0 0.0
      %1280 = vmatpush1.msra.mxu0 0.0
      %1281 = vmatprep.subr.mxu0 0.0
      %1282 = vmatpush1.msra.mxu0 0.0
      %1283 = vmatprep.mubr.f32.mxu0 0.0
      %1284 = vmatmul.mubr.f32.gmra.mrb[0].mxu0 %v1193
      %v1285 = vpop.f32.mrb[0].mxu0
      %v1286 = vadd.f32 %v1217, %v1285
      %v1287 = vpop.f32.mrb[0].mxu0
      %1288 = vdwg.mxu0
      %v1289 = vmul.f32 %v1286, 0.5
      %v1290 = vmul.f32 %v1286, 0.70710677
      %v1291 = verf.f32.pop %v1290
      %v1292 = vadd.f32 %v1291, 1.0
      %v1293 = vmul.f32 %v1289, %v1292
      %v1294 = vld [vmem:[%s4] sm:$0xff]
      %v1295 = vld [vmem:[%s4 + $0x8] sm:$0xff]
      %v1296 = vld [vmem:[%s4 + $0x10] sm:$0xff]
      %v1297 = vld [vmem:[%s4 + $0x18] sm:$0xff]
      %v1298 = vld [vmem:[%s4 + $0x20] sm:$0xff]
      %v1299 = vld [vmem:[%s4 + $0x28] sm:$0xff]
      %v1300 = vld [vmem:[%s4 + $0x30] sm:$0xff]
      %v1301 = vld [vmem:[%s4 + $0x38] sm:$0xff]
      %v1302 = vld [vmem:[%s4 + $0x40] sm:$0xff]
      %v1303 = vld [vmem:[%s4 + $0x48] sm:$0xff]
      %v1304 = vld [vmem:[%s4 + $0x50] sm:$0xff]
      %v1305 = vld [vmem:[%s4 + $0x58] sm:$0xff]
      %v1306 = vld [vmem:[%s4 + $0x60] sm:$0xff]
      %v1307 = vld [vmem:[%s4 + $0x68] sm:$0xff]
      %v1308 = vld [vmem:[%s4 + $0x70] sm:$0xff]
      %v1309 = vld [vmem:[%s4 + $0x78] sm:$0xff]
      %v1310 = vld [vmem:[%s4 + $0x80] sm:$0xff]
      %v1311 = vld [vmem:[%s4 + $0x88] sm:$0xff]
      %v1312 = vld [vmem:[%s4 + $0x90] sm:$0xff]
      %v1313 = vld [vmem:[%s4 + $0x98] sm:$0xff]
      %v1314 = vld [vmem:[%s4 + $0xa0] sm:$0xff]
      %v1315 = vld [vmem:[%s4 + $0xa8] sm:$0xff]
      %v1316 = vld [vmem:[%s4 + $0xb0] sm:$0xff]
      %v1317 = vld [vmem:[%s4 + $0xb8] sm:$0xff]
      %v1318 = vld [vmem:[%s4 + $0xc0] sm:$0xff]
      %v1319 = vld [vmem:[%s4 + $0xc8] sm:$0xff]
      %v1320 = vld [vmem:[%s4 + $0xd0] sm:$0xff]
      %v1321 = vld [vmem:[%s4 + $0xd8] sm:$0xff]
      %v1322 = vld [vmem:[%s4 + $0xe0] sm:$0xff]
      %v1323 = vld [vmem:[%s4 + $0xe8] sm:$0xff]
      %v1324 = vld [vmem:[%s4 + $0xf0] sm:$0xff]
      %v1325 = vld [vmem:[%s4 + $0xf8] sm:$0xff]
      %v1327 = vlaneseq
      %v1328 = vshrl.u32 %v1327, 7
      %v1329 = vsub.s32 0, %v1328
      %v1330 = vrot.slane %v1195, %v1329
      %v1331 = vlaneseq
      %v1332 = vshrl.u32 %v1331, 7
      %v1333 = vsub.s32 1, %v1332
      %v1334 = vrot.slane %v1195, %v1333
      %1337 = vmatprep.subr.mxu0 %v1295
      %1338 = vmatpush1.msra.mxu0 %v1294
      %1339 = vmatprep.subr.mxu0 %v1297
      %1340 = vmatpush1.msra.mxu0 %v1296
      %1341 = vmatprep.subr.mxu0 %v1299
      %1342 = vmatpush1.msra.mxu0 %v1298
      %1343 = vmatprep.subr.mxu0 %v1301
      %1344 = vmatpush1.msra.mxu0 %v1300
      %1345 = vmatprep.subr.mxu0 %v1303
      %1346 = vmatpush1.msra.mxu0 %v1302
      %1347 = vmatprep.subr.mxu0 %v1305
      %1348 = vmatpush1.msra.mxu0 %v1304
      %1349 = vmatprep.subr.mxu0 %v1307
      %1350 = vmatpush1.msra.mxu0 %v1306
      %1351 = vmatprep.subr.mxu0 %v1309
      %1352 = vmatpush1.msra.mxu0 %v1308
      %1353 = vmatprep.subr.mxu0 %v1311
      %1354 = vmatpush1.msra.mxu0 %v1310
      %1355 = vmatprep.subr.mxu0 %v1313
      %1356 = vmatpush1.msra.mxu0 %v1312
      %1357 = vmatprep.subr.mxu0 %v1315
      %1358 = vmatpush1.msra.mxu0 %v1314
      %1359 = vmatprep.subr.mxu0 %v1317
      %1360 = vmatpush1.msra.mxu0 %v1316
      %1361 = vmatprep.subr.mxu0 %v1319
      %1362 = vmatpush1.msra.mxu0 %v1318
      %1363 = vmatprep.subr.mxu0 %v1321
      %1364 = vmatpush1.msra.mxu0 %v1320
      %1365 = vmatprep.subr.mxu0 %v1323
      %1366 = vmatpush1.msra.mxu0 %v1322
      %1367 = vmatprep.subr.mxu0 %v1325
      %1368 = vmatpush1.msra.mxu0 %v1324
      %1369 = vmatprep.subr.mxu0 0.0
      %1370 = vmatpush1.msra.mxu0 0.0
      %1371 = vmatprep.subr.mxu0 0.0
      %1372 = vmatpush1.msra.mxu0 0.0
      %1373 = vmatprep.subr.mxu0 0.0
      %1374 = vmatpush1.msra.mxu0 0.0
      %1375 = vmatprep.subr.mxu0 0.0
      %1376 = vmatpush1.msra.mxu0 0.0
      %1377 = vmatprep.subr.mxu0 0.0
      %1378 = vmatpush1.msra.mxu0 0.0
      %1379 = vmatprep.subr.mxu0 0.0
      %1380 = vmatpush1.msra.mxu0 0.0
      %1381 = vmatprep.subr.mxu0 0.0
      %1382 = vmatpush1.msra.mxu0 0.0
      %1383 = vmatprep.subr.mxu0 0.0
      %1384 = vmatpush1.msra.mxu0 0.0
      %1385 = vmatprep.subr.mxu0 0.0
      %1386 = vmatpush1.msra.mxu0 0.0
      %1387 = vmatprep.subr.mxu0 0.0
      %1388 = vmatpush1.msra.mxu0 0.0
      %1389 = vmatprep.subr.mxu0 0.0
      %1390 = vmatpush1.msra.mxu0 0.0
      %1391 = vmatprep.subr.mxu0 0.0
      %1392 = vmatpush1.msra.mxu0 0.0
      %1393 = vmatprep.subr.mxu0 0.0
      %1394 = vmatpush1.msra.mxu0 0.0
      %1395 = vmatprep.subr.mxu0 0.0
      %1396 = vmatpush1.msra.mxu0 0.0
      %1397 = vmatprep.subr.mxu0 0.0
      %1398 = vmatpush1.msra.mxu0 0.0
      %1399 = vmatprep.subr.mxu0 0.0
      %1400 = vmatpush1.msra.mxu0 0.0
      %1401 = vmatprep.mubr.f32.mxu0 0.0
      %1402 = vmatmul.mubr.f32.gmra.mrb[0].mxu0 %v1293
      %v1403 = vpop.f32.mrb[0].mxu0
      %v1404 = vadd.f32 %v1330, %v1403
      %v1405 = vpop.f32.mrb[0].mxu0
      %v1406 = vadd.f32 %v1334, %v1405
      %1407 = vdwg.mxu0
      %v1408 = vmul.f32 %v1404, 0.5
      %v1409 = vmul.f32 %v1406, 0.5
      %v1410 = vmul.f32 %v1404, 0.70710677
      %v1411 = vmul.f32 %v1406, 0.70710677
      %v1412 = verf.f32.pop %v1410
      %v1413 = verf.f32.pop %v1411
      %v1414 = vadd.f32 %v1412, 1.0
      %v1415 = vadd.f32 %v1413, 1.0
      %v1416 = vmul.f32 %v1408, %v1414
      %v1417 = vmul.f32 %v1409, %v1415
      %v1418 = vld [vmem:[%s6] sm:$0xff]
      %v1419 = vld [vmem:[%s6 + $0x8] sm:$0xff]
      %v1420 = vld [vmem:[%s6 + $0x10] sm:$0xff]
      %v1421 = vld [vmem:[%s6 + $0x18] sm:$0xff]
      %v1422 = vld [vmem:[%s6 + $0x20] sm:$0xff]
      %v1423 = vld [vmem:[%s6 + $0x28] sm:$0xff]
      %v1424 = vld [vmem:[%s6 + $0x30] sm:$0xff]
      %v1425 = vld [vmem:[%s6 + $0x38] sm:$0xff]
      %v1426 = vld [vmem:[%s6 + $0x40] sm:$0xff]
      %v1427 = vld [vmem:[%s6 + $0x48] sm:$0xff]
      %v1428 = vld [vmem:[%s6 + $0x50] sm:$0xff]
      %v1429 = vld [vmem:[%s6 + $0x58] sm:$0xff]
      %v1430 = vld [vmem:[%s6 + $0x60] sm:$0xff]
      %v1431 = vld [vmem:[%s6 + $0x68] sm:$0xff]
      %v1432 = vld [vmem:[%s6 + $0x70] sm:$0xff]
      %v1433 = vld [vmem:[%s6 + $0x78] sm:$0xff]
      %v1434 = vld [vmem:[%s6 + $0x80] sm:$0xff]
      %v1435 = vld [vmem:[%s6 + $0x88] sm:$0xff]
      %v1436 = vld [vmem:[%s6 + $0x90] sm:$0xff]
      %v1437 = vld [vmem:[%s6 + $0x98] sm:$0xff]
      %v1438 = vld [vmem:[%s6 + $0xa0] sm:$0xff]
      %v1439 = vld [vmem:[%s6 + $0xa8] sm:$0xff]
      %v1440 = vld [vmem:[%s6 + $0xb0] sm:$0xff]
      %v1441 = vld [vmem:[%s6 + $0xb8] sm:$0xff]
      %v1442 = vld [vmem:[%s6 + $0xc0] sm:$0xff]
      %v1443 = vld [vmem:[%s6 + $0xc8] sm:$0xff]
      %v1444 = vld [vmem:[%s6 + $0xd0] sm:$0xff]
      %v1445 = vld [vmem:[%s6 + $0xd8] sm:$0xff]
      %v1446 = vld [vmem:[%s6 + $0xe0] sm:$0xff]
      %v1447 = vld [vmem:[%s6 + $0xe8] sm:$0xff]
      %v1448 = vld [vmem:[%s6 + $0xf0] sm:$0xff]
      %v1449 = vld [vmem:[%s6 + $0xf8] sm:$0xff]
      %v1451 = vlaneseq
      %v1452 = vshrl.u32 %v1451, 7
      %v1453 = vsub.s32 0, %v1452
      %v1454 = vrot.slane %v1196, %v1453
      %1456 = vmatprep.subr.mxu0 0.0
      %1457 = vmatpush1.msra.mxu0 %v1418
      %1458 = vmatprep.subr.mxu0 0.0
      %1459 = vmatpush1.msra.mxu0 %v1419
      %1460 = vmatprep.subr.mxu0 0.0
      %1461 = vmatpush1.msra.mxu0 %v1420
      %1462 = vmatprep.subr.mxu0 0.0
      %1463 = vmatpush1.msra.mxu0 %v1421
      %1464 = vmatprep.subr.mxu0 0.0
      %1465 = vmatpush1.msra.mxu0 %v1422
      %1466 = vmatprep.subr.mxu0 0.0
      %1467 = vmatpush1.msra.mxu0 %v1423
      %1468 = vmatprep.subr.mxu0 0.0
      %1469 = vmatpush1.msra.mxu0 %v1424
      %1470 = vmatprep.subr.mxu0 0.0
      %1471 = vmatpush1.msra.mxu0 %v1425
      %1472 = vmatprep.subr.mxu0 0.0
      %1473 = vmatpush1.msra.mxu0 %v1426
      %1474 = vmatprep.subr.mxu0 0.0
      %1475 = vmatpush1.msra.mxu0 %v1427
      %1476 = vmatprep.subr.mxu0 0.0
      %1477 = vmatpush1.msra.mxu0 %v1428
      %1478 = vmatprep.subr.mxu0 0.0
      %1479 = vmatpush1.msra.mxu0 %v1429
      %1480 = vmatprep.subr.mxu0 0.0
      %1481 = vmatpush1.msra.mxu0 %v1430
      %1482 = vmatprep.subr.mxu0 0.0
      %1483 = vmatpush1.msra.mxu0 %v1431
      %1484 = vmatprep.subr.mxu0 0.0
      %1485 = vmatpush1.msra.mxu0 %v1432
      %1486 = vmatprep.subr.mxu0 0.0
      %1487 = vmatpush1.msra.mxu0 %v1433
      %1488 = vmatprep.subr.mxu0 0.0
      %1489 = vmatpush1.msra.mxu0 %v1434
      %1490 = vmatprep.subr.mxu0 0.0
      %1491 = vmatpush1.msra.mxu0 %v1435
      %1492 = vmatprep.subr.mxu0 0.0
      %1493 = vmatpush1.msra.mxu0 %v1436
      %1494 = vmatprep.subr.mxu0 0.0
      %1495 = vmatpush1.msra.mxu0 %v1437
      %1496 = vmatprep.subr.mxu0 0.0
      %1497 = vmatpush1.msra.mxu0 %v1438
      %1498 = vmatprep.subr.mxu0 0.0
      %1499 = vmatpush1.msra.mxu0 %v1439
      %1500 = vmatprep.subr.mxu0 0.0
      %1501 = vmatpush1.msra.mxu0 %v1440
      %1502 = vmatprep.subr.mxu0 0.0
      %1503 = vmatpush1.msra.mxu0 %v1441
      %1504 = vmatprep.subr.mxu0 0.0
      %1505 = vmatpush1.msra.mxu0 %v1442
      %1506 = vmatprep.subr.mxu0 0.0
      %1507 = vmatpush1.msra.mxu0 %v1443
      %1508 = vmatprep.subr.mxu0 0.0
      %1509 = vmatpush1.msra.mxu0 %v1444
      %1510 = vmatprep.subr.mxu0 0.0
      %1511 = vmatpush1.msra.mxu0 %v1445
      %1512 = vmatprep.subr.mxu0 0.0
      %1513 = vmatpush1.msra.mxu0 %v1446
      %1514 = vmatprep.subr.mxu0 0.0
      %1515 = vmatpush1.msra.mxu0 %v1447
      %1516 = vmatprep.subr.mxu0 0.0
      %1517 = vmatpush1.msra.mxu0 %v1448
      %1518 = vmatprep.subr.mxu0 0.0
      %1519 = vmatpush1.msra.mxu0 %v1449
      %1520 = vmatprep.mubr.f32.mxu0 %v1417
      %1521 = vmatmul.mubr.f32.gmra.mrb[0].mxu0 %v1416
      %v1522 = vpop.f32.mrb[0].mxu0
      %v1523 = vadd.f32 %v1454, %v1522
      %v1524 = vpop.f32.mrb[0].mxu0
      %1525 = vdwg.mxu0
      %v1526 = vadd.f32 %v1523, %v1182
      %1527 = vst [vmem:[%s300] sm:$0xff] %v1526
      %p1528 = scmp.lt.s32.totalorder %s19, 1
      %s1529 = scalar_select %p1528, %s19, 1
      %s1530 = smul.addr %s1529, 8
      %s1531 = scalar_lea.vmem %s8, %s1530
      // Predicated region
      $region53: #{transformer_forward.5} parent=51 // pred_check
        %p1532 = pneg %p210
      $region54: #{transformer_forward.5} parent=51 // pred_check_branch
        %1534 = sbr.rel (%p1532) target = $region56
      $region55: #{transformer_forward.5} parent=51 // pred_region
        _
      $region56: #{transformer_forward.5} parent=51 // pred_fallthru
        _
    $region52: #{transformer_forward.5} parent=5 // pred_fallthru
      _
    %p1535 = scmp.le.s32.totalorder 2, %s14
    // Predicated region
    $region57: #{transformer_forward.5} parent=5 // pred_check
      %p1536 = pneg %p1535
    $region58: #{transformer_forward.5} parent=5 // pred_check_branch
      %1538 = sbr.rel (%p1536) target = $region60
    $region59: #{transformer_forward.5} parent=5 // pred_region
      %s1539 = ssub.s32 %s14, 2
      // Predicated region
      $region61: #{transformer_forward.5} parent=59 // pred_check
        %p1540 = pneg %p216
      $region62: #{transformer_forward.5} parent=59 // pred_check_branch
        %1542 = sbr.rel (%p1540) target = $region64
      $region63: #{transformer_forward.5} parent=59 // pred_region
        %p1543 = scmp.lt.s32.totalorder %s20, 1
        %s1544 = scalar_select %p1543, %s20, 1
        %s1545 = smul.addr %s1544, 8
        %s1546 = scalar_lea.vmem %s8, %s1545
      $region64: #{transformer_forward.5} parent=59 // pred_fallthru
        _
    $region60: #{transformer_forward.5} parent=5 // pred_fallthru
      _
  $region6: #{transformer_forward.5} parent=0 // loop_footer
    %s18 = sadd.s32 1, %s14
  $region7: #{transformer_forward.5} parent=0 // loop_footer_branch
    %13 = sbr.rel target = $region3
  $region8: #{transformer_forward.5} parent=0 // loop_exit
    _

// kernel: transformer_forward.4
$region0: #{transformer_forward.4}
  #allocation0 [shape = 'u32[]', space=smem, size = 0x4, offset = 0x4, fixed_abs, tag = 'smem constant byte address 0x4 - core index']
  #allocation1 [shape = 'u32[144,128]{1,0:T(1,128)}', space=vmem, size = 0x12000, scoped, tag = 'internal scratch']
  %s0 = inlined_call_operand.vmem [shape: f32[2,8,128], index: 0, kind: input, shape index: {}]
  %s1 = inlined_call_operand.hbm [shape: f32[128,384], index: 1, kind: input, shape index: {}]
  %s2 = inlined_call_operand.hbm [shape: f32[128,128], index: 2, kind: input, shape index: {}]
  %s3 = inlined_call_operand.vmem [shape: f32[1,128], index: 3, kind: input, shape index: {}]
  %s4 = inlined_call_operand.hbm [shape: f32[128,256], index: 4, kind: input, shape index: {}]
  %s5 = inlined_call_operand.vmem [shape: f32[1,256], index: 5, kind: input, shape index: {}]
  %s6 = inlined_call_operand.hbm [shape: f32[256,128], index: 6, kind: input, shape index: {}]
  %s7 = inlined_call_operand.vmem [shape: f32[1,128], index: 7, kind: input, shape index: {}]
  %s8 = inlined_call_operand.vmem [shape: f32[2,8,128], index: 8, kind: output, shape index: {}]
  %s9 = sld [smem:[#allocation0]]
  $region81: #{transformer_forward.4} parent=0
    _
  %s11 = ssub.s32 1, %s9
  %s12 = scalar_select 0, %s11, %s9
  $region1: #{transformer_forward.4} parent=0
    #allocation2 [shape = 'u8[196608]{0}', space=vmem, size = 0x30000, scoped, tag = 'input window, operand 1, single buffered']
    #allocation3 [shape = 's32[2]{0}', space=sflag, size = 0x8, scoped, tag = 'scoped memory for transformer_forward.4']
    #allocation4 [shape = 'u8[65536]{0}', space=vmem, size = 0x10000, scoped, tag = 'input window, operand 2, single buffered']
    #allocation5 [shape = 's32[1]{0}', space=sflag, size = 0x4, scoped, tag = 'scoped memory for transformer_forward.4']
    #allocation6 [shape = 'u8[131072]{0}', space=vmem, size = 0x20000, scoped, tag = 'input window, operand 4, single buffered']
    #allocation7 [shape = 'u8[131072]{0}', space=vmem, size = 0x20000, scoped, tag = 'input window, operand 6, single buffered']
    #allocation8 [shape = 's32[1]{0}', space=sflag, size = 0x4, scoped, tag = 'scoped memory for transformer_forward.4']
    %13 = vsyncpa [#allocation3], 0
    %14 = vsyncpa [#allocation5], 0
    %15 = vsyncpa [#allocation8], 0
    loop: start=0, step=1, limit=4
    $region2: #{transformer_forward.4} parent=1 // loop_pre_header
      _
    $region3: #{transformer_forward.4} parent=1 // loop_header
      %s17 = sphi 0, %s21
      %p18 = scmp.ge.s32.totalorder %s17, 4
      %s27 = sphi 0, %s29
      %s30 = sphi 0, %s27
      %s31 = sphi 0, %s30
      %s47 = sphi 0, %s31
      %s51 = sphi 0, %s51
      %s53 = sphi 0, %s51
      %s54 = sphi 0, %s53
      %s68 = sphi 0, %s54
      %s72 = sphi 0, %s72
      %s74 = sphi 0, %s72
      %s75 = sphi 0, %s74
      %s89 = sphi 0, %s75
      %s93 = sphi 0, %s93
      %s95 = sphi 0, %s93
      %s96 = sphi 0, %s95
      %s110 = sphi 0, %s96
      %s114 = sphi 0, %s114
      %s116 = sphi 0, %s114
      %s117 = sphi 0, %s116
      %s131 = sphi 0, %s117
      %s135 = sphi 0, %s135
      %s137 = sphi 0, %s135
      %s138 = sphi 0, %s137
      %s152 = sphi 0, %s138
      %s156 = sphi 0, %s156
      %s158 = sphi 0, %s156
      %s159 = sphi 0, %s158
      %s173 = sphi 0, %s159
      %s177 = sphi 0, %s177
      %s179 = sphi 0, %s177
      %s180 = sphi 0, %s179
      %s194 = sphi 0, %s180
      %s200 = sphi 0, %s202
      %s203 = sphi 0, %s200
      %s204 = sphi 0, %s203
      %s220 = sphi 0, %s204
    $region4: #{transformer_forward.4} parent=1 // loop_header_branch
      %20 = sbr.rel (%p18) target = $region8
    $region5: #{transformer_forward.4} parent=1 // loop_body
      %s22 = ssub.s32 %s17, 1
      %s23 = ssub.s32 %s17, 2
      %s24 = sadd.s32 %s17, 1
      %s25 = ssub.s32 %s17, %s24
      %p26 = scmp.eq.s32.totalorder %s25, 0
      %s28 = sadd.s32 %s27, 1
      %s29 = scalar_select %p26, %s27, %s28
      %p32 = pneg %p26
      %p33 = scmp.eq.s32.totalorder %s17, 1
      %p34 = por %p32, %p33
      %p35 = scmp.ne.s32.totalorder %s27, %s30
      %p36 = scmp.eq.s32.totalorder %s17, 0
      %p37 = por %p35, %p36
      %p38 = scmp.ne.s32.totalorder %s27, %s30
      %p39 = scmp.eq.s32.totalorder %s22, 1
      %p40 = por %p38, %p39
      %p41 = scmp.ne.s32.totalorder %s30, %s31
      %p42 = scmp.eq.s32.totalorder %s22, 0
      %p43 = por %p41, %p42
      %p44 = scmp.ne.s32.totalorder %s30, %s31
      %p45 = scmp.eq.s32.totalorder %s23, 1
      %p46 = por %p44, %p45
      %p48 = scmp.ne.s32.totalorder %s31, %s47
      %p49 = scmp.eq.s32.totalorder %s23, 0
      %p50 = por %p48, %p49
      %s52 = sadd.s32 %s51, 1
      %p55 = scmp.eq.s32.totalorder %s17, 1
      %p56 = scmp.ne.s32.totalorder %s51, %s53
      %p57 = scmp.eq.s32.totalorder %s17, 0
      %p58 = por %p56, %p57
      %p59 = scmp.ne.s32.totalorder %s51, %s53
      %p60 = scmp.eq.s32.totalorder %s22, 1
      %p61 = por %p59, %p60
      %p62 = scmp.ne.s32.totalorder %s53, %s54
      %p63 = scmp.eq.s32.totalorder %s22, 0
      %p64 = por %p62, %p63
      %p65 = scmp.ne.s32.totalorder %s53, %s54
      %p66 = scmp.eq.s32.totalorder %s23, 1
      %p67 = por %p65, %p66
      %p69 = scmp.ne.s32.totalorder %s54, %s68
      %p70 = scmp.eq.s32.totalorder %s23, 0
      %p71 = por %p69, %p70
      %s73 = sadd.s32 %s72, 1
      %p76 = scmp.eq.s32.totalorder %s17, 1
      %p77 = scmp.ne.s32.totalorder %s72, %s74
      %p78 = scmp.eq.s32.totalorder %s17, 0
      %p79 = por %p77, %p78
      %p80 = scmp.ne.s32.totalorder %s72, %s74
      %p81 = scmp.eq.s32.totalorder %s22, 1
      %p82 = por %p80, %p81
      %p83 = scmp.ne.s32.totalorder %s74, %s75
      %p84 = scmp.eq.s32.totalorder %s22, 0
      %p85 = por %p83, %p84
      %p86 = scmp.ne.s32.totalorder %s74, %s75
      %p87 = scmp.eq.s32.totalorder %s23, 1
      %p88 = por %p86, %p87
      %p90 = scmp.ne.s32.totalorder %s75, %s89
      %p91 = scmp.eq.s32.totalorder %s23, 0
      %p92 = por %p90, %p91
      %s94 = sadd.s32 %s93, 1
      %p97 = scmp.eq.s32.totalorder %s17, 1
      %p98 = scmp.ne.s32.totalorder %s93, %s95
      %p99 = scmp.eq.s32.totalorder %s17, 0
      %p100 = por %p98, %p99
      %p101 = scmp.ne.s32.totalorder %s93, %s95
      %p102 = scmp.eq.s32.totalorder %s22, 1
      %p103 = por %p101, %p102
      %p104 = scmp.ne.s32.totalorder %s95, %s96
      %p105 = scmp.eq.s32.totalorder %s22, 0
      %p106 = por %p104, %p105
      %p107 = scmp.ne.s32.totalorder %s95, %s96
      %p108 = scmp.eq.s32.totalorder %s23, 1
      %p109 = por %p107, %p108
      %p111 = scmp.ne.s32.totalorder %s96, %s110
      %p112 = scmp.eq.s32.totalorder %s23, 0
      %p113 = por %p111, %p112
      %s115 = sadd.s32 %s114, 1
      %p118 = scmp.eq.s32.totalorder %s17, 1
      %p119 = scmp.ne.s32.totalorder %s114, %s116
      %p120 = scmp.eq.s32.totalorder %s17, 0
      %p121 = por %p119, %p120
      %p122 = scmp.ne.s32.totalorder %s114, %s116
      %p123 = scmp.eq.s32.totalorder %s22, 1
      %p124 = por %p122, %p123
      %p125 = scmp.ne.s32.totalorder %s116, %s117
      %p126 = scmp.eq.s32.totalorder %s22, 0
      %p127 = por %p125, %p126
      %p128 = scmp.ne.s32.totalorder %s116, %s117
      %p129 = scmp.eq.s32.totalorder %s23, 1
      %p130 = por %p128, %p129
      %p132 = scmp.ne.s32.totalorder %s117, %s131
      %p133 = scmp.eq.s32.totalorder %s23, 0
      %p134 = por %p132, %p133
      %s136 = sadd.s32 %s135, 1
      %p139 = scmp.eq.s32.totalorder %s17, 1
      %p140 = scmp.ne.s32.totalorder %s135, %s137
      %p141 = scmp.eq.s32.totalorder %s17, 0
      %p142 = por %p140, %p141
      %p143 = scmp.ne.s32.totalorder %s135, %s137
      %p144 = scmp.eq.s32.totalorder %s22, 1
      %p145 = por %p143, %p144
      %p146 = scmp.ne.s32.totalorder %s137, %s138
      %p147 = scmp.eq.s32.totalorder %s22, 0
      %p148 = por %p146, %p147
      %p149 = scmp.ne.s32.totalorder %s137, %s138
      %p150 = scmp.eq.s32.totalorder %s23, 1
      %p151 = por %p149, %p150
      %p153 = scmp.ne.s32.totalorder %s138, %s152
      %p154 = scmp.eq.s32.totalorder %s23, 0
      %p155 = por %p153, %p154
      %s157 = sadd.s32 %s156, 1
      %p160 = scmp.eq.s32.totalorder %s17, 1
      %p161 = scmp.ne.s32.totalorder %s156, %s158
      %p162 = scmp.eq.s32.totalorder %s17, 0
      %p163 = por %p161, %p162
      %p164 = scmp.ne.s32.totalorder %s156, %s158
      %p165 = scmp.eq.s32.totalorder %s22, 1
      %p166 = por %p164, %p165
      %p167 = scmp.ne.s32.totalorder %s158, %s159
      %p168 = scmp.eq.s32.totalorder %s22, 0
      %p169 = por %p167, %p168
      %p170 = scmp.ne.s32.totalorder %s158, %s159
      %p171 = scmp.eq.s32.totalorder %s23, 1
      %p172 = por %p170, %p171
      %p174 = scmp.ne.s32.totalorder %s159, %s173
      %p175 = scmp.eq.s32.totalorder %s23, 0
      %p176 = por %p174, %p175
      %s178 = sadd.s32 %s177, 1
      %p181 = scmp.eq.s32.totalorder %s17, 1
      %p182 = scmp.ne.s32.totalorder %s177, %s179
      %p183 = scmp.eq.s32.totalorder %s17, 0
      %p184 = por %p182, %p183
      %p185 = scmp.ne.s32.totalorder %s177, %s179
      %p186 = scmp.eq.s32.totalorder %s22, 1
      %p187 = por %p185, %p186
      %p188 = scmp.ne.s32.totalorder %s179, %s180
      %p189 = scmp.eq.s32.totalorder %s22, 0
      %p190 = por %p188, %p189
      %p191 = scmp.ne.s32.totalorder %s179, %s180
      %p192 = scmp.eq.s32.totalorder %s23, 1
      %p193 = por %p191, %p192
      %p195 = scmp.ne.s32.totalorder %s180, %s194
      %p196 = scmp.eq.s32.totalorder %s23, 0
      %p197 = por %p195, %p196
      %s198 = ssub.s32 %s17, %s24
      %p199 = scmp.eq.s32.totalorder %s198, 0
      %s201 = sadd.s32 %s200, 1
      %s202 = scalar_select %p199, %s200, %s201
      %p205 = pneg %p199
      %p206 = scmp.eq.s32.totalorder %s17, 1
      %p207 = por %p205, %p206
      %p208 = scmp.ne.s32.totalorder %s200, %s203
      %p209 = scmp.eq.s32.totalorder %s17, 0
      %p210 = por %p208, %p209
      %p211 = scmp.ne.s32.totalorder %s200, %s203
      %p212 = scmp.eq.s32.totalorder %s22, 1
      %p213 = por %p211, %p212
      %p214 = scmp.ne.s32.totalorder %s203, %s204
      %p215 = scmp.eq.s32.totalorder %s22, 0
      %p216 = por %p214, %p215
      %p217 = scmp.ne.s32.totalorder %s203, %s204
      %p218 = scmp.eq.s32.totalorder %s23, 1
      %p219 = por %p217, %p218
      %p221 = scmp.ne.s32.totalorder %s204, %s220
      %p222 = scmp.eq.s32.totalorder %s23, 0
      %p223 = por %p221, %p222
      %p224 = scmp.le.s32.totalorder 1, %s17
      %p225 = scmp.lt.s32.totalorder %s17, 3
      %p226 = pnand %p224, %p225
      %p227 = pneg %p226
      // Predicated region
      $region9: #{transformer_forward.4} parent=5 // pred_check
        _
      $region10: #{transformer_forward.4} parent=5 // pred_check_branch
        %229 = sbr.rel (%p226) target = $region12
      $region11: #{transformer_forward.4} parent=5 // pred_region
        %s230 = ssub.s32 %s17, 1
        // Predicated region
        $region13: #{transformer_forward.4} parent=11 // pred_check
          %p231 = pneg %p64
        $region14: #{transformer_forward.4} parent=11 // pred_check_branch
          %233 = sbr.rel (%p231) target = $region16
        $region15: #{transformer_forward.4} parent=11 // pred_region
          %s235 = ssub.s32 6144, 6144
          %236 = vsyncadd [#allocation3], %s235
          %s237 = sshll.u32 [#allocation2], 4
          %s238 = int_to_ptr.vmem [resolvable:$true] %s237
          %243 = dma.hbm_to_vmem [thread:$0]  %s1, 6144, %s238, [#allocation3], 384, 384, 24
        $region16: #{transformer_forward.4} parent=11 // pred_fallthru
          _
        // Predicated region
        $region17: #{transformer_forward.4} parent=11 // pred_check
          %p244 = pneg %p85
        $region18: #{transformer_forward.4} parent=11 // pred_check_branch
          %246 = sbr.rel (%p244) target = $region20
        $region19: #{transformer_forward.4} parent=11 // pred_region
          %s248 = ssub.s32 2048, 2048
          %249 = vsyncadd [#allocation5], %s248
          %s250 = sshll.u32 [#allocation4], 4
          %s251 = int_to_ptr.vmem [resolvable:$true] %s250
          %256 = dma.hbm_to_vmem [thread:$0]  %s2, 2048, %s251, [#allocation5], 128, 128, 8
        $region20: #{transformer_forward.4} parent=11 // pred_fallthru
          _
        // Predicated region
        $region21: #{transformer_forward.4} parent=11 // pred_check
          %p257 = pneg %p106
        $region22: #{transformer_forward.4} parent=11 // pred_check_branch
          %259 = sbr.rel (%p257) target = $region24
        $region23: #{transformer_forward.4} parent=11 // pred_region
          _
        $region24: #{transformer_forward.4} parent=11 // pred_fallthru
          _
        // Predicated region
        $region25: #{transformer_forward.4} parent=11 // pred_check
          %p260 = pneg %p127
        $region26: #{transformer_forward.4} parent=11 // pred_check_branch
          %262 = sbr.rel (%p260) target = $region28
        $region27: #{transformer_forward.4} parent=11 // pred_region
          %s264 = ssub.s32 4096, 4096
          %265 = vsyncadd [#allocation5], %s264
          %s266 = sshll.u32 [#allocation6], 4
          %s267 = int_to_ptr.vmem [resolvable:$true] %s266
          %272 = dma.hbm_to_vmem [thread:$0]  %s4, 4096, %s267, [#allocation5], 256, 256, 16
        $region28: #{transformer_forward.4} parent=11 // pred_fallthru
          _
        // Predicated region
        $region29: #{transformer_forward.4} parent=11 // pred_check
          %p273 = pneg %p148
        $region30: #{transformer_forward.4} parent=11 // pred_check_branch
          %275 = sbr.rel (%p273) target = $region32
        $region31: #{transformer_forward.4} parent=11 // pred_region
          _
        $region32: #{transformer_forward.4} parent=11 // pred_fallthru
          _
        // Predicated region
        $region33: #{transformer_forward.4} parent=11 // pred_check
          %p276 = pneg %p169
        $region34: #{transformer_forward.4} parent=11 // pred_check_branch
          %278 = sbr.rel (%p276) target = $region36
        $region35: #{transformer_forward.4} parent=11 // pred_region
          %s280 = ssub.s32 4096, 4096
          %281 = vsyncadd [#allocation8], %s280
          %s282 = sshll.u32 [#allocation7], 4
          %s283 = int_to_ptr.vmem [resolvable:$true] %s282
          %288 = dma.hbm_to_vmem [thread:$0]  %s6, 4096, %s283, [#allocation8], 128, 128, 8
        $region36: #{transformer_forward.4} parent=11 // pred_fallthru
          _
        // Predicated region
        $region37: #{transformer_forward.4} parent=11 // pred_check
          %p289 = pneg %p190
        $region38: #{transformer_forward.4} parent=11 // pred_check_branch
          %291 = sbr.rel (%p289) target = $region40
        $region39: #{transformer_forward.4} parent=11 // pred_region
          _
        $region40: #{transformer_forward.4} parent=11 // pred_fallthru
          _
      $region12: #{transformer_forward.4} parent=5 // pred_fallthru
        _
      %p292 = scmp.lt.s32.totalorder %s17, 2
      // Predicated region
      $region41: #{transformer_forward.4} parent=5 // pred_check
        %p293 = pneg %p292
      $region42: #{transformer_forward.4} parent=5 // pred_check_branch
        %295 = sbr.rel (%p293) target = $region44
      $region43: #{transformer_forward.4} parent=5 // pred_region
        // Predicated region
        $region45: #{transformer_forward.4} parent=43 // pred_check
          %p296 = pneg %p37
        $region46: #{transformer_forward.4} parent=43 // pred_check_branch
          %298 = sbr.rel (%p296) target = $region48
        $region47: #{transformer_forward.4} parent=43 // pred_region
          %p299 = scmp.lt.s32.totalorder %s17, 1
          %s300 = scalar_select %p299, %s17, 1
          %s301 = smul.addr %s300, 8
          %s302 = scalar_lea.vmem %s0, %s301
        $region48: #{transformer_forward.4} parent=43 // pred_fallthru
          _
      $region44: #{transformer_forward.4} parent=5 // pred_fallthru
        _
      %p303 = scmp.le.s32.totalorder 1, %s17
      %p304 = scmp.lt.s32.totalorder %s17, 3
      %p305 = pnand %p303, %p304
      %p306 = pneg %p305
      // Predicated region
      $region49: #{transformer_forward.4} parent=5 // pred_check
        _
      $region50: #{transformer_forward.4} parent=5 // pred_check_branch
        %308 = sbr.rel (%p305) target = $region52
      $region51: #{transformer_forward.4} parent=5 // pred_region
        %s309 = ssub.s32 %s17, 1
        // Predicated region
        $region53: #{transformer_forward.4} parent=51 // pred_check
          %p310 = pneg %p64
        $region54: #{transformer_forward.4} parent=51 // pred_check_branch
          %312 = sbr.rel (%p310) target = $region56
        $region55: #{transformer_forward.4} parent=51 // pred_region
          %313 = dma.done [#allocation3], 6144
        $region56: #{transformer_forward.4} parent=51 // pred_fallthru
          _
        // Predicated region
        $region57: #{transformer_forward.4} parent=51 // pred_check
          %p314 = pneg %p85
        $region58: #{transformer_forward.4} parent=51 // pred_check_branch
          %316 = sbr.rel (%p314) target = $region60
        $region59: #{transformer_forward.4} parent=51 // pred_region
          %317 = dma.done [#allocation5], 2048
        $region60: #{transformer_forward.4} parent=51 // pred_fallthru
          _
        // Predicated region
        $region61: #{transformer_forward.4} parent=51 // pred_check
          %p318 = pneg %p127
        $region62: #{transformer_forward.4} parent=51 // pred_check_branch
          %320 = sbr.rel (%p318) target = $region64
        $region63: #{transformer_forward.4} parent=51 // pred_region
          %321 = dma.done [#allocation5], 4096
        $region64: #{transformer_forward.4} parent=51 // pred_fallthru
          _
        // Predicated region
        $region65: #{transformer_forward.4} parent=51 // pred_check
          %p322 = pneg %p169
        $region66: #{transformer_forward.4} parent=51 // pred_check_branch
          %324 = sbr.rel (%p322) target = $region68
        $region67: #{transformer_forward.4} parent=51 // pred_region
          %325 = dma.done [#allocation8], 4096
        $region68: #{transformer_forward.4} parent=51 // pred_fallthru
          _
        %p326 = scmp.lt.s32.totalorder %s22, 1
        %s327 = scalar_select %p326, %s22, 1
        %s328 = smul.addr %s327, 8
        %s329 = scalar_lea.vmem %s0, %s328
        %p330 = pneg %p43
        %p331 = pneg %p40
        %p332 = pneg %p64
        %p333 = pneg %p61
        %p334 = pneg %p85
        %p335 = pneg %p82
        %p336 = pneg %p106
        %p337 = pneg %p103
        %p338 = pneg %p127
        %p339 = pneg %p124
        %p340 = pneg %p148
        %p341 = pneg %p145
        %p342 = pneg %p169
        %p343 = pneg %p166
        %p344 = pneg %p190
        %p345 = pneg %p187
        %p346 = pneg %p216
        %p347 = pneg %p213
        %p348 = scmp.lt.s32.totalorder %s22, 1
        %s349 = scalar_select %p348, %s22, 1
        %s350 = smul.addr %s349, 8
        %s351 = scalar_lea.vmem %s8, %s350
        %p352 = scmp.lt.s32.totalorder %s22, 1
        %s353 = scalar_select %p352, %s22, 1
        %s354 = smul.addr %s353, 8
        %s355 = scalar_lea.vmem %s0, %s354
        %p356 = scmp.lt.s32.totalorder %s22, 1
        %s357 = scalar_select %p356, %s22, 1
        %s358 = smul.addr %s357, 8
        %s359 = scalar_lea.vmem %s8, %s358
        %v360 = vld [vmem:[%s355] sm:$0xff]
        %361 = vadd.xlane.f32.xlu0 %v360
        %v362 = vpop.xlane.xlu0 %361
        %v363 = vrcp.pop 128.0
        %v364 = vmul.f32 %v362, %v363
        %v365 = vsub.f32 %v360, %v364
        %v366 = vmul.f32 %v365, %v365
        %367 = vadd.xlane.f32.xlu0 %v366
        %v368 = vpop.xlane.xlu0 %367
        %v369 = vmul.f32 %v368, %v363
        %v370 = vadd.f32 %v369, 1e-05
        %v371 = vrsqrt.pop %v370
        %v372 = vmul.f32 %v365, %v371
        %v373 = vld [vmem:[#allocation2] sm:$0xff]
        %v374 = vld [vmem:[#allocation2 + $0x8] sm:$0xff]
        %v375 = vld [vmem:[#allocation2 + $0x10] sm:$0xff]
        %v376 = vld [vmem:[#allocation2 + $0x18] sm:$0xff]
        %v377 = vld [vmem:[#allocation2 + $0x20] sm:$0xff]
        %v378 = vld [vmem:[#allocation2 + $0x28] sm:$0xff]
        %v379 = vld [vmem:[#allocation2 + $0x30] sm:$0xff]
        %v380 = vld [vmem:[#allocation2 + $0x38] sm:$0xff]
        %v381 = vld [vmem:[#allocation2 + $0x40] sm:$0xff]
        %v382 = vld [vmem:[#allocation2 + $0x48] sm:$0xff]
        %v383 = vld [vmem:[#allocation2 + $0x50] sm:$0xff]
        %v384 = vld [vmem:[#allocation2 + $0x58] sm:$0xff]
        %v385 = vld [vmem:[#allocation2 + $0x60] sm:$0xff]
        %v386 = vld [vmem:[#allocation2 + $0x68] sm:$0xff]
        %v387 = vld [vmem:[#allocation2 + $0x70] sm:$0xff]
        %v388 = vld [vmem:[#allocation2 + $0x78] sm:$0xff]
        %v389 = vld [vmem:[#allocation2 + $0x80] sm:$0xff]
        %v390 = vld [vmem:[#allocation2 + $0x88] sm:$0xff]
        %v391 = vld [vmem:[#allocation2 + $0x90] sm:$0xff]
        %v392 = vld [vmem:[#allocation2 + $0x98] sm:$0xff]
        %v393 = vld [vmem:[#allocation2 + $0xa0] sm:$0xff]
        %v394 = vld [vmem:[#allocation2 + $0xa8] sm:$0xff]
        %v395 = vld [vmem:[#allocation2 + $0xb0] sm:$0xff]
        %v396 = vld [vmem:[#allocation2 + $0xb8] sm:$0xff]
        %v397 = vld [vmem:[#allocation2 + $0xc0] sm:$0xff]
        %v398 = vld [vmem:[#allocation2 + $0xc8] sm:$0xff]
        %v399 = vld [vmem:[#allocation2 + $0xd0] sm:$0xff]
        %v400 = vld [vmem:[#allocation2 + $0xd8] sm:$0xff]
        %v401 = vld [vmem:[#allocation2 + $0xe0] sm:$0xff]
        %v402 = vld [vmem:[#allocation2 + $0xe8] sm:$0xff]
        %v403 = vld [vmem:[#allocation2 + $0xf0] sm:$0xff]
        %v404 = vld [vmem:[#allocation2 + $0xf8] sm:$0xff]
        %v405 = vld [vmem:[#allocation2 + $0x100] sm:$0xff]
        %v406 = vld [vmem:[#allocation2 + $0x108] sm:$0xff]
        %v407 = vld [vmem:[#allocation2 + $0x110] sm:$0xff]
        %v408 = vld [vmem:[#allocation2 + $0x118] sm:$0xff]
        %v409 = vld [vmem:[#allocation2 + $0x120] sm:$0xff]
        %v410 = vld [vmem:[#allocation2 + $0x128] sm:$0xff]
        %v411 = vld [vmem:[#allocation2 + $0x130] sm:$0xff]
        %v412 = vld [vmem:[#allocation2 + $0x138] sm:$0xff]
        %v413 = vld [vmem:[#allocation2 + $0x140] sm:$0xff]
        %v414 = vld [vmem:[#allocation2 + $0x148] sm:$0xff]
        %v415 = vld [vmem:[#allocation2 + $0x150] sm:$0xff]
        %v416 = vld [vmem:[#allocation2 + $0x158] sm:$0xff]
        %v417 = vld [vmem:[#allocation2 + $0x160] sm:$0xff]
        %v418 = vld [vmem:[#allocation2 + $0x168] sm:$0xff]
        %v419 = vld [vmem:[#allocation2 + $0x170] sm:$0xff]
        %v420 = vld [vmem:[#allocation2 + $0x178] sm:$0xff]
        %421 = vmatprep.subr.mxu0 %v374
        %422 = vmatpush1.msra.mxu0 %v373
        %423 = vmatprep.subr.mxu0 %v377
        %424 = vmatpush1.msra.mxu0 %v376
        %425 = vmatprep.subr.mxu0 %v380
        %426 = vmatpush1.msra.mxu0 %v379
        %427 = vmatprep.subr.mxu0 %v383
        %428 = vmatpush1.msra.mxu0 %v382
        %429 = vmatprep.subr.mxu0 %v386
        %430 = vmatpush1.msra.mxu0 %v385
        %431 = vmatprep.subr.mxu0 %v389
        %432 = vmatpush1.msra.mxu0 %v388
        %433 = vmatprep.subr.mxu0 %v392
        %434 = vmatpush1.msra.mxu0 %v391
        %435 = vmatprep.subr.mxu0 %v395
        %436 = vmatpush1.msra.mxu0 %v394
        %437 = vmatprep.subr.mxu0 %v398
        %438 = vmatpush1.msra.mxu0 %v397
        %439 = vmatprep.subr.mxu0 %v401
        %440 = vmatpush1.msra.mxu0 %v400
        %441 = vmatprep.subr.mxu0 %v404
        %442 = vmatpush1.msra.mxu0 %v403
        %443 = vmatprep.subr.mxu0 %v407
        %444 = vmatpush1.msra.mxu0 %v406
        %445 = vmatprep.subr.mxu0 %v410
        %446 = vmatpush1.msra.mxu0 %v409
        %447 = vmatprep.subr.mxu0 %v413
        %448 = vmatpush1.msra.mxu0 %v412
        %449 = vmatprep.subr.mxu0 %v416
        %450 = vmatpush1.msra.mxu0 %v415
        %451 = vmatprep.subr.mxu0 %v419
        %452 = vmatpush1.msra.mxu0 %v418
        %453 = vmatprep.subr.mxu0 0.0
        %454 = vmatpush1.msra.mxu0 0.0
        %455 = vmatprep.subr.mxu0 0.0
        %456 = vmatpush1.msra.mxu0 0.0
        %457 = vmatprep.subr.mxu0 0.0
        %458 = vmatpush1.msra.mxu0 0.0
        %459 = vmatprep.subr.mxu0 0.0
        %460 = vmatpush1.msra.mxu0 0.0
        %461 = vmatprep.subr.mxu0 0.0
        %462 = vmatpush1.msra.mxu0 0.0
        %463 = vmatprep.subr.mxu0 0.0
        %464 = vmatpush1.msra.mxu0 0.0
        %465 = vmatprep.subr.mxu0 0.0
        %466 = vmatpush1.msra.mxu0 0.0
        %467 = vmatprep.subr.mxu0 0.0
        %468 = vmatpush1.msra.mxu0 0.0
        %469 = vmatprep.subr.mxu0 0.0
        %470 = vmatpush1.msra.mxu0 0.0
        %471 = vmatprep.subr.mxu0 0.0
        %472 = vmatpush1.msra.mxu0 0.0
        %473 = vmatprep.subr.mxu0 0.0
        %474 = vmatpush1.msra.mxu0 0.0
        %475 = vmatprep.subr.mxu0 0.0
        %476 = vmatpush1.msra.mxu0 0.0
        %477 = vmatprep.subr.mxu0 0.0
        %478 = vmatpush1.msra.mxu0 0.0
        %479 = vmatprep.subr.mxu0 0.0
        %480 = vmatpush1.msra.mxu0 0.0
        %481 = vmatprep.subr.mxu0 0.0
        %482 = vmatpush1.msra.mxu0 0.0
        %483 = vmatprep.subr.mxu0 0.0
        %484 = vmatpush1.msra.mxu0 0.0
        %485 = vmatprep.mubr.f32.mxu0 0.0
        %486 = vmatmul.mubr.f32.gmra.mrb[0].mxu0 %v372
        %v487 = vpop.f32.mrb[0].mxu0
        %v488 = vadd.f32 0.0, %v487
        %v489 = vpop.f32.mrb[0].mxu0
        %v490 = vadd.f32 0.0, %v489
        %491 = vdwg.mxu0
        %492 = vmatprep.subr.mxu0 0.0
        %493 = vmatpush1.msra.mxu0 %v375
        %494 = vmatprep.subr.mxu0 0.0
        %495 = vmatpush1.msra.mxu0 %v378
        %496 = vmatprep.subr.mxu0 0.0
        %497 = vmatpush1.msra.mxu0 %v381
        %498 = vmatprep.subr.mxu0 0.0
        %499 = vmatpush1.msra.mxu0 %v384
        %500 = vmatprep.subr.mxu0 0.0
        %501 = vmatpush1.msra.mxu0 %v387
        %502 = vmatprep.subr.mxu0 0.0
        %503 = vmatpush1.msra.mxu0 %v390
        %504 = vmatprep.subr.mxu0 0.0
        %505 = vmatpush1.msra.mxu0 %v393
        %506 = vmatprep.subr.mxu0 0.0
        %507 = vmatpush1.msra.mxu0 %v396
        %508 = vmatprep.subr.mxu0 0.0
        %509 = vmatpush1.msra.mxu0 %v399
        %510 = vmatprep.subr.mxu0 0.0
        %511 = vmatpush1.msra.mxu0 %v402
        %512 = vmatprep.subr.mxu0 0.0
        %513 = vmatpush1.msra.mxu0 %v405
        %514 = vmatprep.subr.mxu0 0.0
        %515 = vmatpush1.msra.mxu0 %v408
        %516 = vmatprep.subr.mxu0 0.0
        %517 = vmatpush1.msra.mxu0 %v411
        %518 = vmatprep.subr.mxu0 0.0
        %519 = vmatpush1.msra.mxu0 %v414
        %520 = vmatprep.subr.mxu0 0.0
        %521 = vmatpush1.msra.mxu0 %v417
        %522 = vmatprep.subr.mxu0 0.0
        %523 = vmatpush1.msra.mxu0 %v420
        %524 = vmatprep.subr.mxu0 0.0
        %525 = vmatpush1.msra.mxu0 0.0
        %526 = vmatprep.subr.mxu0 0.0
        %527 = vmatpush1.msra.mxu0 0.0
        %528 = vmatprep.subr.mxu0 0.0
        %529 = vmatpush1.msra.mxu0 0.0
        %530 = vmatprep.subr.mxu0 0.0
        %531 = vmatpush1.msra.mxu0 0.0
        %532 = vmatprep.subr.mxu0 0.0
        %533 = vmatpush1.msra.mxu0 0.0
        %534 = vmatprep.subr.mxu0 0.0
        %535 = vmatpush1.msra.mxu0 0.0
        %536 = vmatprep.subr.mxu0 0.0
        %537 = vmatpush1.msra.mxu0 0.0
        %538 = vmatprep.subr.mxu0 0.0
        %539 = vmatpush1.msra.mxu0 0.0
        %540 = vmatprep.subr.mxu0 0.0
        %541 = vmatpush1.msra.mxu0 0.0
        %542 = vmatprep.subr.mxu0 0.0
        %543 = vmatpush1.msra.mxu0 0.0
        %544 = vmatprep.subr.mxu0 0.0
        %545 = vmatpush1.msra.mxu0 0.0
        %546 = vmatprep.subr.mxu0 0.0
        %547 = vmatpush1.msra.mxu0 0.0
        %548 = vmatprep.subr.mxu0 0.0
        %549 = vmatpush1.msra.mxu0 0.0
        %550 = vmatprep.subr.mxu0 0.0
        %551 = vmatpush1.msra.mxu0 0.0
        %552 = vmatprep.subr.mxu0 0.0
        %553 = vmatpush1.msra.mxu0 0.0
        %554 = vmatprep.subr.mxu0 0.0
        %555 = vmatpush1.msra.mxu0 0.0
        %556 = vmatprep.mubr.f32.mxu0 0.0
        %557 = vmatmul.mubr.f32.gmra.mrb[0].mxu0 %v372
        %v558 = vpop.f32.mrb[0].mxu0
        %v559 = vadd.f32 0.0, %v558
        %v560 = vpop.f32.mrb[0].mxu0
        %561 = vdwg.mxu0
        %vm562 = vcmask 261120
        %v564 = vsel %vm562, %v488, 0
        %v567 = vsel %vm562, %v490, 0
        %569 = vmatprep.subr.mxu0 0.0
        %570 = vmatpush1.xpose.msra.mxu0 %v567
        %571 = vmatprep.subr.mxu0 0.0
        %572 = vmatpush1.xpose.msra.mxu0 0.0
        %573 = vmatprep.subr.mxu0 0.0
        %574 = vmatpush1.xpose.msra.mxu0 0.0
        %575 = vmatprep.subr.mxu0 0.0
        %576 = vmatpush1.xpose.msra.mxu0 0.0
        %577 = vmatprep.subr.mxu0 0.0
        %578 = vmatpush1.xpose.msra.mxu0 0.0
        %579 = vmatprep.subr.mxu0 0.0
        %580 = vmatpush1.xpose.msra.mxu0 0.0
        %581 = vmatprep.subr.mxu0 0.0
        %582 = vmatpush1.xpose.msra.mxu0 0.0
        %583 = vmatprep.subr.mxu0 0.0
        %584 = vmatpush1.xpose.msra.mxu0 0.0
        %585 = vmatprep.subr.mxu0 0.0
        %586 = vmatpush1.xpose.msra.mxu0 0.0
        %587 = vmatprep.subr.mxu0 0.0
        %588 = vmatpush1.xpose.msra.mxu0 0.0
        %589 = vmatprep.subr.mxu0 0.0
        %590 = vmatpush1.xpose.msra.mxu0 0.0
        %591 = vmatprep.subr.mxu0 0.0
        %592 = vmatpush1.xpose.msra.mxu0 0.0
        %593 = vmatprep.subr.mxu0 0.0
        %594 = vmatpush1.xpose.msra.mxu0 0.0
        %595 = vmatprep.subr.mxu0 0.0
        %596 = vmatpush1.xpose.msra.mxu0 0.0
        %597 = vmatprep.subr.mxu0 0.0
        %598 = vmatpush1.xpose.msra.mxu0 0.0
        %599 = vmatprep.subr.mxu0 0.0
        %600 = vmatpush1.xpose.msra.mxu0 0.0
        %601 = vmatprep.subr.mxu0 0.0
        %602 = vmatpush1.xpose.msra.mxu0 0.0
        %603 = vmatprep.subr.mxu0 0.0
        %604 = vmatpush1.xpose.msra.mxu0 0.0
        %605 = vmatprep.subr.mxu0 0.0
        %606 = vmatpush1.xpose.msra.mxu0 0.0
        %607 = vmatprep.subr.mxu0 0.0
        %608 = vmatpush1.xpose.msra.mxu0 0.0
        %609 = vmatprep.subr.mxu0 0.0
        %610 = vmatpush1.xpose.msra.mxu0 0.0
        %611 = vmatprep.subr.mxu0 0.0
        %612 = vmatpush1.xpose.msra.mxu0 0.0
        %613 = vmatprep.subr.mxu0 0.0
        %614 = vmatpush1.xpose.msra.mxu0 0.0
        %615 = vmatprep.subr.mxu0 0.0
        %616 = vmatpush1.xpose.msra.mxu0 0.0
        %617 = vmatprep.subr.mxu0 0.0
        %618 = vmatpush1.xpose.msra.mxu0 0.0
        %619 = vmatprep.subr.mxu0 0.0
        %620 = vmatpush1.xpose.msra.mxu0 0.0
        %621 = vmatprep.subr.mxu0 0.0
        %622 = vmatpush1.xpose.msra.mxu0 0.0
        %623 = vmatprep.subr.mxu0 0.0
        %624 = vmatpush1.xpose.msra.mxu0 0.0
        %625 = vmatprep.subr.mxu0 0.0
        %626 = vmatpush1.xpose.msra.mxu0 0.0
        %627 = vmatprep.subr.mxu0 0.0
        %628 = vmatpush1.xpose.msra.mxu0 0.0
        %629 = vmatprep.subr.mxu0 0.0
        %630 = vmatpush1.xpose.msra.mxu0 0.0
        %631 = vmatprep.subr.mxu0 0.0
        %632 = vmatpush1.xpose.msra.mxu0 0.0
        %633 = vmatprep.mubr.f32.mxu0 0.0
        %634 = vmatmul.mubr.f32.gmra.mrb[0].mxu0 %v564
        %v635 = vpop.f32.mrb[0].mxu0
        %v636 = vadd.f32 0.0, %v635
        %v637 = vpop.f32.mrb[0].mxu0
        %638 = vdwg.mxu0
        %v639 = vmul.f32 %v636, 0.17677669
        %vm640 = vcmask 64512
        %v641 = vsel %vm640, %v639, -inf
        %642 = vmax.xlane.f32.xlu0 %v641
        %v643 = vpop.xlane.xlu0 %642
        %v644 = vsub.f32 %v639, %v643
        %v645 = vmul.f32 %v644, 1.442695
        %v646 = vpow.pop %v645
        %v647 = vsel %vm640, %v646, 0.0
        %648 = vadd.xlane.f32.xlu0 %v647
        %v649 = vpop.xlane.xlu0 %648
        %v650 = vrcp.pop %v649
        %v651 = vmul.f32 %v646, %v650
        %v653 = vsel %vm640, %v651, 0
        %655 = vmatprep.subr.mxu0 0.0
        %656 = vmatpush1.msra.mxu0 %v559
        %657 = vmatprep.subr.mxu0 0.0
        %658 = vmatpush1.msra.mxu0 0.0
        %659 = vmatprep.subr.mxu0 0.0
        %660 = vmatpush1.msra.mxu0 0.0
        %661 = vmatprep.subr.mxu0 0.0
        %662 = vmatpush1.msra.mxu0 0.0
        %663 = vmatprep.subr.mxu0 0.0
        %664 = vmatpush1.msra.mxu0 0.0
        %665 = vmatprep.subr.mxu0 0.0
        %666 = vmatpush1.msra.mxu0 0.0
        %667 = vmatprep.subr.mxu0 0.0
        %668 = vmatpush1.msra.mxu0 0.0
        %669 = vmatprep.subr.mxu0 0.0
        %670 = vmatpush1.msra.mxu0 0.0
        %671 = vmatprep.subr.mxu0 0.0
        %672 = vmatpush1.msra.mxu0 0.0
        %673 = vmatprep.subr.mxu0 0.0
        %674 = vmatpush1.msra.mxu0 0.0
        %675 = vmatprep.subr.mxu0 0.0
        %676 = vmatpush1.msra.mxu0 0.0
        %677 = vmatprep.subr.mxu0 0.0
        %678 = vmatpush1.msra.mxu0 0.0
        %679 = vmatprep.subr.mxu0 0.0
        %680 = vmatpush1.msra.mxu0 0.0
        %681 = vmatprep.subr.mxu0 0.0
        %682 = vmatpush1.msra.mxu0 0.0
        %683 = vmatprep.subr.mxu0 0.0
        %684 = vmatpush1.msra.mxu0 0.0
        %685 = vmatprep.subr.mxu0 0.0
        %686 = vmatpush1.msra.mxu0 0.0
        %687 = vmatprep.subr.mxu0 0.0
        %688 = vmatpush1.msra.mxu0 0.0
        %689 = vmatprep.subr.mxu0 0.0
        %690 = vmatpush1.msra.mxu0 0.0
        %691 = vmatprep.subr.mxu0 0.0
        %692 = vmatpush1.msra.mxu0 0.0
        %693 = vmatprep.subr.mxu0 0.0
        %694 = vmatpush1.msra.mxu0 0.0
        %695 = vmatprep.subr.mxu0 0.0
        %696 = vmatpush1.msra.mxu0 0.0
        %697 = vmatprep.subr.mxu0 0.0
        %698 = vmatpush1.msra.mxu0 0.0
        %699 = vmatprep.subr.mxu0 0.0
        %700 = vmatpush1.msra.mxu0 0.0
        %701 = vmatprep.subr.mxu0 0.0
        %702 = vmatpush1.msra.mxu0 0.0
        %703 = vmatprep.subr.mxu0 0.0
        %704 = vmatpush1.msra.mxu0 0.0
        %705 = vmatprep.subr.mxu0 0.0
        %706 = vmatpush1.msra.mxu0 0.0
        %707 = vmatprep.subr.mxu0 0.0
        %708 = vmatpush1.msra.mxu0 0.0
        %709 = vmatprep.subr.mxu0 0.0
        %710 = vmatpush1.msra.mxu0 0.0
        %711 = vmatprep.subr.mxu0 0.0
        %712 = vmatpush1.msra.mxu0 0.0
        %713 = vmatprep.subr.mxu0 0.0
        %714 = vmatpush1.msra.mxu0 0.0
        %715 = vmatprep.subr.mxu0 0.0
        %716 = vmatpush1.msra.mxu0 0.0
        %717 = vmatprep.subr.mxu0 0.0
        %718 = vmatpush1.msra.mxu0 0.0
        %719 = vmatprep.mubr.f32.mxu0 0.0
        %720 = vmatmul.mubr.f32.gmra.mrb[0].mxu0 %v653
        %v721 = vpop.f32.mrb[0].mxu0
        %v722 = vadd.f32 0.0, %v721
        %v723 = vpop.f32.mrb[0].mxu0
        %724 = vdwg.mxu0
        %725 = vrot.lane.b32.xlu0 %v488, 96
        %v726 = vpop.permute.xlu0 %725
        %727 = vrot.lane.b32.xlu0 %v490, 96
        %v728 = vpop.permute.xlu0 %727
        %v729 = vsel %vm562, %v726, 0
        %v731 = vsel %vm562, %v728, 0
        %733 = vmatprep.subr.mxu0 0.0
        %734 = vmatpush1.xpose.msra.mxu0 %v731
        %735 = vmatprep.subr.mxu0 0.0
        %736 = vmatpush1.xpose.msra.mxu0 0.0
        %737 = vmatprep.subr.mxu0 0.0
        %738 = vmatpush1.xpose.msra.mxu0 0.0
        %739 = vmatprep.subr.mxu0 0.0
        %740 = vmatpush1.xpose.msra.mxu0 0.0
        %741 = vmatprep.subr.mxu0 0.0
        %742 = vmatpush1.xpose.msra.mxu0 0.0
        %743 = vmatprep.subr.mxu0 0.0
        %744 = vmatpush1.xpose.msra.mxu0 0.0
        %745 = vmatprep.subr.mxu0 0.0
        %746 = vmatpush1.xpose.msra.mxu0 0.0
        %747 = vmatprep.subr.mxu0 0.0
        %748 = vmatpush1.xpose.msra.mxu0 0.0
        %749 = vmatprep.subr.mxu0 0.0
        %750 = vmatpush1.xpose.msra.mxu0 0.0
        %751 = vmatprep.subr.mxu0 0.0
        %752 = vmatpush1.xpose.msra.mxu0 0.0
        %753 = vmatprep.subr.mxu0 0.0
        %754 = vmatpush1.xpose.msra.mxu0 0.0
        %755 = vmatprep.subr.mxu0 0.0
        %756 = vmatpush1.xpose.msra.mxu0 0.0
        %757 = vmatprep.subr.mxu0 0.0
        %758 = vmatpush1.xpose.msra.mxu0 0.0
        %759 = vmatprep.subr.mxu0 0.0
        %760 = vmatpush1.xpose.msra.mxu0 0.0
        %761 = vmatprep.subr.mxu0 0.0
        %762 = vmatpush1.xpose.msra.mxu0 0.0
        %763 = vmatprep.subr.mxu0 0.0
        %764 = vmatpush1.xpose.msra.mxu0 0.0
        %765 = vmatprep.subr.mxu0 0.0
        %766 = vmatpush1.xpose.msra.mxu0 0.0
        %767 = vmatprep.subr.mxu0 0.0
        %768 = vmatpush1.xpose.msra.mxu0 0.0
        %769 = vmatprep.subr.mxu0 0.0
        %770 = vmatpush1.xpose.msra.mxu0 0.0
        %771 = vmatprep.subr.mxu0 0.0
        %772 = vmatpush1.xpose.msra.mxu0 0.0
        %773 = vmatprep.subr.mxu0 0.0
        %774 = vmatpush1.xpose.msra.mxu0 0.0
        %775 = vmatprep.subr.mxu0 0.0
        %776 = vmatpush1.xpose.msra.mxu0 0.0
        %777 = vmatprep.subr.mxu0 0.0
        %778 = vmatpush1.xpose.msra.mxu0 0.0
        %779 = vmatprep.subr.mxu0 0.0
        %780 = vmatpush1.xpose.msra.mxu0 0.0
        %781 = vmatprep.subr.mxu0 0.0
        %782 = vmatpush1.xpose.msra.mxu0 0.0
        %783 = vmatprep.subr.mxu0 0.0
        %784 = vmatpush1.xpose.msra.mxu0 0.0
        %785 = vmatprep.subr.mxu0 0.0
        %786 = vmatpush1.xpose.msra.mxu0 0.0
        %787 = vmatprep.subr.mxu0 0.0
        %788 = vmatpush1.xpose.msra.mxu0 0.0
        %789 = vmatprep.subr.mxu0 0.0
        %790 = vmatpush1.xpose.msra.mxu0 0.0
        %791 = vmatprep.subr.mxu0 0.0
        %792 = vmatpush1.xpose.msra.mxu0 0.0
        %793 = vmatprep.subr.mxu0 0.0
        %794 = vmatpush1.xpose.msra.mxu0 0.0
        %795 = vmatprep.subr.mxu0 0.0
        %796 = vmatpush1.xpose.msra.mxu0 0.0
        %797 = vmatprep.mubr.f32.mxu0 0.0
        %798 = vmatmul.mubr.f32.gmra.mrb[0].mxu0 %v729
        %v799 = vpop.f32.mrb[0].mxu0
        %v800 = vadd.f32 0.0, %v799
        %v801 = vpop.f32.mrb[0].mxu0
        %802 = vdwg.mxu0
        %v803 = vmul.f32 %v800, 0.17677669
        %v804 = vsel %vm640, %v803, -inf
        %805 = vmax.xlane.f32.xlu0 %v804
        %v806 = vpop.xlane.xlu0 %805
        %v807 = vsub.f32 %v803, %v806
        %v808 = vmul.f32 %v807, 1.442695
        %v809 = vpow.pop %v808
        %v810 = vsel %vm640, %v809, 0.0
        %811 = vadd.xlane.f32.xlu0 %v810
        %v812 = vpop.xlane.xlu0 %811
        %v813 = vrcp.pop %v812
        %v814 = vmul.f32 %v809, %v813
        %816 = vrot.lane.b32.xlu0 %v559, 96
        %v817 = vpop.permute.xlu0 %816
        %v820 = vsel %vm640, %v814, 0
        %822 = vmatprep.subr.mxu0 0.0
        %823 = vmatpush1.msra.mxu0 %v817
        %824 = vmatprep.subr.mxu0 0.0
        %825 = vmatpush1.msra.mxu0 0.0
        %826 = vmatprep.subr.mxu0 0.0
        %827 = vmatpush1.msra.mxu0 0.0
        %828 = vmatprep.subr.mxu0 0.0
        %829 = vmatpush1.msra.mxu0 0.0
        %830 = vmatprep.subr.mxu0 0.0
        %831 = vmatpush1.msra.mxu0 0.0
        %832 = vmatprep.subr.mxu0 0.0
        %833 = vmatpush1.msra.mxu0 0.0
        %834 = vmatprep.subr.mxu0 0.0
        %835 = vmatpush1.msra.mxu0 0.0
        %836 = vmatprep.subr.mxu0 0.0
        %837 = vmatpush1.msra.mxu0 0.0
        %838 = vmatprep.subr.mxu0 0.0
        %839 = vmatpush1.msra.mxu0 0.0
        %840 = vmatprep.subr.mxu0 0.0
        %841 = vmatpush1.msra.mxu0 0.0
        %842 = vmatprep.subr.mxu0 0.0
        %843 = vmatpush1.msra.mxu0 0.0
        %844 = vmatprep.subr.mxu0 0.0
        %845 = vmatpush1.msra.mxu0 0.0
        %846 = vmatprep.subr.mxu0 0.0
        %847 = vmatpush1.msra.mxu0 0.0
        %848 = vmatprep.subr.mxu0 0.0
        %849 = vmatpush1.msra.mxu0 0.0
        %850 = vmatprep.subr.mxu0 0.0
        %851 = vmatpush1.msra.mxu0 0.0
        %852 = vmatprep.subr.mxu0 0.0
        %853 = vmatpush1.msra.mxu0 0.0
        %854 = vmatprep.subr.mxu0 0.0
        %855 = vmatpush1.msra.mxu0 0.0
        %856 = vmatprep.subr.mxu0 0.0
        %857 = vmatpush1.msra.mxu0 0.0
        %858 = vmatprep.subr.mxu0 0.0
        %859 = vmatpush1.msra.mxu0 0.0
        %860 = vmatprep.subr.mxu0 0.0
        %861 = vmatpush1.msra.mxu0 0.0
        %862 = vmatprep.subr.mxu0 0.0
        %863 = vmatpush1.msra.mxu0 0.0
        %864 = vmatprep.subr.mxu0 0.0
        %865 = vmatpush1.msra.mxu0 0.0
        %866 = vmatprep.subr.mxu0 0.0
        %867 = vmatpush1.msra.mxu0 0.0
        %868 = vmatprep.subr.mxu0 0.0
        %869 = vmatpush1.msra.mxu0 0.0
        %870 = vmatprep.subr.mxu0 0.0
        %871 = vmatpush1.msra.mxu0 0.0
        %872 = vmatprep.subr.mxu0 0.0
        %873 = vmatpush1.msra.mxu0 0.0
        %874 = vmatprep.subr.mxu0 0.0
        %875 = vmatpush1.msra.mxu0 0.0
        %876 = vmatprep.subr.mxu0 0.0
        %877 = vmatpush1.msra.mxu0 0.0
        %878 = vmatprep.subr.mxu0 0.0
        %879 = vmatpush1.msra.mxu0 0.0
        %880 = vmatprep.subr.mxu0 0.0
        %881 = vmatpush1.msra.mxu0 0.0
        %882 = vmatprep.subr.mxu0 0.0
        %883 = vmatpush1.msra.mxu0 0.0
        %884 = vmatprep.subr.mxu0 0.0
        %885 = vmatpush1.msra.mxu0 0.0
        %886 = vmatprep.mubr.f32.mxu0 0.0
        %887 = vmatmul.mubr.f32.gmra.mrb[0].mxu0 %v820
        %v888 = vpop.f32.mrb[0].mxu0
        %v889 = vadd.f32 0.0, %v888
        %v890 = vpop.f32.mrb[0].mxu0
        %891 = vdwg.mxu0
        %892 = vrot.lane.b32.xlu0 %v488, 64
        %v893 = vpop.permute.xlu0 %892
        %894 = vrot.lane.b32.xlu0 %v490, 64
        %v895 = vpop.permute.xlu0 %894
        %v896 = vsel %vm562, %v893, 0
        %v898 = vsel %vm562, %v895, 0
        %900 = vmatprep.subr.mxu0 0.0
        %901 = vmatpush1.xpose.msra.mxu0 %v898
        %902 = vmatprep.subr.mxu0 0.0
        %903 = vmatpush1.xpose.msra.mxu0 0.0
        %904 = vmatprep.subr.mxu0 0.0
        %905 = vmatpush1.xpose.msra.mxu0 0.0
        %906 = vmatprep.subr.mxu0 0.0
        %907 = vmatpush1.xpose.msra.mxu0 0.0
        %908 = vmatprep.subr.mxu0 0.0
        %909 = vmatpush1.xpose.msra.mxu0 0.0
        %910 = vmatprep.subr.mxu0 0.0
        %911 = vmatpush1.xpose.msra.mxu0 0.0
        %912 = vmatprep.subr.mxu0 0.0
        %913 = vmatpush1.xpose.msra.mxu0 0.0
        %914 = vmatprep.subr.mxu0 0.0
        %915 = vmatpush1.xpose.msra.mxu0 0.0
        %916 = vmatprep.subr.mxu0 0.0
        %917 = vmatpush1.xpose.msra.mxu0 0.0
        %918 = vmatprep.subr.mxu0 0.0
        %919 = vmatpush1.xpose.msra.mxu0 0.0
        %920 = vmatprep.subr.mxu0 0.0
        %921 = vmatpush1.xpose.msra.mxu0 0.0
        %922 = vmatprep.subr.mxu0 0.0
        %923 = vmatpush1.xpose.msra.mxu0 0.0
        %924 = vmatprep.subr.mxu0 0.0
        %925 = vmatpush1.xpose.msra.mxu0 0.0
        %926 = vmatprep.subr.mxu0 0.0
        %927 = vmatpush1.xpose.msra.mxu0 0.0
        %928 = vmatprep.subr.mxu0 0.0
        %929 = vmatpush1.xpose.msra.mxu0 0.0
        %930 = vmatprep.subr.mxu0 0.0
        %931 = vmatpush1.xpose.msra.mxu0 0.0
        %932 = vmatprep.subr.mxu0 0.0
        %933 = vmatpush1.xpose.msra.mxu0 0.0
        %934 = vmatprep.subr.mxu0 0.0
        %935 = vmatpush1.xpose.msra.mxu0 0.0
        %936 = vmatprep.subr.mxu0 0.0
        %937 = vmatpush1.xpose.msra.mxu0 0.0
        %938 = vmatprep.subr.mxu0 0.0
        %939 = vmatpush1.xpose.msra.mxu0 0.0
        %940 = vmatprep.subr.mxu0 0.0
        %941 = vmatpush1.xpose.msra.mxu0 0.0
        %942 = vmatprep.subr.mxu0 0.0
        %943 = vmatpush1.xpose.msra.mxu0 0.0
        %944 = vmatprep.subr.mxu0 0.0
        %945 = vmatpush1.xpose.msra.mxu0 0.0
        %946 = vmatprep.subr.mxu0 0.0
        %947 = vmatpush1.xpose.msra.mxu0 0.0
        %948 = vmatprep.subr.mxu0 0.0
        %949 = vmatpush1.xpose.msra.mxu0 0.0
        %950 = vmatprep.subr.mxu0 0.0
        %951 = vmatpush1.xpose.msra.mxu0 0.0
        %952 = vmatprep.subr.mxu0 0.0
        %953 = vmatpush1.xpose.msra.mxu0 0.0
        %954 = vmatprep.subr.mxu0 0.0
        %955 = vmatpush1.xpose.msra.mxu0 0.0
        %956 = vmatprep.subr.mxu0 0.0
        %957 = vmatpush1.xpose.msra.mxu0 0.0
        %958 = vmatprep.subr.mxu0 0.0
        %959 = vmatpush1.xpose.msra.mxu0 0.0
        %960 = vmatprep.subr.mxu0 0.0
        %961 = vmatpush1.xpose.msra.mxu0 0.0
        %962 = vmatprep.subr.mxu0 0.0
        %963 = vmatpush1.xpose.msra.mxu0 0.0
        %964 = vmatprep.mubr.f32.mxu0 0.0
        %965 = vmatmul.mubr.f32.gmra.mrb[0].mxu0 %v896
        %v966 = vpop.f32.mrb[0].mxu0
        %v967 = vadd.f32 0.0, %v966
        %v968 = vpop.f32.mrb[0].mxu0
        %969 = vdwg.mxu0
        %v970 = vmul.f32 %v967, 0.17677669
        %v971 = vsel %vm640, %v970, -inf
        %972 = vmax.xlane.f32.xlu0 %v971
        %v973 = vpop.xlane.xlu0 %972
        %v974 = vsub.f32 %v970, %v973
        %v975 = vmul.f32 %v974, 1.442695
        %v976 = vpow.pop %v975
        %v977 = vsel %vm640, %v976, 0.0
        %978 = vadd.xlane.f32.xlu0 %v977
        %v979 = vpop.xlane.xlu0 %978
        %v980 = vrcp.pop %v979
        %v981 = vmul.f32 %v976, %v980
        %982 = vrot.lane.b32.xlu0 %v559, 64
        %v983 = vpop.permute.xlu0 %982
        %v986 = vsel %vm640, %v981, 0
        %988 = vmatprep.subr.mxu0 0.0
        %989 = vmatpush1.msra.mxu0 %v983
        %990 = vmatprep.subr.mxu0 0.0
        %991 = vmatpush1.msra.mxu0 0.0
        %992 = vmatprep.subr.mxu0 0.0
        %993 = vmatpush1.msra.mxu0 0.0
        %994 = vmatprep.subr.mxu0 0.0
        %995 = vmatpush1.msra.mxu0 0.0
        %996 = vmatprep.subr.mxu0 0.0
        %997 = vmatpush1.msra.mxu0 0.0
        %998 = vmatprep.subr.mxu0 0.0
        %999 = vmatpush1.msra.mxu0 0.0
        %1000 = vmatprep.subr.mxu0 0.0
        %1001 = vmatpush1.msra.mxu0 0.0
        %1002 = vmatprep.subr.mxu0 0.0
        %1003 = vmatpush1.msra.mxu0 0.0
        %1004 = vmatprep.subr.mxu0 0.0
        %1005 = vmatpush1.msra.mxu0 0.0
        %1006 = vmatprep.subr.mxu0 0.0
        %1007 = vmatpush1.msra.mxu0 0.0
        %1008 = vmatprep.subr.mxu0 0.0
        %1009 = vmatpush1.msra.mxu0 0.0
        %1010 = vmatprep.subr.mxu0 0.0
        %1011 = vmatpush1.msra.mxu0 0.0
        %1012 = vmatprep.subr.mxu0 0.0
        %1013 = vmatpush1.msra.mxu0 0.0
        %1014 = vmatprep.subr.mxu0 0.0
        %1015 = vmatpush1.msra.mxu0 0.0
        %1016 = vmatprep.subr.mxu0 0.0
        %1017 = vmatpush1.msra.mxu0 0.0
        %1018 = vmatprep.subr.mxu0 0.0
        %1019 = vmatpush1.msra.mxu0 0.0
        %1020 = vmatprep.subr.mxu0 0.0
        %1021 = vmatpush1.msra.mxu0 0.0
        %1022 = vmatprep.subr.mxu0 0.0
        %1023 = vmatpush1.msra.mxu0 0.0
        %1024 = vmatprep.subr.mxu0 0.0
        %1025 = vmatpush1.msra.mxu0 0.0
        %1026 = vmatprep.subr.mxu0 0.0
        %1027 = vmatpush1.msra.mxu0 0.0
        %1028 = vmatprep.subr.mxu0 0.0
        %1029 = vmatpush1.msra.mxu0 0.0
        %1030 = vmatprep.subr.mxu0 0.0
        %1031 = vmatpush1.msra.mxu0 0.0
        %1032 = vmatprep.subr.mxu0 0.0
        %1033 = vmatpush1.msra.mxu0 0.0
        %1034 = vmatprep.subr.mxu0 0.0
        %1035 = vmatpush1.msra.mxu0 0.0
        %1036 = vmatprep.subr.mxu0 0.0
        %1037 = vmatpush1.msra.mxu0 0.0
        %1038 = vmatprep.subr.mxu0 0.0
        %1039 = vmatpush1.msra.mxu0 0.0
        %1040 = vmatprep.subr.mxu0 0.0
        %1041 = vmatpush1.msra.mxu0 0.0
        %1042 = vmatprep.subr.mxu0 0.0
        %1043 = vmatpush1.msra.mxu0 0.0
        %1044 = vmatprep.subr.mxu0 0.0
        %1045 = vmatpush1.msra.mxu0 0.0
        %1046 = vmatprep.subr.mxu0 0.0
        %1047 = vmatpush1.msra.mxu0 0.0
        %1048 = vmatprep.subr.mxu0 0.0
        %1049 = vmatpush1.msra.mxu0 0.0
        %1050 = vmatprep.subr.mxu0 0.0
        %1051 = vmatpush1.msra.mxu0 0.0
        %1052 = vmatprep.mubr.f32.mxu0 0.0
        %1053 = vmatmul.mubr.f32.gmra.mrb[0].mxu0 %v986
        %v1054 = vpop.f32.mrb[0].mxu0
        %v1055 = vadd.f32 0.0, %v1054
        %v1056 = vpop.f32.mrb[0].mxu0
        %1057 = vdwg.mxu0
        %1058 = vrot.lane.b32.xlu0 %v488, 32
        %v1059 = vpop.permute.xlu0 %1058
        %1060 = vrot.lane.b32.xlu0 %v490, 32
        %v1061 = vpop.permute.xlu0 %1060
        %v1062 = vsel %vm562, %v1059, 0
        %v1064 = vsel %vm562, %v1061, 0
        %1066 = vmatprep.subr.mxu0 0.0
        %1067 = vmatpush1.xpose.msra.mxu0 %v1064
        %1068 = vmatprep.subr.mxu0 0.0
        %1069 = vmatpush1.xpose.msra.mxu0 0.0
        %1070 = vmatprep.subr.mxu0 0.0
        %1071 = vmatpush1.xpose.msra.mxu0 0.0
        %1072 = vmatprep.subr.mxu0 0.0
        %1073 = vmatpush1.xpose.msra.mxu0 0.0
        %1074 = vmatprep.subr.mxu0 0.0
        %1075 = vmatpush1.xpose.msra.mxu0 0.0
        %1076 = vmatprep.subr.mxu0 0.0
        %1077 = vmatpush1.xpose.msra.mxu0 0.0
        %1078 = vmatprep.subr.mxu0 0.0
        %1079 = vmatpush1.xpose.msra.mxu0 0.0
        %1080 = vmatprep.subr.mxu0 0.0
        %1081 = vmatpush1.xpose.msra.mxu0 0.0
        %1082 = vmatprep.subr.mxu0 0.0
        %1083 = vmatpush1.xpose.msra.mxu0 0.0
        %1084 = vmatprep.subr.mxu0 0.0
        %1085 = vmatpush1.xpose.msra.mxu0 0.0
        %1086 = vmatprep.subr.mxu0 0.0
        %1087 = vmatpush1.xpose.msra.mxu0 0.0
        %1088 = vmatprep.subr.mxu0 0.0
        %1089 = vmatpush1.xpose.msra.mxu0 0.0
        %1090 = vmatprep.subr.mxu0 0.0
        %1091 = vmatpush1.xpose.msra.mxu0 0.0
        %1092 = vmatprep.subr.mxu0 0.0
        %1093 = vmatpush1.xpose.msra.mxu0 0.0
        %1094 = vmatprep.subr.mxu0 0.0
        %1095 = vmatpush1.xpose.msra.mxu0 0.0
        %1096 = vmatprep.subr.mxu0 0.0
        %1097 = vmatpush1.xpose.msra.mxu0 0.0
        %1098 = vmatprep.subr.mxu0 0.0
        %1099 = vmatpush1.xpose.msra.mxu0 0.0
        %1100 = vmatprep.subr.mxu0 0.0
        %1101 = vmatpush1.xpose.msra.mxu0 0.0
        %1102 = vmatprep.subr.mxu0 0.0
        %1103 = vmatpush1.xpose.msra.mxu0 0.0
        %1104 = vmatprep.subr.mxu0 0.0
        %1105 = vmatpush1.xpose.msra.mxu0 0.0
        %1106 = vmatprep.subr.mxu0 0.0
        %1107 = vmatpush1.xpose.msra.mxu0 0.0
        %1108 = vmatprep.subr.mxu0 0.0
        %1109 = vmatpush1.xpose.msra.mxu0 0.0
        %1110 = vmatprep.subr.mxu0 0.0
        %1111 = vmatpush1.xpose.msra.mxu0 0.0
        %1112 = vmatprep.subr.mxu0 0.0
        %1113 = vmatpush1.xpose.msra.mxu0 0.0
        %1114 = vmatprep.subr.mxu0 0.0
        %1115 = vmatpush1.xpose.msra.mxu0 0.0
        %1116 = vmatprep.subr.mxu0 0.0
        %1117 = vmatpush1.xpose.msra.mxu0 0.0
        %1118 = vmatprep.subr.mxu0 0.0
        %1119 = vmatpush1.xpose.msra.mxu0 0.0
        %1120 = vmatprep.subr.mxu0 0.0
        %1121 = vmatpush1.xpose.msra.mxu0 0.0
        %1122 = vmatprep.subr.mxu0 0.0
        %1123 = vmatpush1.xpose.msra.mxu0 0.0
        %1124 = vmatprep.subr.mxu0 0.0
        %1125 = vmatpush1.xpose.msra.mxu0 0.0
        %1126 = vmatprep.subr.mxu0 0.0
        %1127 = vmatpush1.xpose.msra.mxu0 0.0
        %1128 = vmatprep.subr.mxu0 0.0
        %1129 = vmatpush1.xpose.msra.mxu0 0.0
        %1130 = vmatprep.mubr.f32.mxu0 0.0
        %1131 = vmatmul.mubr.f32.gmra.mrb[0].mxu0 %v1062
        %v1132 = vpop.f32.mrb[0].mxu0
        %v1133 = vadd.f32 0.0, %v1132
        %v1134 = vpop.f32.mrb[0].mxu0
        %1135 = vdwg.mxu0
        %v1136 = vmul.f32 %v1133, 0.17677669
        %v1137 = vsel %vm640, %v1136, -inf
        %1138 = vmax.xlane.f32.xlu0 %v1137
        %v1139 = vpop.xlane.xlu0 %1138
        %v1140 = vsub.f32 %v1136, %v1139
        %v1141 = vmul.f32 %v1140, 1.442695
        %v1142 = vpow.pop %v1141
        %v1143 = vsel %vm640, %v1142, 0.0
        %1144 = vadd.xlane.f32.xlu0 %v1143
        %v1145 = vpop.xlane.xlu0 %1144
        %v1146 = vrcp.pop %v1145
        %v1147 = vmul.f32 %v1142, %v1146
        %1148 = vrot.lane.b32.xlu0 %v559, 32
        %v1149 = vpop.permute.xlu0 %1148
        %v1152 = vsel %vm640, %v1147, 0
        %1154 = vmatprep.subr.mxu0 0.0
        %1155 = vmatpush1.msra.mxu0 %v1149
        %1156 = vmatprep.subr.mxu0 0.0
        %1157 = vmatpush1.msra.mxu0 0.0
        %1158 = vmatprep.subr.mxu0 0.0
        %1159 = vmatpush1.msra.mxu0 0.0
        %1160 = vmatprep.subr.mxu0 0.0
        %1161 = vmatpush1.msra.mxu0 0.0
        %1162 = vmatprep.subr.mxu0 0.0
        %1163 = vmatpush1.msra.mxu0 0.0
        %1164 = vmatprep.subr.mxu0 0.0
        %1165 = vmatpush1.msra.mxu0 0.0
        %1166 = vmatprep.subr.mxu0 0.0
        %1167 = vmatpush1.msra.mxu0 0.0
        %1168 = vmatprep.subr.mxu0 0.0
        %1169 = vmatpush1.msra.mxu0 0.0
        %1170 = vmatprep.subr.mxu0 0.0
        %1171 = vmatpush1.msra.mxu0 0.0
        %1172 = vmatprep.subr.mxu0 0.0
        %1173 = vmatpush1.msra.mxu0 0.0
        %1174 = vmatprep.subr.mxu0 0.0
        %1175 = vmatpush1.msra.mxu0 0.0
        %1176 = vmatprep.subr.mxu0 0.0
        %1177 = vmatpush1.msra.mxu0 0.0
        %1178 = vmatprep.subr.mxu0 0.0
        %1179 = vmatpush1.msra.mxu0 0.0
        %1180 = vmatprep.subr.mxu0 0.0
        %1181 = vmatpush1.msra.mxu0 0.0
        %1182 = vmatprep.subr.mxu0 0.0
        %1183 = vmatpush1.msra.mxu0 0.0
        %1184 = vmatprep.subr.mxu0 0.0
        %1185 = vmatpush1.msra.mxu0 0.0
        %1186 = vmatprep.subr.mxu0 0.0
        %1187 = vmatpush1.msra.mxu0 0.0
        %1188 = vmatprep.subr.mxu0 0.0
        %1189 = vmatpush1.msra.mxu0 0.0
        %1190 = vmatprep.subr.mxu0 0.0
        %1191 = vmatpush1.msra.mxu0 0.0
        %1192 = vmatprep.subr.mxu0 0.0
        %1193 = vmatpush1.msra.mxu0 0.0
        %1194 = vmatprep.subr.mxu0 0.0
        %1195 = vmatpush1.msra.mxu0 0.0
        %1196 = vmatprep.subr.mxu0 0.0
        %1197 = vmatpush1.msra.mxu0 0.0
        %1198 = vmatprep.subr.mxu0 0.0
        %1199 = vmatpush1.msra.mxu0 0.0
        %1200 = vmatprep.subr.mxu0 0.0
        %1201 = vmatpush1.msra.mxu0 0.0
        %1202 = vmatprep.subr.mxu0 0.0
        %1203 = vmatpush1.msra.mxu0 0.0
        %1204 = vmatprep.subr.mxu0 0.0
        %1205 = vmatpush1.msra.mxu0 0.0
        %1206 = vmatprep.subr.mxu0 0.0
        %1207 = vmatpush1.msra.mxu0 0.0
        %1208 = vmatprep.subr.mxu0 0.0
        %1209 = vmatpush1.msra.mxu0 0.0
        %1210 = vmatprep.subr.mxu0 0.0
        %1211 = vmatpush1.msra.mxu0 0.0
        %1212 = vmatprep.subr.mxu0 0.0
        %1213 = vmatpush1.msra.mxu0 0.0
        %1214 = vmatprep.subr.mxu0 0.0
        %1215 = vmatpush1.msra.mxu0 0.0
        %1216 = vmatprep.subr.mxu0 0.0
        %1217 = vmatpush1.msra.mxu0 0.0
        %1218 = vmatprep.mubr.f32.mxu0 0.0
        %1219 = vmatmul.mubr.f32.gmra.mrb[0].mxu0 %v1152
        %v1220 = vpop.f32.mrb[0].mxu0
        %v1221 = vadd.f32 0.0, %v1220
        %v1222 = vpop.f32.mrb[0].mxu0
        %1223 = vdwg.mxu0
        %1225 = vrot.lane.b32.xlu0 %v889, 32
        %v1226 = vpop.permute.xlu0 %1225
        %1229 = vrot.lane.b32.xlu0 %v1055, 64
        %v1230 = vpop.permute.xlu0 %1229
        %1233 = vrot.lane.b32.xlu0 %v1221, 96
        %v1234 = vpop.permute.xlu0 %1233
        %v1236 = vsel %vm562, %v722, %v1226
        %vm1237 = vcmask 523264
        %v1238 = vsel %vm1237, %v1236, %v1230
        %vm1239 = vcmask 785408
        %v1240 = vsel %vm1239, %v1238, %v1234
        %v1241 = vadd.f32 %v1240, %v360
        %1242 = vadd.xlane.f32.xlu0 %v1241
        %v1243 = vpop.xlane.xlu0 %1242
        %v1244 = vmul.f32 %v1243, %v363
        %v1245 = vsub.f32 %v1241, %v1244
        %v1246 = vmul.f32 %v1245, %v1245
        %1247 = vadd.xlane.f32.xlu0 %v1246
        %v1248 = vpop.xlane.xlu0 %1247
        %v1249 = vmul.f32 %v1248, %v363
        %v1250 = vadd.f32 %v1249, 1e-05
        %v1251 = vrsqrt.pop %v1250
        %v1252 = vmul.f32 %v1245, %v1251
        %v1253 = vld [vmem:[%s3] sm:$0x1]
        %v1254 = vld [vmem:[%s5] sm:$0x3]
        %v1255 = vld [vmem:[%s7] sm:$0x1]
        %v1256 = vld [vmem:[#allocation4] sm:$0xff]
        %v1257 = vld [vmem:[#allocation4 + $0x8] sm:$0xff]
        %v1258 = vld [vmem:[#allocation4 + $0x10] sm:$0xff]
        %v1259 = vld [vmem:[#allocation4 + $0x18] sm:$0xff]
        %v1260 = vld [vmem:[#allocation4 + $0x20] sm:$0xff]
        %v1261 = vld [vmem:[#allocation4 + $0x28] sm:$0xff]
        %v1262 = vld [vmem:[#allocation4 + $0x30] sm:$0xff]
        %v1263 = vld [vmem:[#allocation4 + $0x38] sm:$0xff]
        %v1264 = vld [vmem:[#allocation4 + $0x40] sm:$0xff]
        %v1265 = vld [vmem:[#allocation4 + $0x48] sm:$0xff]
        %v1266 = vld [vmem:[#allocation4 + $0x50] sm:$0xff]
        %v1267 = vld [vmem:[#allocation4 + $0x58] sm:$0xff]
        %v1268 = vld [vmem:[#allocation4 + $0x60] sm:$0xff]
        %v1269 = vld [vmem:[#allocation4 + $0x68] sm:$0xff]
        %v1270 = vld [vmem:[#allocation4 + $0x70] sm:$0xff]
        %v1271 = vld [vmem:[#allocation4 + $0x78] sm:$0xff]
        %v1273 = vlaneseq
        %v1274 = vshrl.u32 %v1273, 7
        %v1275 = vsub.s32 0, %v1274
        %v1276 = vrot.slane %v1253, %v1275
        %1278 = vmatprep.subr.mxu0 0.0
        %1279 = vmatpush1.msra.mxu0 %v1256
        %1280 = vmatprep.subr.mxu0 0.0
        %1281 = vmatpush1.msra.mxu0 %v1257
        %1282 = vmatprep.subr.mxu0 0.0
        %1283 = vmatpush1.msra.mxu0 %v1258
        %1284 = vmatprep.subr.mxu0 0.0
        %1285 = vmatpush1.msra.mxu0 %v1259
        %1286 = vmatprep.subr.mxu0 0.0
        %1287 = vmatpush1.msra.mxu0 %v1260
        %1288 = vmatprep.subr.mxu0 0.0
        %1289 = vmatpush1.msra.mxu0 %v1261
        %1290 = vmatprep.subr.mxu0 0.0
        %1291 = vmatpush1.msra.mxu0 %v1262
        %1292 = vmatprep.subr.mxu0 0.0
        %1293 = vmatpush1.msra.mxu0 %v1263
        %1294 = vmatprep.subr.mxu0 0.0
        %1295 = vmatpush1.msra.mxu0 %v1264
        %1296 = vmatprep.subr.mxu0 0.0
        %1297 = vmatpush1.msra.mxu0 %v1265
        %1298 = vmatprep.subr.mxu0 0.0
        %1299 = vmatpush1.msra.mxu0 %v1266
        %1300 = vmatprep.subr.mxu0 0.0
        %1301 = vmatpush1.msra.mxu0 %v1267
        %1302 = vmatprep.subr.mxu0 0.0
        %1303 = vmatpush1.msra.mxu0 %v1268
        %1304 = vmatprep.subr.mxu0 0.0
        %1305 = vmatpush1.msra.mxu0 %v1269
        %1306 = vmatprep.subr.mxu0 0.0
        %1307 = vmatpush1.msra.mxu0 %v1270
        %1308 = vmatprep.subr.mxu0 0.0
        %1309 = vmatpush1.msra.mxu0 %v1271
        %1310 = vmatprep.subr.mxu0 0.0
        %1311 = vmatpush1.msra.mxu0 0.0
        %1312 = vmatprep.subr.mxu0 0.0
        %1313 = vmatpush1.msra.mxu0 0.0
        %1314 = vmatprep.subr.mxu0 0.0
        %1315 = vmatpush1.msra.mxu0 0.0
        %1316 = vmatprep.subr.mxu0 0.0
        %1317 = vmatpush1.msra.mxu0 0.0
        %1318 = vmatprep.subr.mxu0 0.0
        %1319 = vmatpush1.msra.mxu0 0.0
        %1320 = vmatprep.subr.mxu0 0.0
        %1321 = vmatpush1.msra.mxu0 0.0
        %1322 = vmatprep.subr.mxu0 0.0
        %1323 = vmatpush1.msra.mxu0 0.0
        %1324 = vmatprep.subr.mxu0 0.0
        %1325 = vmatpush1.msra.mxu0 0.0
        %1326 = vmatprep.subr.mxu0 0.0
        %1327 = vmatpush1.msra.mxu0 0.0
        %1328 = vmatprep.subr.mxu0 0.0
        %1329 = vmatpush1.msra.mxu0 0.0
        %1330 = vmatprep.subr.mxu0 0.0
        %1331 = vmatpush1.msra.mxu0 0.0
        %1332 = vmatprep.subr.mxu0 0.0
        %1333 = vmatpush1.msra.mxu0 0.0
        %1334 = vmatprep.subr.mxu0 0.0
        %1335 = vmatpush1.msra.mxu0 0.0
        %1336 = vmatprep.subr.mxu0 0.0
        %1337 = vmatpush1.msra.mxu0 0.0
        %1338 = vmatprep.subr.mxu0 0.0
        %1339 = vmatpush1.msra.mxu0 0.0
        %1340 = vmatprep.subr.mxu0 0.0
        %1341 = vmatpush1.msra.mxu0 0.0
        %1342 = vmatprep.mubr.f32.mxu0 0.0
        %1343 = vmatmul.mubr.f32.gmra.mrb[0].mxu0 %v1252
        %v1344 = vpop.f32.mrb[0].mxu0
        %v1345 = vadd.f32 %v1276, %v1344
        %v1346 = vpop.f32.mrb[0].mxu0
        %1347 = vdwg.mxu0
        %v1348 = vmul.f32 %v1345, 0.5
        %v1349 = vmul.f32 %v1345, 0.70710677
        %v1350 = verf.f32.pop %v1349
        %v1351 = vadd.f32 %v1350, 1.0
        %v1352 = vmul.f32 %v1348, %v1351
        %v1353 = vld [vmem:[#allocation6] sm:$0xff]
        %v1354 = vld [vmem:[#allocation6 + $0x8] sm:$0xff]
        %v1355 = vld [vmem:[#allocation6 + $0x10] sm:$0xff]
        %v1356 = vld [vmem:[#allocation6 + $0x18] sm:$0xff]
        %v1357 = vld [vmem:[#allocation6 + $0x20] sm:$0xff]
        %v1358 = vld [vmem:[#allocation6 + $0x28] sm:$0xff]
        %v1359 = vld [vmem:[#allocation6 + $0x30] sm:$0xff]
        %v1360 = vld [vmem:[#allocation6 + $0x38] sm:$0xff]
        %v1361 = vld [vmem:[#allocation6 + $0x40] sm:$0xff]
        %v1362 = vld [vmem:[#allocation6 + $0x48] sm:$0xff]
        %v1363 = vld [vmem:[#allocation6 + $0x50] sm:$0xff]
        %v1364 = vld [vmem:[#allocation6 + $0x58] sm:$0xff]
        %v1365 = vld [vmem:[#allocation6 + $0x60] sm:$0xff]
        %v1366 = vld [vmem:[#allocation6 + $0x68] sm:$0xff]
        %v1367 = vld [vmem:[#allocation6 + $0x70] sm:$0xff]
        %v1368 = vld [vmem:[#allocation6 + $0x78] sm:$0xff]
        %v1369 = vld [vmem:[#allocation6 + $0x80] sm:$0xff]
        %v1370 = vld [vmem:[#allocation6 + $0x88] sm:$0xff]
        %v1371 = vld [vmem:[#allocation6 + $0x90] sm:$0xff]
        %v1372 = vld [vmem:[#allocation6 + $0x98] sm:$0xff]
        %v1373 = vld [vmem:[#allocation6 + $0xa0] sm:$0xff]
        %v1374 = vld [vmem:[#allocation6 + $0xa8] sm:$0xff]
        %v1375 = vld [vmem:[#allocation6 + $0xb0] sm:$0xff]
        %v1376 = vld [vmem:[#allocation6 + $0xb8] sm:$0xff]
        %v1377 = vld [vmem:[#allocation6 + $0xc0] sm:$0xff]
        %v1378 = vld [vmem:[#allocation6 + $0xc8] sm:$0xff]
        %v1379 = vld [vmem:[#allocation6 + $0xd0] sm:$0xff]
        %v1380 = vld [vmem:[#allocation6 + $0xd8] sm:$0xff]
        %v1381 = vld [vmem:[#allocation6 + $0xe0] sm:$0xff]
        %v1382 = vld [vmem:[#allocation6 + $0xe8] sm:$0xff]
        %v1383 = vld [vmem:[#allocation6 + $0xf0] sm:$0xff]
        %v1384 = vld [vmem:[#allocation6 + $0xf8] sm:$0xff]
        %v1386 = vlaneseq
        %v1387 = vshrl.u32 %v1386, 7
        %v1388 = vsub.s32 0, %v1387
        %v1389 = vrot.slane %v1254, %v1388
        %v1390 = vlaneseq
        %v1391 = vshrl.u32 %v1390, 7
        %v1392 = vsub.s32 1, %v1391
        %v1393 = vrot.slane %v1254, %v1392
        %1396 = vmatprep.subr.mxu0 %v1354
        %1397 = vmatpush1.msra.mxu0 %v1353
        %1398 = vmatprep.subr.mxu0 %v1356
        %1399 = vmatpush1.msra.mxu0 %v1355
        %1400 = vmatprep.subr.mxu0 %v1358
        %1401 = vmatpush1.msra.mxu0 %v1357
        %1402 = vmatprep.subr.mxu0 %v1360
        %1403 = vmatpush1.msra.mxu0 %v1359
        %1404 = vmatprep.subr.mxu0 %v1362
        %1405 = vmatpush1.msra.mxu0 %v1361
        %1406 = vmatprep.subr.mxu0 %v1364
        %1407 = vmatpush1.msra.mxu0 %v1363
        %1408 = vmatprep.subr.mxu0 %v1366
        %1409 = vmatpush1.msra.mxu0 %v1365
        %1410 = vmatprep.subr.mxu0 %v1368
        %1411 = vmatpush1.msra.mxu0 %v1367
        %1412 = vmatprep.subr.mxu0 %v1370
        %1413 = vmatpush1.msra.mxu0 %v1369
        %1414 = vmatprep.subr.mxu0 %v1372
        %1415 = vmatpush1.msra.mxu0 %v1371
        %1416 = vmatprep.subr.mxu0 %v1374
        %1417 = vmatpush1.msra.mxu0 %v1373
        %1418 = vmatprep.subr.mxu0 %v1376
        %1419 = vmatpush1.msra.mxu0 %v1375
        %1420 = vmatprep.subr.mxu0 %v1378
        %1421 = vmatpush1.msra.mxu0 %v1377
        %1422 = vmatprep.subr.mxu0 %v1380
        %1423 = vmatpush1.msra.mxu0 %v1379
        %1424 = vmatprep.subr.mxu0 %v1382
        %1425 = vmatpush1.msra.mxu0 %v1381
        %1426 = vmatprep.subr.mxu0 %v1384
        %1427 = vmatpush1.msra.mxu0 %v1383
        %1428 = vmatprep.subr.mxu0 0.0
        %1429 = vmatpush1.msra.mxu0 0.0
        %1430 = vmatprep.subr.mxu0 0.0
        %1431 = vmatpush1.msra.mxu0 0.0
        %1432 = vmatprep.subr.mxu0 0.0
        %1433 = vmatpush1.msra.mxu0 0.0
        %1434 = vmatprep.subr.mxu0 0.0
        %1435 = vmatpush1.msra.mxu0 0.0
        %1436 = vmatprep.subr.mxu0 0.0
        %1437 = vmatpush1.msra.mxu0 0.0
        %1438 = vmatprep.subr.mxu0 0.0
        %1439 = vmatpush1.msra.mxu0 0.0
        %1440 = vmatprep.subr.mxu0 0.0
        %1441 = vmatpush1.msra.mxu0 0.0
        %1442 = vmatprep.subr.mxu0 0.0
        %1443 = vmatpush1.msra.mxu0 0.0
        %1444 = vmatprep.subr.mxu0 0.0
        %1445 = vmatpush1.msra.mxu0 0.0
        %1446 = vmatprep.subr.mxu0 0.0
        %1447 = vmatpush1.msra.mxu0 0.0
        %1448 = vmatprep.subr.mxu0 0.0
        %1449 = vmatpush1.msra.mxu0 0.0
        %1450 = vmatprep.subr.mxu0 0.0
        %1451 = vmatpush1.msra.mxu0 0.0
        %1452 = vmatprep.subr.mxu0 0.0
        %1453 = vmatpush1.msra.mxu0 0.0
        %1454 = vmatprep.subr.mxu0 0.0
        %1455 = vmatpush1.msra.mxu0 0.0
        %1456 = vmatprep.subr.mxu0 0.0
        %1457 = vmatpush1.msra.mxu0 0.0
        %1458 = vmatprep.subr.mxu0 0.0
        %1459 = vmatpush1.msra.mxu0 0.0
        %1460 = vmatprep.mubr.f32.mxu0 0.0
        %1461 = vmatmul.mubr.f32.gmra.mrb[0].mxu0 %v1352
        %v1462 = vpop.f32.mrb[0].mxu0
        %v1463 = vadd.f32 %v1389, %v1462
        %v1464 = vpop.f32.mrb[0].mxu0
        %v1465 = vadd.f32 %v1393, %v1464
        %1466 = vdwg.mxu0
        %v1467 = vmul.f32 %v1463, 0.5
        %v1468 = vmul.f32 %v1465, 0.5
        %v1469 = vmul.f32 %v1463, 0.70710677
        %v1470 = vmul.f32 %v1465, 0.70710677
        %v1471 = verf.f32.pop %v1469
        %v1472 = verf.f32.pop %v1470
        %v1473 = vadd.f32 %v1471, 1.0
        %v1474 = vadd.f32 %v1472, 1.0
        %v1475 = vmul.f32 %v1467, %v1473
        %v1476 = vmul.f32 %v1468, %v1474
        %v1477 = vld [vmem:[#allocation7] sm:$0xff]
        %v1478 = vld [vmem:[#allocation7 + $0x8] sm:$0xff]
        %v1479 = vld [vmem:[#allocation7 + $0x10] sm:$0xff]
        %v1480 = vld [vmem:[#allocation7 + $0x18] sm:$0xff]
        %v1481 = vld [vmem:[#allocation7 + $0x20] sm:$0xff]
        %v1482 = vld [vmem:[#allocation7 + $0x28] sm:$0xff]
        %v1483 = vld [vmem:[#allocation7 + $0x30] sm:$0xff]
        %v1484 = vld [vmem:[#allocation7 + $0x38] sm:$0xff]
        %v1485 = vld [vmem:[#allocation7 + $0x40] sm:$0xff]
        %v1486 = vld [vmem:[#allocation7 + $0x48] sm:$0xff]
        %v1487 = vld [vmem:[#allocation7 + $0x50] sm:$0xff]
        %v1488 = vld [vmem:[#allocation7 + $0x58] sm:$0xff]
        %v1489 = vld [vmem:[#allocation7 + $0x60] sm:$0xff]
        %v1490 = vld [vmem:[#allocation7 + $0x68] sm:$0xff]
        %v1491 = vld [vmem:[#allocation7 + $0x70] sm:$0xff]
        %v1492 = vld [vmem:[#allocation7 + $0x78] sm:$0xff]
        %v1493 = vld [vmem:[#allocation7 + $0x80] sm:$0xff]
        %v1494 = vld [vmem:[#allocation7 + $0x88] sm:$0xff]
        %v1495 = vld [vmem:[#allocation7 + $0x90] sm:$0xff]
        %v1496 = vld [vmem:[#allocation7 + $0x98] sm:$0xff]
        %v1497 = vld [vmem:[#allocation7 + $0xa0] sm:$0xff]
        %v1498 = vld [vmem:[#allocation7 + $0xa8] sm:$0xff]
        %v1499 = vld [vmem:[#allocation7 + $0xb0] sm:$0xff]
        %v1500 = vld [vmem:[#allocation7 + $0xb8] sm:$0xff]
        %v1501 = vld [vmem:[#allocation7 + $0xc0] sm:$0xff]
        %v1502 = vld [vmem:[#allocation7 + $0xc8] sm:$0xff]
        %v1503 = vld [vmem:[#allocation7 + $0xd0] sm:$0xff]
        %v1504 = vld [vmem:[#allocation7 + $0xd8] sm:$0xff]
        %v1505 = vld [vmem:[#allocation7 + $0xe0] sm:$0xff]
        %v1506 = vld [vmem:[#allocation7 + $0xe8] sm:$0xff]
        %v1507 = vld [vmem:[#allocation7 + $0xf0] sm:$0xff]
        %v1508 = vld [vmem:[#allocation7 + $0xf8] sm:$0xff]
        %v1510 = vlaneseq
        %v1511 = vshrl.u32 %v1510, 7
        %v1512 = vsub.s32 0, %v1511
        %v1513 = vrot.slane %v1255, %v1512
        %1515 = vmatprep.subr.mxu0 0.0
        %1516 = vmatpush1.msra.mxu0 %v1477
        %1517 = vmatprep.subr.mxu0 0.0
        %1518 = vmatpush1.msra.mxu0 %v1478
        %1519 = vmatprep.subr.mxu0 0.0
        %1520 = vmatpush1.msra.mxu0 %v1479
        %1521 = vmatprep.subr.mxu0 0.0
        %1522 = vmatpush1.msra.mxu0 %v1480
        %1523 = vmatprep.subr.mxu0 0.0
        %1524 = vmatpush1.msra.mxu0 %v1481
        %1525 = vmatprep.subr.mxu0 0.0
        %1526 = vmatpush1.msra.mxu0 %v1482
        %1527 = vmatprep.subr.mxu0 0.0
        %1528 = vmatpush1.msra.mxu0 %v1483
        %1529 = vmatprep.subr.mxu0 0.0
        %1530 = vmatpush1.msra.mxu0 %v1484
        %1531 = vmatprep.subr.mxu0 0.0
        %1532 = vmatpush1.msra.mxu0 %v1485
        %1533 = vmatprep.subr.mxu0 0.0
        %1534 = vmatpush1.msra.mxu0 %v1486
        %1535 = vmatprep.subr.mxu0 0.0
        %1536 = vmatpush1.msra.mxu0 %v1487
        %1537 = vmatprep.subr.mxu0 0.0
        %1538 = vmatpush1.msra.mxu0 %v1488
        %1539 = vmatprep.subr.mxu0 0.0
        %1540 = vmatpush1.msra.mxu0 %v1489
        %1541 = vmatprep.subr.mxu0 0.0
        %1542 = vmatpush1.msra.mxu0 %v1490
        %1543 = vmatprep.subr.mxu0 0.0
        %1544 = vmatpush1.msra.mxu0 %v1491
        %1545 = vmatprep.subr.mxu0 0.0
        %1546 = vmatpush1.msra.mxu0 %v1492
        %1547 = vmatprep.subr.mxu0 0.0
        %1548 = vmatpush1.msra.mxu0 %v1493
        %1549 = vmatprep.subr.mxu0 0.0
        %1550 = vmatpush1.msra.mxu0 %v1494
        %1551 = vmatprep.subr.mxu0 0.0
        %1552 = vmatpush1.msra.mxu0 %v1495
        %1553 = vmatprep.subr.mxu0 0.0
        %1554 = vmatpush1.msra.mxu0 %v1496
        %1555 = vmatprep.subr.mxu0 0.0
        %1556 = vmatpush1.msra.mxu0 %v1497
        %1557 = vmatprep.subr.mxu0 0.0
        %1558 = vmatpush1.msra.mxu0 %v1498
        %1559 = vmatprep.subr.mxu0 0.0
        %1560 = vmatpush1.msra.mxu0 %v1499
        %1561 = vmatprep.subr.mxu0 0.0
        %1562 = vmatpush1.msra.mxu0 %v1500
        %1563 = vmatprep.subr.mxu0 0.0
        %1564 = vmatpush1.msra.mxu0 %v1501
        %1565 = vmatprep.subr.mxu0 0.0
        %1566 = vmatpush1.msra.mxu0 %v1502
        %1567 = vmatprep.subr.mxu0 0.0
        %1568 = vmatpush1.msra.mxu0 %v1503
        %1569 = vmatprep.subr.mxu0 0.0
        %1570 = vmatpush1.msra.mxu0 %v1504
        %1571 = vmatprep.subr.mxu0 0.0
        %1572 = vmatpush1.msra.mxu0 %v1505
        %1573 = vmatprep.subr.mxu0 0.0
        %1574 = vmatpush1.msra.mxu0 %v1506
        %1575 = vmatprep.subr.mxu0 0.0
        %1576 = vmatpush1.msra.mxu0 %v1507
        %1577 = vmatprep.subr.mxu0 0.0
        %1578 = vmatpush1.msra.mxu0 %v1508
        %1579 = vmatprep.mubr.f32.mxu0 %v1476
        %1580 = vmatmul.mubr.f32.gmra.mrb[0].mxu0 %v1475
        %v1581 = vpop.f32.mrb[0].mxu0
        %v1582 = vadd.f32 %v1513, %v1581
        %v1583 = vpop.f32.mrb[0].mxu0
        %1584 = vdwg.mxu0
        %v1585 = vadd.f32 %v1582, %v1241
        %1586 = vst [vmem:[%s359] sm:$0xff] %v1585
        %p1587 = scmp.lt.s32.totalorder %s22, 1
        %s1588 = scalar_select %p1587, %s22, 1
        %s1589 = smul.addr %s1588, 8
        %s1590 = scalar_lea.vmem %s8, %s1589
        // Predicated region
        $region69: #{transformer_forward.4} parent=51 // pred_check
          %p1591 = pneg %p213
        $region70: #{transformer_forward.4} parent=51 // pred_check_branch
          %1593 = sbr.rel (%p1591) target = $region72
        $region71: #{transformer_forward.4} parent=51 // pred_region
          _
        $region72: #{transformer_forward.4} parent=51 // pred_fallthru
          _
      $region52: #{transformer_forward.4} parent=5 // pred_fallthru
        _
      %p1594 = scmp.le.s32.totalorder 2, %s17
      // Predicated region
      $region73: #{transformer_forward.4} parent=5 // pred_check
        %p1595 = pneg %p1594
      $region74: #{transformer_forward.4} parent=5 // pred_check_branch
        %1597 = sbr.rel (%p1595) target = $region76
      $region75: #{transformer_forward.4} parent=5 // pred_region
        %s1598 = ssub.s32 %s17, 2
        // Predicated region
        $region77: #{transformer_forward.4} parent=75 // pred_check
          %p1599 = pneg %p219
        $region78: #{transformer_forward.4} parent=75 // pred_check_branch
          %1601 = sbr.rel (%p1599) target = $region80
        $region79: #{transformer_forward.4} parent=75 // pred_region
          %p1602 = scmp.lt.s32.totalorder %s23, 1
          %s1603 = scalar_select %p1602, %s23, 1
          %s1604 = smul.addr %s1603, 8
          %s1605 = scalar_lea.vmem %s8, %s1604
        $region80: #{transformer_forward.4} parent=75 // pred_fallthru
          _
      $region76: #{transformer_forward.4} parent=5 // pred_fallthru
        _
    $region6: #{transformer_forward.4} parent=1 // loop_footer
      %s21 = sadd.s32 1, %s17
    $region7: #{transformer_forward.4} parent=1 // loop_footer_branch
      %16 = sbr.rel target = $region3
    $region8: #{transformer_forward.4} parent=1 // loop_exit
      _
    %1606 = vsyncpa [#allocation3], 1
    %s1607 = scalar_lea.sflag [#allocation3], 1
    %1608 = vsyncpa %s1607, 1
    %1609 = vsyncpa [#allocation5], 1
    %1610 = vsyncpa [#allocation8], 1

</llo_original>
